<compile_context>
chip_gen: v5e
topology: v5e:2x2
jax: 0.10.0
libtpu: 0.0.40
codegen_flags: <defaults>
</compile_context>

<pallas_src>
import math

import jax
import jax.numpy as jnp
from jax import lax
from jax.experimental import pallas as pl
from jax.experimental.pallas import tpu as pltpu

LOG2 = math.log(2.0)
LANE = 128


def _round_up(x, m):
    return (x + m - 1) // m * m


def _shifted_softplus(x):
    # softplus(x) - log(2), numerically stable, f32 elementwise.
    return jnp.logaddexp(x, 0.0) - LOG2


# --------------------------------------------------------------------------
# Fused kernel, grid over edge tiles ("arbitrary" reduction axis):
#   tile 0     : xf = x @ w_lin1 (hi/lo bf16 split into scratch), zero agg
#   every tile : filter MLP -> cosine cutoff -> one-hot MXU gather of x_j ->
#                message -> one-hot MXU scatter-add into agg scratch
#   last tile  : out = ssp(agg @ w_lin2 + b_lin2) @ w_lin + b_lin
# --------------------------------------------------------------------------
def _fused_kernel(src_ref, tgt_ref, ea_ref, c_ref,         # edge-tiled inputs
                  x_ref, wlin1_ref,                         # resident (lin1)
                  w1_ref, b1_ref, w2_ref, b2_ref,           # resident (filter)
                  wl2_ref, bl2_ref, wl_ref, bl_ref,         # resident (lin2/lin)
                  o_ref,                                    # output (revisited)
                  xf_hi_ref, xf_lo_ref, agg_ref):           # VMEM scratch
    tile = pl.program_id(0)
    te = ea_ref.shape[0]
    n_p = agg_ref.shape[0]
    f32, bf16 = jnp.float32, jnp.bfloat16

    # ---- tile 0: xf = x @ w_lin1 (hi/lo bf16 split), zero accumulator ------
    @pl.when(tile == 0)
    def _():
        xf = jnp.dot(x_ref[...], wlin1_ref[...], preferred_element_type=f32)
        hi = xf.astype(bf16)
        xf_hi_ref[...] = hi
        xf_lo_ref[...] = (xf - hi.astype(f32)).astype(bf16)
        agg_ref[...] = jnp.zeros_like(agg_ref)

    # ---- filter network on this edge tile (bf16 MXU, f32 accumulate) -------
    h = jnp.dot(ea_ref[...], w1_ref[...], preferred_element_type=f32)
    h = _shifted_softplus(h + b1_ref[...])
    wfilt = jnp.dot(h.astype(bf16), w2_ref[...], preferred_element_type=f32)
    wfilt = (wfilt + b2_ref[...]) * c_ref[...]      # cosine cutoff, 0 on pads

    # ---- one-hot MXU gather: x_j = onehot_src @ (xf_hi + xf_lo) -------------
    # Padded edges have src == n_p (out of range) -> all-zero one-hot row.
    onehot_src = jnp.where(
        lax.broadcasted_iota(jnp.int32, (te, n_p), 1) == src_ref[...],
        1.0, 0.0).astype(bf16)
    x_j = (jnp.dot(onehot_src, xf_hi_ref[...], preferred_element_type=f32)
           + jnp.dot(onehot_src, xf_lo_ref[...], preferred_element_type=f32))

    msg = x_j * wfilt                               # [TE, F_p], f32

    # ---- one-hot MXU scatter-add: agg += onehot_tgt.T @ msg ----------------
    onehot_tgt_t = jnp.where(
        lax.broadcasted_iota(jnp.int32, (n_p, te), 0) == tgt_ref[...],
        1.0, 0.0).astype(bf16)
    msg_hi = msg.astype(bf16)
    msg_lo = (msg - msg_hi.astype(f32)).astype(bf16)
    agg_ref[...] += (jnp.dot(onehot_tgt_t, msg_hi, preferred_element_type=f32)
                     + jnp.dot(onehot_tgt_t, msg_lo, preferred_element_type=f32))

    # ---- last tile: out = ssp(agg @ w_lin2 + b_lin2) @ w_lin + b_lin --------
    @pl.when(tile == pl.num_programs(0) - 1)
    def _():
        h2 = jnp.dot(agg_ref[...].astype(bf16), wl2_ref[...],
                     preferred_element_type=f32) + bl2_ref[...]
        h2 = _shifted_softplus(h2)
        o_ref[...] = jnp.dot(h2.astype(bf16), wl_ref[...],
                             preferred_element_type=f32) + bl_ref[...]


# --------------------------------------------------------------------------
# Wrapper
# --------------------------------------------------------------------------
def interaction_block(x, edge_index, edge_weight, edge_attr, params, cutoff):
    N, H = x.shape
    E, G = edge_attr.shape
    F = params["w_mlp1"].shape[1]

    f32, bf16 = jnp.float32, jnp.bfloat16

    # Padded (lane/sublane-friendly) sizes.
    H_p = _round_up(H, LANE)
    F_p = _round_up(F, LANE)
    G_p = _round_up(G, 16)            # no 128-pad: 8x less edge_attr DMA (v5e)
    N_p = _round_up(max(N, 8), LANE)  # lane-dense one-hot contraction dim
    TE = 256                          # fills the 256-wide MXU on v6e/v7x
    E_p = _round_up(max(E, 1), TE)
    n_edge_tiles = E_p // TE

    def pad2(a, r, c, dt):
        a = jnp.asarray(a, f32)
        return jnp.pad(a, ((0, r - a.shape[0]), (0, c - a.shape[1]))).astype(dt)

    x_p = pad2(x, N_p, H_p, bf16)
    ea_p = pad2(edge_attr, E_p, G_p, bf16)

    # Cosine cutoff precomputed + masked in the wrapper (padded edges -> 0).
    c = 0.5 * (jnp.cos(edge_weight.astype(f32) * (math.pi / cutoff)) + 1.0)
    c_p = pad2(c.reshape(E, 1), E_p, 1, f32)

    # Padded edges point at the out-of-range node N_p -> all-zero one-hot rows.
    src_p = jnp.pad(edge_index[0].astype(jnp.int32), (0, E_p - E),
                    constant_values=N_p).reshape(E_p, 1)
    tgt_p = jnp.pad(edge_index[1].astype(jnp.int32), (0, E_p - E),
                    constant_values=N_p).reshape(1, E_p)

    # Zero-padded weights/biases (zeros propagate exactly: ssp(0) == 0).
    w_mlp1 = pad2(params["w_mlp1"], G_p, F_p, bf16)
    b_mlp1 = pad2(params["b_mlp1"], 1, F_p, f32)
    w_mlp2 = pad2(params["w_mlp2"], F_p, F_p, bf16)
    b_mlp2 = pad2(params["b_mlp2"], 1, F_p, f32)
    w_lin1 = pad2(params["w_lin1"], H_p, F_p, bf16)
    w_lin2 = pad2(params["w_lin2"], F_p, H_p, bf16)
    b_lin2 = pad2(params["b_lin2"], 1, H_p, f32)
    w_lin = pad2(params["w_lin"], H_p, H_p, bf16)
    b_lin = pad2(params["b_lin"], 1, H_p, f32)

    edge_map = lambda i: (i, 0)
    const_map = lambda i: (0, 0)

    out_p = pl.pallas_call(
        _fused_kernel,
        out_shape=jax.ShapeDtypeStruct((N_p, H_p), f32),
        grid=(n_edge_tiles,),
        in_specs=[
            pl.BlockSpec((TE, 1), edge_map),            # src indices
            pl.BlockSpec((1, TE), lambda i: (0, i)),    # tgt indices (row vec)
            pl.BlockSpec((TE, G_p), edge_map),          # edge_attr
            pl.BlockSpec((TE, 1), edge_map),            # cosine cutoff
            pl.BlockSpec((N_p, H_p), const_map),        # x       (resident)
            pl.BlockSpec((H_p, F_p), const_map),        # w_lin1  (resident)
            pl.BlockSpec((G_p, F_p), const_map),        # w_mlp1
            pl.BlockSpec((1, F_p), const_map),          # b_mlp1
            pl.BlockSpec((F_p, F_p), const_map),        # w_mlp2
            pl.BlockSpec((1, F_p), const_map),          # b_mlp2
            pl.BlockSpec((F_p, H_p), const_map),        # w_lin2
            pl.BlockSpec((1, H_p), const_map),          # b_lin2
            pl.BlockSpec((H_p, H_p), const_map),        # w_lin
            pl.BlockSpec((1, H_p), const_map),          # b_lin
        ],
        out_specs=pl.BlockSpec((N_p, H_p), const_map),
        scratch_shapes=[pltpu.VMEM((N_p, F_p), bf16),   # xf hi
                        pltpu.VMEM((N_p, F_p), bf16),   # xf lo
                        pltpu.VMEM((N_p, F_p), f32)],   # agg accumulator
        compiler_params=pltpu.CompilerParams(
            dimension_semantics=("arbitrary",)),
        cost_estimate=pl.CostEstimate(
            flops=(2 * N_p * H_p * F_p
                   + 2 * E_p * F_p * (G_p + F_p + 4 * N_p)
                   + 2 * N_p * H_p * (F_p + H_p)),
            transcendentals=E_p * F_p + N_p * H_p,
            bytes_accessed=(2 * E_p * G_p + 4 * E_p + 4 * E_p + 4 * E_p
                            + 2 * N_p * H_p + 4 * N_p * H_p
                            + 2 * (H_p * F_p + G_p * F_p + F_p * F_p
                                   + F_p * H_p + H_p * H_p)
                            + 4 * 5 * F_p)),
    )(src_p, tgt_p, ea_p, c_p, x_p, w_lin1,
      w_mlp1, b_mlp1, w_mlp2, b_mlp2, w_lin2, b_lin2, w_lin, b_lin)

    return out_p[:N, :H]


# --------------------------------------------------------------------------
# Pure-JAX reference (same bf16-operand / f32-accumulate matmul policy).
# --------------------------------------------------------------------------
def reference_forward(x, edge_index, edge_weight, edge_attr, params, cutoff):
    def bdot(a, w):
        return jnp.dot(a.astype(jnp.bfloat16), w.astype(jnp.bfloat16),
                       preferred_element_type=jnp.float32)

    src, tgt = edge_index[0], edge_index[1]
    C = 0.5 * (jnp.cos(edge_weight * math.pi / cutoff) + 1.0)
    h = _shifted_softplus(bdot(edge_attr, params["w_mlp1"]) + params["b_mlp1"])
    W = (bdot(h, params["w_mlp2"]) + params["b_mlp2"]) * C[:, None]
    xf = bdot(x, params["w_lin1"])
    msg = xf[src] * W
    agg = jax.ops.segment_sum(msg, tgt, num_segments=x.shape[0])
    h2 = _shifted_softplus(bdot(agg, params["w_lin2"]) + params["b_lin2"])
    return bdot(h2, params["w_lin"]) + params["b_lin"]


def xavier_uniform(key, fan_in, fan_out):
    bound = math.sqrt(6.0 / (fan_in + fan_out))
    return jax.random.uniform(key, (fan_in, fan_out), jnp.float32, -bound, bound)


if __name__ == "__main__":
    # Small SchNet-ish sizes.
    N = 8      # nodes
    E = 16     # edges
    H = 32     # hidden_channels
    G = 16     # num_gaussians
    F = 32     # num_filters
    cutoff = 10.0

    key = jax.random.PRNGKey(0)
    ks = jax.random.split(key, 10)

    x = jax.random.normal(ks[0], (N, H), jnp.float32)
    edge_index = jax.random.randint(ks[1], (2, E), 0, N, jnp.int32)
    edge_weight = jax.random.uniform(ks[2], (E,), jnp.float32, 0.0, cutoff)
    edge_attr = jax.random.normal(ks[3], (E, G), jnp.float32)

    params = {
        # mlp = Linear(G, F) -> ShiftedSoftplus -> Linear(F, F), zero biases
        "w_mlp1": xavier_uniform(ks[4], G, F),
        "b_mlp1": jnp.zeros((1, F), jnp.float32),
        "w_mlp2": xavier_uniform(ks[5], F, F),
        "b_mlp2": jnp.zeros((1, F), jnp.float32),
        # CFConv.lin1 (H -> F, no bias), CFConv.lin2 (F -> H, zero bias)
        "w_lin1": xavier_uniform(ks[6], H, F),
        "w_lin2": xavier_uniform(ks[7], F, H),
        "b_lin2": jnp.zeros((1, H), jnp.float32),
        # InteractionBlock.lin (H -> H, zero bias)
        "w_lin": xavier_uniform(ks[8], H, H),
        "b_lin": jnp.zeros((1, H), jnp.float32),
    }

    out = interaction_block(x, edge_index, edge_weight, edge_attr, params, cutoff)
    out = jax.block_until_ready(out)

    ref = reference_forward(x, edge_index, edge_weight, edge_attr, params, cutoff)
    assert out.shape == (N, H)
    assert jnp.allclose(out, ref, atol=1e-3, rtol=1e-3), "mismatch vs reference"

    print("KERNEL_OK")
</pallas_src>

<mosaic_0001>
module attributes {stable_mosaic.version = 11 : i64} {
  func.func @_fused_kernel(%arg0: i32, %arg1: memref<256x1xi32, #tpu.memory_space<vmem>>, %arg2: memref<1x256xi32, #tpu.memory_space<vmem>>, %arg3: memref<256x16xbf16, #tpu.memory_space<vmem>>, %arg4: memref<256x1xf32, #tpu.memory_space<vmem>>, %arg5: memref<128x128xbf16, #tpu.memory_space<vmem>>, %arg6: memref<128x128xbf16, #tpu.memory_space<vmem>>, %arg7: memref<16x128xbf16, #tpu.memory_space<vmem>>, %arg8: memref<1x128xf32, #tpu.memory_space<vmem>>, %arg9: memref<128x128xbf16, #tpu.memory_space<vmem>>, %arg10: memref<1x128xf32, #tpu.memory_space<vmem>>, %arg11: memref<128x128xbf16, #tpu.memory_space<vmem>>, %arg12: memref<1x128xf32, #tpu.memory_space<vmem>>, %arg13: memref<128x128xbf16, #tpu.memory_space<vmem>>, %arg14: memref<1x128xf32, #tpu.memory_space<vmem>>, %arg15: memref<128x128xf32, #tpu.memory_space<vmem>>, %arg16: memref<128x128xbf16, #tpu.memory_space<vmem>>, %arg17: memref<128x128xbf16, #tpu.memory_space<vmem>>, %arg18: memref<128x128xf32, #tpu.memory_space<vmem>>) attributes {dimension_semantics = [#tpu.dimension_semantics<arbitrary>], iteration_bounds = array<i64: 1>, scalar_prefetch = 0 : i64, scratch_operands = 3 : i64, tpu.core_type = #tpu.core_type<tc>, window_params = [{transform_indices = @transform_0, window_bounds = array<i64: 256, 1>}, {transform_indices = @transform_1, window_bounds = array<i64: 1, 256>}, {transform_indices = @transform_2, window_bounds = array<i64: 256, 16>}, {transform_indices = @transform_3, window_bounds = array<i64: 256, 1>}, {pipeline_mode = #tpu.pipeline_mode<synchronous>, transform_indices = @transform_4, window_bounds = array<i64: 128, 128>}, {pipeline_mode = #tpu.pipeline_mode<synchronous>, transform_indices = @transform_5, window_bounds = array<i64: 128, 128>}, {pipeline_mode = #tpu.pipeline_mode<synchronous>, transform_indices = @transform_6, window_bounds = array<i64: 16, 128>}, {pipeline_mode = #tpu.pipeline_mode<synchronous>, transform_indices = @transform_7, window_bounds = array<i64: 1, 128>}, {pipeline_mode = #tpu.pipeline_mode<synchronous>, transform_indices = @transform_8, window_bounds = array<i64: 128, 128>}, {pipeline_mode = #tpu.pipeline_mode<synchronous>, transform_indices = @transform_9, window_bounds = array<i64: 1, 128>}, {pipeline_mode = #tpu.pipeline_mode<synchronous>, transform_indices = @transform_10, window_bounds = array<i64: 128, 128>}, {pipeline_mode = #tpu.pipeline_mode<synchronous>, transform_indices = @transform_11, window_bounds = array<i64: 1, 128>}, {pipeline_mode = #tpu.pipeline_mode<synchronous>, transform_indices = @transform_12, window_bounds = array<i64: 128, 128>}, {pipeline_mode = #tpu.pipeline_mode<synchronous>, transform_indices = @transform_13, window_bounds = array<i64: 1, 128>}, {pipeline_mode = #tpu.pipeline_mode<synchronous>, transform_indices = @transform_14, window_bounds = array<i64: 128, 128>}]} {
    %c0_i32 = arith.constant 0 : i32
    %0 = arith.cmpi eq, %arg0, %c0_i32 : i32
    %1 = arith.extui %0 : i1 to i32
    %c0_i32_0 = arith.constant 0 : i32
    %2 = arith.cmpi ne, %1, %c0_i32_0 : i32
    scf.if %2 {
      %c0_38 = arith.constant 0 : index
      %c0_39 = arith.constant 0 : index
      %69 = vector.load %arg5[%c0_38, %c0_39] : memref<128x128xbf16, #tpu.memory_space<vmem>>, vector<128x128xbf16>
      %c0_40 = arith.constant 0 : index
      %c0_41 = arith.constant 0 : index
      %70 = vector.load %arg6[%c0_40, %c0_41] : memref<128x128xbf16, #tpu.memory_space<vmem>>, vector<128x128xbf16>
      %cst_42 = arith.constant dense<0.000000e+00> : vector<128x128xf32>
      %71 = tpu.matmul %69, %70, %cst_42 {dimension_numbers = #tpu.dot_dimension_numbers<[1], [0], [0], [1], [0, 0, 1, 1], [], []>} : vector<128x128xbf16>, vector<128x128xbf16>, vector<128x128xf32> -> vector<128x128xf32>
      %72 = arith.truncf %71 : vector<128x128xf32> to vector<128x128xbf16>
      %c0_43 = arith.constant 0 : index
      %c0_44 = arith.constant 0 : index
      %73 = vector.load %arg16[%c0_43, %c0_44] : memref<128x128xbf16, #tpu.memory_space<vmem>>, vector<128x128xbf16>
      tpu.vector_store %arg16[%c0_43, %c0_44], %72 {strides = array<i32>} : memref<128x128xbf16, #tpu.memory_space<vmem>>, vector<128x128xbf16>,
      %74 = arith.extf %72 : vector<128x128xbf16> to vector<128x128xf32>
      %75 = arith.subf %71, %74 : vector<128x128xf32>
      %76 = arith.truncf %75 : vector<128x128xf32> to vector<128x128xbf16>
      %c0_45 = arith.constant 0 : index
      %c0_46 = arith.constant 0 : index
      %77 = vector.load %arg17[%c0_45, %c0_46] : memref<128x128xbf16, #tpu.memory_space<vmem>>, vector<128x128xbf16>
      tpu.vector_store %arg17[%c0_45, %c0_46], %76 {strides = array<i32>} : memref<128x128xbf16, #tpu.memory_space<vmem>>, vector<128x128xbf16>,
      %cst_47 = arith.constant 0.000000e+00 : f32
      %78 = vector.broadcast %cst_47 : f32 to vector<128x128xf32>
      %c0_48 = arith.constant 0 : index
      %c0_49 = arith.constant 0 : index
      %79 = vector.load %arg18[%c0_48, %c0_49] : memref<128x128xf32, #tpu.memory_space<vmem>>, vector<128x128xf32>
      tpu.vector_store %arg18[%c0_48, %c0_49], %78 {strides = array<i32>} : memref<128x128xf32, #tpu.memory_space<vmem>>, vector<128x128xf32>,
    } else {
    }
    %c0 = arith.constant 0 : index
    %c0_1 = arith.constant 0 : index
    %3 = vector.load %arg3[%c0, %c0_1] : memref<256x16xbf16, #tpu.memory_space<vmem>>, vector<256x16xbf16>
    %c0_2 = arith.constant 0 : index
    %c0_3 = arith.constant 0 : index
    %4 = vector.load %arg7[%c0_2, %c0_3] : memref<16x128xbf16, #tpu.memory_space<vmem>>, vector<16x128xbf16>
    %cst = arith.constant dense<0.000000e+00> : vector<256x128xf32>
    %5 = tpu.matmul %3, %4, %cst {dimension_numbers = #tpu.dot_dimension_numbers<[1], [0], [0], [1], [0, 0, 1, 1], [], []>} : vector<256x16xbf16>, vector<16x128xbf16>, vector<256x128xf32> -> vector<256x128xf32>
    %c0_4 = arith.constant 0 : index
    %c0_5 = arith.constant 0 : index
    %6 = vector.load %arg8[%c0_4, %c0_5] : memref<1x128xf32, #tpu.memory_space<vmem>>, vector<1x128xf32>
    %7 = vector.broadcast %6 : vector<1x128xf32> to vector<256x128xf32>
    %8 = arith.addf %5, %7 : vector<256x128xf32>
    %cst_6 = arith.constant 0.000000e+00 : f32
    %9 = vector.broadcast %cst_6 : f32 to vector<256x128xf32>
    %10 = arith.maximumf %8, %9 : vector<256x128xf32>
    %11 = vector.broadcast %cst_6 : f32 to vector<256x128xf32>
    %12 = arith.subf %8, %11 : vector<256x128xf32>
    %13 = arith.cmpf one, %12, %12 : vector<256x128xf32>
    %14 = vector.broadcast %cst_6 : f32 to vector<256x128xf32>
    %15 = arith.addf %8, %14 : vector<256x128xf32>
    %16 = math.absf %12 : vector<256x128xf32>
    %cst_7 = arith.constant 0.000000e+00 : f32
    %17 = vector.broadcast %cst_7 : f32 to vector<256x128xf32>
    %18 = arith.subf %17, %16 : vector<256x128xf32>
    %19 = math.exp %18 : vector<256x128xf32>
    %20 = math.log1p %19 : vector<256x128xf32>
    %21 = arith.addf %10, %20 : vector<256x128xf32>
    %22 = arith.select %13, %15, %21 : vector<256x128xi1>, vector<256x128xf32>
    %cst_8 = arith.constant 0.693147182 : f32
    %23 = vector.broadcast %cst_8 : f32 to vector<256x128xf32>
    %24 = arith.subf %22, %23 : vector<256x128xf32>
    %25 = arith.truncf %24 : vector<256x128xf32> to vector<256x128xbf16>
    %c0_9 = arith.constant 0 : index
    %c0_10 = arith.constant 0 : index
    %26 = vector.load %arg9[%c0_9, %c0_10] : memref<128x128xbf16, #tpu.memory_space<vmem>>, vector<128x128xbf16>
    %cst_11 = arith.constant dense<0.000000e+00> : vector<256x128xf32>
    %27 = tpu.matmul %25, %26, %cst_11 {dimension_numbers = #tpu.dot_dimension_numbers<[1], [0], [0], [1], [0, 0, 1, 1], [], []>} : vector<256x128xbf16>, vector<128x128xbf16>, vector<256x128xf32> -> vector<256x128xf32>
    %c0_12 = arith.constant 0 : index
    %c0_13 = arith.constant 0 : index
    %28 = vector.load %arg10[%c0_12, %c0_13] : memref<1x128xf32, #tpu.memory_space<vmem>>, vector<1x128xf32>
    %29 = vector.broadcast %28 : vector<1x128xf32> to vector<256x128xf32>
    %30 = arith.addf %27, %29 : vector<256x128xf32>
    %c0_14 = arith.constant 0 : index
    %c0_15 = arith.constant 0 : index
    %31 = vector.load %arg4[%c0_14, %c0_15] : memref<256x1xf32, #tpu.memory_space<vmem>>, vector<256x1xf32>
    %32 = vector.broadcast %31 : vector<256x1xf32> to vector<256x128xf32>
    %33 = arith.mulf %30, %32 : vector<256x128xf32>
    %34 = tpu.iota {dimensions = array<i32: 1>} : vector<256x128xi32>
    %c0_16 = arith.constant 0 : index
    %c0_17 = arith.constant 0 : index
    %35 = vector.load %arg1[%c0_16, %c0_17] : memref<256x1xi32, #tpu.memory_space<vmem>>, vector<256x1xi32>
    %36 = vector.broadcast %35 : vector<256x1xi32> to vector<256x128xi32>
    %37 = arith.cmpi eq, %34, %36 : vector<256x128xi32>
    %cst_18 = arith.constant 1.000000e+00 : f32
    %cst_19 = arith.constant 0.000000e+00 : f32
    %38 = vector.broadcast %cst_18 : f32 to vector<256x128xf32>
    %39 = vector.broadcast %cst_19 : f32 to vector<256x128xf32>
    %40 = arith.select %37, %38, %39 : vector<256x128xi1>, vector<256x128xf32>
    %41 = arith.truncf %40 : vector<256x128xf32> to vector<256x128xbf16>
    %c0_20 = arith.constant 0 : index
    %c0_21 = arith.constant 0 : index
    %42 = vector.load %arg16[%c0_20, %c0_21] : memref<128x128xbf16, #tpu.memory_space<vmem>>, vector<128x128xbf16>
    %cst_22 = arith.constant dense<0.000000e+00> : vector<256x128xf32>
    %43 = tpu.matmul %41, %42, %cst_22 {dimension_numbers = #tpu.dot_dimension_numbers<[1], [0], [0], [1], [0, 0, 1, 1], [], []>} : vector<256x128xbf16>, vector<128x128xbf16>, vector<256x128xf32> -> vector<256x128xf32>
    %c0_23 = arith.constant 0 : index
    %c0_24 = arith.constant 0 : index
    %44 = vector.load %arg17[%c0_23, %c0_24] : memref<128x128xbf16, #tpu.memory_space<vmem>>, vector<128x128xbf16>
    %cst_25 = arith.constant dense<0.000000e+00> : vector<256x128xf32>
    %45 = tpu.matmul %41, %44, %cst_25 {dimension_numbers = #tpu.dot_dimension_numbers<[1], [0], [0], [1], [0, 0, 1, 1], [], []>} : vector<256x128xbf16>, vector<128x128xbf16>, vector<256x128xf32> -> vector<256x128xf32>
    %46 = arith.addf %43, %45 : vector<256x128xf32>
    %47 = arith.mulf %46, %33 : vector<256x128xf32>
    %48 = tpu.iota {dimensions = array<i32: 0>} : vector<128x256xi32>
    %c0_26 = arith.constant 0 : index
    %c0_27 = arith.constant 0 : index
    %49 = vector.load %arg2[%c0_26, %c0_27] : memref<1x256xi32, #tpu.memory_space<vmem>>, vector<1x256xi32>
    %50 = vector.broadcast %49 : vector<1x256xi32> to vector<128x256xi32>
    %51 = arith.cmpi eq, %48, %50 : vector<128x256xi32>
    %cst_28 = arith.constant 1.000000e+00 : f32
    %cst_29 = arith.constant 0.000000e+00 : f32
    %52 = vector.broadcast %cst_28 : f32 to vector<128x256xf32>
    %53 = vector.broadcast %cst_29 : f32 to vector<128x256xf32>
    %54 = arith.select %51, %52, %53 : vector<128x256xi1>, vector<128x256xf32>
    %55 = arith.truncf %54 : vector<128x256xf32> to vector<128x256xbf16>
    %56 = arith.truncf %47 : vector<256x128xf32> to vector<256x128xbf16>
    %57 = arith.extf %56 : vector<256x128xbf16> to vector<256x128xf32>
    %58 = arith.subf %47, %57 : vector<256x128xf32>
    %59 = arith.truncf %58 : vector<256x128xf32> to vector<256x128xbf16>
    %c0_30 = arith.constant 0 : index
    %c0_31 = arith.constant 0 : index
    %60 = vector.load %arg18[%c0_30, %c0_31] : memref<128x128xf32, #tpu.memory_space<vmem>>, vector<128x128xf32>
    %cst_32 = arith.constant dense<0.000000e+00> : vector<128x128xf32>
    %61 = tpu.matmul %55, %56, %cst_32 {dimension_numbers = #tpu.dot_dimension_numbers<[1], [0], [0], [1], [0, 0, 1, 1], [], []>} : vector<128x256xbf16>, vector<256x128xbf16>, vector<128x128xf32> -> vector<128x128xf32>
    %cst_33 = arith.constant dense<0.000000e+00> : vector<128x128xf32>
    %62 = tpu.matmul %55, %59, %cst_33 {dimension_numbers = #tpu.dot_dimension_numbers<[1], [0], [0], [1], [0, 0, 1, 1], [], []>} : vector<128x256xbf16>, vector<256x128xbf16>, vector<128x128xf32> -> vector<128x128xf32>
    %63 = arith.addf %61, %62 : vector<128x128xf32>
    %64 = arith.addf %60, %63 : vector<128x128xf32>
    %c0_34 = arith.constant 0 : index
    %c0_35 = arith.constant 0 : index
    %65 = vector.load %arg18[%c0_34, %c0_35] : memref<128x128xf32, #tpu.memory_space<vmem>>, vector<128x128xf32>
    tpu.vector_store %arg18[%c0_34, %c0_35], %64 {strides = array<i32>} : memref<128x128xf32, #tpu.memory_space<vmem>>, vector<128x128xf32>,
    %c0_i32_36 = arith.constant 0 : i32
    %66 = arith.cmpi eq, %arg0, %c0_i32_36 : i32
    %67 = arith.extui %66 : i1 to i32
    %c0_i32_37 = arith.constant 0 : i32
    %68 = arith.cmpi ne, %67, %c0_i32_37 : i32
    scf.if %68 {
      %c0_38 = arith.constant 0 : index
      %c0_39 = arith.constant 0 : index
      %69 = vector.load %arg18[%c0_38, %c0_39] : memref<128x128xf32, #tpu.memory_space<vmem>>, vector<128x128xf32>
      %70 = arith.truncf %69 : vector<128x128xf32> to vector<128x128xbf16>
      %c0_40 = arith.constant 0 : index
      %c0_41 = arith.constant 0 : index
      %71 = vector.load %arg11[%c0_40, %c0_41] : memref<128x128xbf16, #tpu.memory_space<vmem>>, vector<128x128xbf16>
      %cst_42 = arith.constant dense<0.000000e+00> : vector<128x128xf32>
      %72 = tpu.matmul %70, %71, %cst_42 {dimension_numbers = #tpu.dot_dimension_numbers<[1], [0], [0], [1], [0, 0, 1, 1], [], []>} : vector<128x128xbf16>, vector<128x128xbf16>, vector<128x128xf32> -> vector<128x128xf32>
      %c0_43 = arith.constant 0 : index
      %c0_44 = arith.constant 0 : index
      %73 = vector.load %arg12[%c0_43, %c0_44] : memref<1x128xf32, #tpu.memory_space<vmem>>, vector<1x128xf32>
      %74 = vector.broadcast %73 : vector<1x128xf32> to vector<128x128xf32>
      %75 = arith.addf %72, %74 : vector<128x128xf32>
      %cst_45 = arith.constant 0.000000e+00 : f32
      %76 = vector.broadcast %cst_45 : f32 to vector<128x128xf32>
      %77 = arith.maximumf %75, %76 : vector<128x128xf32>
      %78 = vector.broadcast %cst_45 : f32 to vector<128x128xf32>
      %79 = arith.subf %75, %78 : vector<128x128xf32>
      %80 = arith.cmpf one, %79, %79 : vector<128x128xf32>
      %81 = vector.broadcast %cst_45 : f32 to vector<128x128xf32>
      %82 = arith.addf %75, %81 : vector<128x128xf32>
      %83 = math.absf %79 : vector<128x128xf32>
      %cst_46 = arith.constant 0.000000e+00 : f32
      %84 = vector.broadcast %cst_46 : f32 to vector<128x128xf32>
      %85 = arith.subf %84, %83 : vector<128x128xf32>
      %86 = math.exp %85 : vector<128x128xf32>
      %87 = math.log1p %86 : vector<128x128xf32>
      %88 = arith.addf %77, %87 : vector<128x128xf32>
      %89 = arith.select %80, %82, %88 : vector<128x128xi1>, vector<128x128xf32>
      %cst_47 = arith.constant 0.693147182 : f32
      %90 = vector.broadcast %cst_47 : f32 to vector<128x128xf32>
      %91 = arith.subf %89, %90 : vector<128x128xf32>
      %92 = arith.truncf %91 : vector<128x128xf32> to vector<128x128xbf16>
      %c0_48 = arith.constant 0 : index
      %c0_49 = arith.constant 0 : index
      %93 = vector.load %arg13[%c0_48, %c0_49] : memref<128x128xbf16, #tpu.memory_space<vmem>>, vector<128x128xbf16>
      %cst_50 = arith.constant dense<0.000000e+00> : vector<128x128xf32>
      %94 = tpu.matmul %92, %93, %cst_50 {dimension_numbers = #tpu.dot_dimension_numbers<[1], [0], [0], [1], [0, 0, 1, 1], [], []>} : vector<128x128xbf16>, vector<128x128xbf16>, vector<128x128xf32> -> vector<128x128xf32>
      %c0_51 = arith.constant 0 : index
      %c0_52 = arith.constant 0 : index
      %95 = vector.load %arg14[%c0_51, %c0_52] : memref<1x128xf32, #tpu.memory_space<vmem>>, vector<1x128xf32>
      %96 = vector.broadcast %95 : vector<1x128xf32> to vector<128x128xf32>
      %97 = arith.addf %94, %96 : vector<128x128xf32>
      %c0_53 = arith.constant 0 : index
      %c0_54 = arith.constant 0 : index
      %98 = vector.load %arg15[%c0_53, %c0_54] : memref<128x128xf32, #tpu.memory_space<vmem>>, vector<128x128xf32>
      tpu.vector_store %arg15[%c0_53, %c0_54], %97 {strides = array<i32>} : memref<128x128xf32, #tpu.memory_space<vmem>>, vector<128x128xf32>,
    } else {
    }
    return
  }
  func.func @transform_0(%arg0: i32) -> (i32, i32) {
    %c0_i32 = arith.constant 0 : i32
    %c0_i32_0 = arith.constant 0 : i32
    return %arg0, %c0_i32 : i32, i32
  }
  func.func @transform_1(%arg0: i32) -> (i32, i32) {
    %c0_i32 = arith.constant 0 : i32
    %c0_i32_0 = arith.constant 0 : i32
    return %c0_i32, %arg0 : i32, i32
  }
  func.func @transform_2(%arg0: i32) -> (i32, i32) {
    %c0_i32 = arith.constant 0 : i32
    %c0_i32_0 = arith.constant 0 : i32
    return %arg0, %c0_i32 : i32, i32
  }
  func.func @transform_3(%arg0: i32) -> (i32, i32) {
    %c0_i32 = arith.constant 0 : i32
    %c0_i32_0 = arith.constant 0 : i32
    return %arg0, %c0_i32 : i32, i32
  }
  func.func @transform_4(%arg0: i32) -> (i32, i32) {
    %c0_i32 = arith.constant 0 : i32
    %c0_i32_0 = arith.constant 0 : i32
    %c0_i32_1 = arith.constant 0 : i32
    return %c0_i32, %c0_i32_0 : i32, i32
  }
  func.func @transform_5(%arg0: i32) -> (i32, i32) {
    %c0_i32 = arith.constant 0 : i32
    %c0_i32_0 = arith.constant 0 : i32
    %c0_i32_1 = arith.constant 0 : i32
    return %c0_i32, %c0_i32_0 : i32, i32
  }
  func.func @transform_6(%arg0: i32) -> (i32, i32) {
    %c0_i32 = arith.constant 0 : i32
    %c0_i32_0 = arith.constant 0 : i32
    %c0_i32_1 = arith.constant 0 : i32
    return %c0_i32, %c0_i32_0 : i32, i32
  }
  func.func @transform_7(%arg0: i32) -> (i32, i32) {
    %c0_i32 = arith.constant 0 : i32
    %c0_i32_0 = arith.constant 0 : i32
    %c0_i32_1 = arith.constant 0 : i32
    return %c0_i32, %c0_i32_0 : i32, i32
  }
  func.func @transform_8(%arg0: i32) -> (i32, i32) {
    %c0_i32 = arith.constant 0 : i32
    %c0_i32_0 = arith.constant 0 : i32
    %c0_i32_1 = arith.constant 0 : i32
    return %c0_i32, %c0_i32_0 : i32, i32
  }
  func.func @transform_9(%arg0: i32) -> (i32, i32) {
    %c0_i32 = arith.constant 0 : i32
    %c0_i32_0 = arith.constant 0 : i32
    %c0_i32_1 = arith.constant 0 : i32
    return %c0_i32, %c0_i32_0 : i32, i32
  }
  func.func @transform_10(%arg0: i32) -> (i32, i32) {
    %c0_i32 = arith.constant 0 : i32
    %c0_i32_0 = arith.constant 0 : i32
    %c0_i32_1 = arith.constant 0 : i32
    return %c0_i32, %c0_i32_0 : i32, i32
  }
  func.func @transform_11(%arg0: i32) -> (i32, i32) {
    %c0_i32 = arith.constant 0 : i32
    %c0_i32_0 = arith.constant 0 : i32
    %c0_i32_1 = arith.constant 0 : i32
    return %c0_i32, %c0_i32_0 : i32, i32
  }
  func.func @transform_12(%arg0: i32) -> (i32, i32) {
    %c0_i32 = arith.constant 0 : i32
    %c0_i32_0 = arith.constant 0 : i32
    %c0_i32_1 = arith.constant 0 : i32
    return %c0_i32, %c0_i32_0 : i32, i32
  }
  func.func @transform_13(%arg0: i32) -> (i32, i32) {
    %c0_i32 = arith.constant 0 : i32
    %c0_i32_0 = arith.constant 0 : i32
    %c0_i32_1 = arith.constant 0 : i32
    return %c0_i32, %c0_i32_0 : i32, i32
  }
  func.func @transform_14(%arg0: i32) -> (i32, i32) {
    %c0_i32 = arith.constant 0 : i32
    %c0_i32_0 = arith.constant 0 : i32
    %c0_i32_1 = arith.constant 0 : i32
    return %c0_i32, %c0_i32_0 : i32, i32
  }
}

</mosaic_0001>

<llo_original>
// kernel: tpu_custom_call.1
$region0: #{tpu_custom_call.1}
  #allocation0 [shape = 'u32[]', space=smem, size = 0x4, offset = 0x4, fixed_abs, tag = 'smem constant byte address 0x4 - core index']
  #allocation1 [shape = 'u32[72,128]{1,0:T(1,128)}', space=vmem, size = 0x9000, scoped, tag = 'internal scratch']
  #allocation2 [shape = 'bf16[128,128]{1,0:T(8,128)(2,1)}', space=vmem, size = 0x8000, scoped, tag = 'scratch operand']
  #allocation3 [shape = 'bf16[128,128]{1,0:T(8,128)(2,1)}', space=vmem, size = 0x8000, scoped, tag = 'scratch operand']
  #allocation4 [shape = 'f32[128,128]{1,0:T(8,128)}', space=vmem, size = 0x10000, scoped, tag = 'scratch operand']
  %s0 = inlined_call_operand.vmem [shape: s32[256,1], index: 0, kind: input, shape index: {}]
  %s1 = inlined_call_operand.vmem [shape: s32[1,256], index: 1, kind: input, shape index: {}]
  %s2 = inlined_call_operand.vmem [shape: bf16[256,16], index: 2, kind: input, shape index: {}]
  %s3 = inlined_call_operand.vmem [shape: f32[256,1], index: 3, kind: input, shape index: {}]
  %s4 = inlined_call_operand.vmem [shape: bf16[128,128], index: 4, kind: input, shape index: {}]
  %s5 = inlined_call_operand.vmem [shape: bf16[128,128], index: 5, kind: input, shape index: {}]
  %s6 = inlined_call_operand.vmem [shape: bf16[16,128], index: 6, kind: input, shape index: {}]
  %s7 = inlined_call_operand.vmem [shape: f32[1,128], index: 7, kind: input, shape index: {}]
  %s8 = inlined_call_operand.vmem [shape: bf16[128,128], index: 8, kind: input, shape index: {}]
  %s9 = inlined_call_operand.vmem [shape: f32[1,128], index: 9, kind: input, shape index: {}]
  %s10 = inlined_call_operand.vmem [shape: bf16[128,128], index: 10, kind: input, shape index: {}]
  %s11 = inlined_call_operand.vmem [shape: f32[1,128], index: 11, kind: input, shape index: {}]
  %s12 = inlined_call_operand.vmem [shape: bf16[128,128], index: 12, kind: input, shape index: {}]
  %s13 = inlined_call_operand.vmem [shape: f32[1,128], index: 13, kind: input, shape index: {}]
  %s14 = inlined_call_operand.hbm [shape: f32[128,128], index: 14, kind: output, shape index: {}]
  %s15 = sld [smem:[#allocation0]]
  $region74: #{tpu_custom_call.1} parent=0
    _
  %s17 = ssub.s32 1, %s15
  %s18 = scalar_select 0, %s17, %s15
  $region1: #{tpu_custom_call.1} parent=0
    #allocation5 [shape = 'u8[65536]{0}', space=vmem, size = 0x10000, scoped, tag = 'output window, operand 0, single buffered']
    #allocation6 [shape = 's32[1]{0}', space=sflag, size = 0x4, scoped, tag = 'scoped memory for tpu_custom_call.1']
    %19 = vsyncpa [#allocation6], 0
    // Predicated region
    $region2: #{tpu_custom_call.1} parent=1 // pred_check
      _
    $region3: #{tpu_custom_call.1} parent=1 // pred_check_branch
      %21 = sbr.rel (0) target = $region5
    $region4: #{tpu_custom_call.1} parent=1 // pred_region
      _
    $region5: #{tpu_custom_call.1} parent=1 // pred_fallthru
      _
    // Predicated region
    $region6: #{tpu_custom_call.1} parent=1 // pred_check
      _
    $region7: #{tpu_custom_call.1} parent=1 // pred_check_branch
      %23 = sbr.rel (0) target = $region9
    $region8: #{tpu_custom_call.1} parent=1 // pred_region
      _
    $region9: #{tpu_custom_call.1} parent=1 // pred_fallthru
      _
    // Predicated region
    $region10: #{tpu_custom_call.1} parent=1 // pred_check
      _
    $region11: #{tpu_custom_call.1} parent=1 // pred_check_branch
      %25 = sbr.rel (0) target = $region13
    $region12: #{tpu_custom_call.1} parent=1 // pred_region
      _
    $region13: #{tpu_custom_call.1} parent=1 // pred_fallthru
      _
    // Predicated region
    $region14: #{tpu_custom_call.1} parent=1 // pred_check
      _
    $region15: #{tpu_custom_call.1} parent=1 // pred_check_branch
      %27 = sbr.rel (0) target = $region17
    $region16: #{tpu_custom_call.1} parent=1 // pred_region
      _
    $region17: #{tpu_custom_call.1} parent=1 // pred_fallthru
      _
    // Predicated region
    $region18: #{tpu_custom_call.1} parent=1 // pred_check
      _
    $region19: #{tpu_custom_call.1} parent=1 // pred_check_branch
      %29 = sbr.rel (0) target = $region21
    $region20: #{tpu_custom_call.1} parent=1 // pred_region
      _
    $region21: #{tpu_custom_call.1} parent=1 // pred_fallthru
      _
    // Predicated region
    $region22: #{tpu_custom_call.1} parent=1 // pred_check
      _
    $region23: #{tpu_custom_call.1} parent=1 // pred_check_branch
      %31 = sbr.rel (0) target = $region25
    $region24: #{tpu_custom_call.1} parent=1 // pred_region
      _
    $region25: #{tpu_custom_call.1} parent=1 // pred_fallthru
      _
    // Predicated region
    $region26: #{tpu_custom_call.1} parent=1 // pred_check
      _
    $region27: #{tpu_custom_call.1} parent=1 // pred_check_branch
      %33 = sbr.rel (0) target = $region29
    $region28: #{tpu_custom_call.1} parent=1 // pred_region
      _
    $region29: #{tpu_custom_call.1} parent=1 // pred_fallthru
      _
    // Predicated region
    $region30: #{tpu_custom_call.1} parent=1 // pred_check
      _
    $region31: #{tpu_custom_call.1} parent=1 // pred_check_branch
      %35 = sbr.rel (0) target = $region33
    $region32: #{tpu_custom_call.1} parent=1 // pred_region
      _
    $region33: #{tpu_custom_call.1} parent=1 // pred_fallthru
      _
    // Predicated region
    $region34: #{tpu_custom_call.1} parent=1 // pred_check
      _
    $region35: #{tpu_custom_call.1} parent=1 // pred_check_branch
      %37 = sbr.rel (0) target = $region37
    $region36: #{tpu_custom_call.1} parent=1 // pred_region
      _
    $region37: #{tpu_custom_call.1} parent=1 // pred_fallthru
      _
    // Predicated region
    $region38: #{tpu_custom_call.1} parent=1 // pred_check
      _
    $region39: #{tpu_custom_call.1} parent=1 // pred_check_branch
      %39 = sbr.rel (0) target = $region41
    $region40: #{tpu_custom_call.1} parent=1 // pred_region
      _
    $region41: #{tpu_custom_call.1} parent=1 // pred_fallthru
      _
    // Predicated region
    $region42: #{tpu_custom_call.1} parent=1 // pred_check
      _
    $region43: #{tpu_custom_call.1} parent=1 // pred_check_branch
      %41 = sbr.rel (0) target = $region45
    $region44: #{tpu_custom_call.1} parent=1 // pred_region
      _
    $region45: #{tpu_custom_call.1} parent=1 // pred_fallthru
      _
    // Predicated region
    $region46: #{tpu_custom_call.1} parent=1 // pred_check
      _
    $region47: #{tpu_custom_call.1} parent=1 // pred_check_branch
      %43 = sbr.rel (0) target = $region49
    $region48: #{tpu_custom_call.1} parent=1 // pred_region
      _
    $region49: #{tpu_custom_call.1} parent=1 // pred_fallthru
      _
    // Predicated region
    $region50: #{tpu_custom_call.1} parent=1 // pred_check
      _
    $region51: #{tpu_custom_call.1} parent=1 // pred_check_branch
      %45 = sbr.rel (0) target = $region53
    $region52: #{tpu_custom_call.1} parent=1 // pred_region
      _
    $region53: #{tpu_custom_call.1} parent=1 // pred_fallthru
      _
    // Predicated region
    $region54: #{tpu_custom_call.1} parent=1 // pred_check
      _
    $region55: #{tpu_custom_call.1} parent=1 // pred_check_branch
      %47 = sbr.rel (0) target = $region57
    $region56: #{tpu_custom_call.1} parent=1 // pred_region
      _
    $region57: #{tpu_custom_call.1} parent=1 // pred_fallthru
      _
    %p49 = scmp.eq.s32.totalorder 0, 0
    // Predicated region
    $region58: #{tpu_custom_call.1} parent=1 // pred_check
      %p50 = pneg %p49
    $region59: #{tpu_custom_call.1} parent=1 // pred_check_branch
      %52 = sbr.rel (%p50) target = $region61
    $region60: #{tpu_custom_call.1} parent=1 // pred_region
      %v53 = vld [vmem:[%s4] sm:$0xf]
      %v54 = vld [vmem:[%s4 + $0x4] sm:$0xf]
      %v55 = vld [vmem:[%s4 + $0x8] sm:$0xf]
      %v56 = vld [vmem:[%s4 + $0xc] sm:$0xf]
      %v57 = vld [vmem:[%s4 + $0x10] sm:$0xf]
      %v58 = vld [vmem:[%s4 + $0x14] sm:$0xf]
      %v59 = vld [vmem:[%s4 + $0x18] sm:$0xf]
      %v60 = vld [vmem:[%s4 + $0x1c] sm:$0xf]
      %v61 = vld [vmem:[%s4 + $0x20] sm:$0xf]
      %v62 = vld [vmem:[%s4 + $0x24] sm:$0xf]
      %v63 = vld [vmem:[%s4 + $0x28] sm:$0xf]
      %v64 = vld [vmem:[%s4 + $0x2c] sm:$0xf]
      %v65 = vld [vmem:[%s4 + $0x30] sm:$0xf]
      %v66 = vld [vmem:[%s4 + $0x34] sm:$0xf]
      %v67 = vld [vmem:[%s4 + $0x38] sm:$0xf]
      %v68 = vld [vmem:[%s4 + $0x3c] sm:$0xf]
      %v69 = vld [vmem:[%s5] sm:$0xf]
      %v70 = vld [vmem:[%s5 + $0x4] sm:$0xf]
      %v71 = vld [vmem:[%s5 + $0x8] sm:$0xf]
      %v72 = vld [vmem:[%s5 + $0xc] sm:$0xf]
      %v73 = vld [vmem:[%s5 + $0x10] sm:$0xf]
      %v74 = vld [vmem:[%s5 + $0x14] sm:$0xf]
      %v75 = vld [vmem:[%s5 + $0x18] sm:$0xf]
      %v76 = vld [vmem:[%s5 + $0x1c] sm:$0xf]
      %v77 = vld [vmem:[%s5 + $0x20] sm:$0xf]
      %v78 = vld [vmem:[%s5 + $0x24] sm:$0xf]
      %v79 = vld [vmem:[%s5 + $0x28] sm:$0xf]
      %v80 = vld [vmem:[%s5 + $0x2c] sm:$0xf]
      %v81 = vld [vmem:[%s5 + $0x30] sm:$0xf]
      %v82 = vld [vmem:[%s5 + $0x34] sm:$0xf]
      %v83 = vld [vmem:[%s5 + $0x38] sm:$0xf]
      %v84 = vld [vmem:[%s5 + $0x3c] sm:$0xf]
      %v101 = vunpack.c.l.b16 %v53
      %v102 = vunpack.c.l.b16 %v54
      %v103 = vunpack.c.l.b16 %v55
      %v104 = vunpack.c.l.b16 %v56
      %v105 = vunpack.c.l.b16 %v57
      %v106 = vunpack.c.l.b16 %v58
      %v107 = vunpack.c.l.b16 %v59
      %v108 = vunpack.c.l.b16 %v60
      %v109 = vunpack.c.l.b16 %v61
      %v110 = vunpack.c.l.b16 %v62
      %v111 = vunpack.c.l.b16 %v63
      %v112 = vunpack.c.l.b16 %v64
      %v113 = vunpack.c.l.b16 %v65
      %v114 = vunpack.c.l.b16 %v66
      %v115 = vunpack.c.l.b16 %v67
      %v116 = vunpack.c.l.b16 %v68
      %v117 = vpack.c.b16 %v102, %v101
      %v118 = vpack.c.b16 %v104, %v103
      %v119 = vpack.c.b16 %v106, %v105
      %v120 = vpack.c.b16 %v108, %v107
      %v121 = vpack.c.b16 %v110, %v109
      %v122 = vpack.c.b16 %v112, %v111
      %v123 = vpack.c.b16 %v114, %v113
      %v124 = vpack.c.b16 %v116, %v115
      %v149 = vunpack.c.l.b16 %v69
      %v150 = vunpack.c.l.b16 %v70
      %v151 = vunpack.c.l.b16 %v71
      %v152 = vunpack.c.l.b16 %v72
      %v153 = vunpack.c.l.b16 %v73
      %v154 = vunpack.c.l.b16 %v74
      %v155 = vunpack.c.l.b16 %v75
      %v156 = vunpack.c.l.b16 %v76
      %v157 = vunpack.c.l.b16 %v77
      %v158 = vunpack.c.l.b16 %v78
      %v159 = vunpack.c.l.b16 %v79
      %v160 = vunpack.c.l.b16 %v80
      %v161 = vunpack.c.l.b16 %v81
      %v162 = vunpack.c.l.b16 %v82
      %v163 = vunpack.c.l.b16 %v83
      %v164 = vunpack.c.l.b16 %v84
      %v165 = vpack.c.b16 %v150, %v149
      %v166 = vpack.c.b16 %v152, %v151
      %v167 = vpack.c.b16 %v154, %v153
      %v168 = vpack.c.b16 %v156, %v155
      %v169 = vpack.c.b16 %v158, %v157
      %v170 = vpack.c.b16 %v160, %v159
      %v171 = vpack.c.b16 %v162, %v161
      %v172 = vpack.c.b16 %v164, %v163
      %181 = vmatpush.bf16.msra.mxu0 %v172
      %182 = vmatpush.bf16.msra.mxu0 %v171
      %183 = vmatpush.bf16.msra.mxu0 %v170
      %184 = vmatpush.bf16.msra.mxu0 %v169
      %185 = vmatpush.bf16.msra.mxu0 %v168
      %186 = vmatpush.bf16.msra.mxu0 %v167
      %187 = vmatpush.bf16.msra.mxu0 %v166
      %188 = vmatpush.bf16.msra.mxu0 %v165
      %189 = vmatmul.bf16.gmra.mxu0 %v117
      %v190 = vpop.f32.mrf.mxu0
      %v191 = vadd.f32 0.0, %v190
      %v192 = vpop.f32.mrf.mxu0
      %v193 = vadd.f32 0.0, %v192
      %194 = vmatmul.bf16.gmra.mxu0 %v118
      %v195 = vpop.f32.mrf.mxu0
      %v196 = vadd.f32 0.0, %v195
      %v197 = vpop.f32.mrf.mxu0
      %v198 = vadd.f32 0.0, %v197
      %199 = vmatmul.bf16.gmra.mxu0 %v119
      %v200 = vpop.f32.mrf.mxu0
      %v201 = vadd.f32 0.0, %v200
      %v202 = vpop.f32.mrf.mxu0
      %v203 = vadd.f32 0.0, %v202
      %204 = vmatmul.bf16.gmra.mxu0 %v120
      %v205 = vpop.f32.mrf.mxu0
      %v206 = vadd.f32 0.0, %v205
      %v207 = vpop.f32.mrf.mxu0
      %v208 = vadd.f32 0.0, %v207
      %209 = vmatmul.bf16.gmra.mxu0 %v121
      %v210 = vpop.f32.mrf.mxu0
      %v211 = vadd.f32 0.0, %v210
      %v212 = vpop.f32.mrf.mxu0
      %v213 = vadd.f32 0.0, %v212
      %214 = vmatmul.bf16.gmra.mxu0 %v122
      %v215 = vpop.f32.mrf.mxu0
      %v216 = vadd.f32 0.0, %v215
      %v217 = vpop.f32.mrf.mxu0
      %v218 = vadd.f32 0.0, %v217
      %219 = vmatmul.bf16.gmra.mxu0 %v123
      %v220 = vpop.f32.mrf.mxu0
      %v221 = vadd.f32 0.0, %v220
      %v222 = vpop.f32.mrf.mxu0
      %v223 = vadd.f32 0.0, %v222
      %224 = vmatmul.bf16.gmra.mxu0 %v124
      %v225 = vpop.f32.mrf.mxu0
      %v226 = vadd.f32 0.0, %v225
      %v227 = vpop.f32.mrf.mxu0
      %v228 = vadd.f32 0.0, %v227
      %229 = vdwg.mxu0
      %v230 = vpack.c.bf16 %v191, %v191
      %v231 = vpack.c.bf16 %v193, %v193
      %v232 = vpack.c.bf16 %v196, %v196
      %v233 = vpack.c.bf16 %v198, %v198
      %v234 = vpack.c.bf16 %v201, %v201
      %v235 = vpack.c.bf16 %v203, %v203
      %v236 = vpack.c.bf16 %v206, %v206
      %v237 = vpack.c.bf16 %v208, %v208
      %v238 = vpack.c.bf16 %v211, %v211
      %v239 = vpack.c.bf16 %v213, %v213
      %v240 = vpack.c.bf16 %v216, %v216
      %v241 = vpack.c.bf16 %v218, %v218
      %v242 = vpack.c.bf16 %v221, %v221
      %v243 = vpack.c.bf16 %v223, %v223
      %v244 = vpack.c.bf16 %v226, %v226
      %v245 = vpack.c.bf16 %v228, %v228
      %246 = vst [vmem:[#allocation2] sm:$0xf] %v230
      %247 = vst [vmem:[#allocation2 + $0x4] sm:$0xf] %v231
      %248 = vst [vmem:[#allocation2 + $0x8] sm:$0xf] %v232
      %249 = vst [vmem:[#allocation2 + $0xc] sm:$0xf] %v233
      %250 = vst [vmem:[#allocation2 + $0x10] sm:$0xf] %v234
      %251 = vst [vmem:[#allocation2 + $0x14] sm:$0xf] %v235
      %252 = vst [vmem:[#allocation2 + $0x18] sm:$0xf] %v236
      %253 = vst [vmem:[#allocation2 + $0x1c] sm:$0xf] %v237
      %254 = vst [vmem:[#allocation2 + $0x20] sm:$0xf] %v238
      %255 = vst [vmem:[#allocation2 + $0x24] sm:$0xf] %v239
      %256 = vst [vmem:[#allocation2 + $0x28] sm:$0xf] %v240
      %257 = vst [vmem:[#allocation2 + $0x2c] sm:$0xf] %v241
      %258 = vst [vmem:[#allocation2 + $0x30] sm:$0xf] %v242
      %259 = vst [vmem:[#allocation2 + $0x34] sm:$0xf] %v243
      %260 = vst [vmem:[#allocation2 + $0x38] sm:$0xf] %v244
      %261 = vst [vmem:[#allocation2 + $0x3c] sm:$0xf] %v245
      %v262 = vunpack.c.l.bf16 %v230
      %v263 = vunpack.c.l.bf16 %v231
      %v264 = vunpack.c.l.bf16 %v232
      %v265 = vunpack.c.l.bf16 %v233
      %v266 = vunpack.c.l.bf16 %v234
      %v267 = vunpack.c.l.bf16 %v235
      %v268 = vunpack.c.l.bf16 %v236
      %v269 = vunpack.c.l.bf16 %v237
      %v270 = vunpack.c.l.bf16 %v238
      %v271 = vunpack.c.l.bf16 %v239
      %v272 = vunpack.c.l.bf16 %v240
      %v273 = vunpack.c.l.bf16 %v241
      %v274 = vunpack.c.l.bf16 %v242
      %v275 = vunpack.c.l.bf16 %v243
      %v276 = vunpack.c.l.bf16 %v244
      %v277 = vunpack.c.l.bf16 %v245
      %v278 = vsub.f32 %v191, %v262
      %v279 = vsub.f32 %v193, %v263
      %v280 = vsub.f32 %v196, %v264
      %v281 = vsub.f32 %v198, %v265
      %v282 = vsub.f32 %v201, %v266
      %v283 = vsub.f32 %v203, %v267
      %v284 = vsub.f32 %v206, %v268
      %v285 = vsub.f32 %v208, %v269
      %v286 = vsub.f32 %v211, %v270
      %v287 = vsub.f32 %v213, %v271
      %v288 = vsub.f32 %v216, %v272
      %v289 = vsub.f32 %v218, %v273
      %v290 = vsub.f32 %v221, %v274
      %v291 = vsub.f32 %v223, %v275
      %v292 = vsub.f32 %v226, %v276
      %v293 = vsub.f32 %v228, %v277
      %v294 = vpack.c.bf16 %v278, %v278
      %v295 = vpack.c.bf16 %v279, %v279
      %v296 = vpack.c.bf16 %v280, %v280
      %v297 = vpack.c.bf16 %v281, %v281
      %v298 = vpack.c.bf16 %v282, %v282
      %v299 = vpack.c.bf16 %v283, %v283
      %v300 = vpack.c.bf16 %v284, %v284
      %v301 = vpack.c.bf16 %v285, %v285
      %v302 = vpack.c.bf16 %v286, %v286
      %v303 = vpack.c.bf16 %v287, %v287
      %v304 = vpack.c.bf16 %v288, %v288
      %v305 = vpack.c.bf16 %v289, %v289
      %v306 = vpack.c.bf16 %v290, %v290
      %v307 = vpack.c.bf16 %v291, %v291
      %v308 = vpack.c.bf16 %v292, %v292
      %v309 = vpack.c.bf16 %v293, %v293
      %310 = vst [vmem:[#allocation3] sm:$0xf] %v294
      %311 = vst [vmem:[#allocation3 + $0x4] sm:$0xf] %v295
      %312 = vst [vmem:[#allocation3 + $0x8] sm:$0xf] %v296
      %313 = vst [vmem:[#allocation3 + $0xc] sm:$0xf] %v297
      %314 = vst [vmem:[#allocation3 + $0x10] sm:$0xf] %v298
      %315 = vst [vmem:[#allocation3 + $0x14] sm:$0xf] %v299
      %316 = vst [vmem:[#allocation3 + $0x18] sm:$0xf] %v300
      %317 = vst [vmem:[#allocation3 + $0x1c] sm:$0xf] %v301
      %318 = vst [vmem:[#allocation3 + $0x20] sm:$0xf] %v302
      %319 = vst [vmem:[#allocation3 + $0x24] sm:$0xf] %v303
      %320 = vst [vmem:[#allocation3 + $0x28] sm:$0xf] %v304
      %321 = vst [vmem:[#allocation3 + $0x2c] sm:$0xf] %v305
      %322 = vst [vmem:[#allocation3 + $0x30] sm:$0xf] %v306
      %323 = vst [vmem:[#allocation3 + $0x34] sm:$0xf] %v307
      %324 = vst [vmem:[#allocation3 + $0x38] sm:$0xf] %v308
      %325 = vst [vmem:[#allocation3 + $0x3c] sm:$0xf] %v309
      %326 = vst [vmem:[#allocation4] sm:$0xff] 0.0
      %327 = vst [vmem:[#allocation4 + $0x8] sm:$0xff] 0.0
      %328 = vst [vmem:[#allocation4 + $0x10] sm:$0xff] 0.0
      %329 = vst [vmem:[#allocation4 + $0x18] sm:$0xff] 0.0
      %330 = vst [vmem:[#allocation4 + $0x20] sm:$0xff] 0.0
      %331 = vst [vmem:[#allocation4 + $0x28] sm:$0xff] 0.0
      %332 = vst [vmem:[#allocation4 + $0x30] sm:$0xff] 0.0
      %333 = vst [vmem:[#allocation4 + $0x38] sm:$0xff] 0.0
      %334 = vst [vmem:[#allocation4 + $0x40] sm:$0xff] 0.0
      %335 = vst [vmem:[#allocation4 + $0x48] sm:$0xff] 0.0
      %336 = vst [vmem:[#allocation4 + $0x50] sm:$0xff] 0.0
      %337 = vst [vmem:[#allocation4 + $0x58] sm:$0xff] 0.0
      %338 = vst [vmem:[#allocation4 + $0x60] sm:$0xff] 0.0
      %339 = vst [vmem:[#allocation4 + $0x68] sm:$0xff] 0.0
      %340 = vst [vmem:[#allocation4 + $0x70] sm:$0xff] 0.0
      %341 = vst [vmem:[#allocation4 + $0x78] sm:$0xff] 0.0
    $region61: #{tpu_custom_call.1} parent=1 // pred_fallthru
      _
    %v342 = vld [vmem:[%s2] sm:$0xf]
    %v343 = vld [vmem:[%s2 + $0x4] sm:$0xf]
    %v344 = vld [vmem:[%s2 + $0x8] sm:$0xf]
    %v345 = vld [vmem:[%s2 + $0xc] sm:$0xf]
    %v346 = vld [vmem:[%s2 + $0x10] sm:$0xf]
    %v347 = vld [vmem:[%s2 + $0x14] sm:$0xf]
    %v348 = vld [vmem:[%s2 + $0x18] sm:$0xf]
    %v349 = vld [vmem:[%s2 + $0x1c] sm:$0xf]
    %v350 = vld [vmem:[%s2 + $0x20] sm:$0xf]
    %v351 = vld [vmem:[%s2 + $0x24] sm:$0xf]
    %v352 = vld [vmem:[%s2 + $0x28] sm:$0xf]
    %v353 = vld [vmem:[%s2 + $0x2c] sm:$0xf]
    %v354 = vld [vmem:[%s2 + $0x30] sm:$0xf]
    %v355 = vld [vmem:[%s2 + $0x34] sm:$0xf]
    %v356 = vld [vmem:[%s2 + $0x38] sm:$0xf]
    %v357 = vld [vmem:[%s2 + $0x3c] sm:$0xf]
    %v358 = vld [vmem:[%s2 + $0x40] sm:$0xf]
    %v359 = vld [vmem:[%s2 + $0x44] sm:$0xf]
    %v360 = vld [vmem:[%s2 + $0x48] sm:$0xf]
    %v361 = vld [vmem:[%s2 + $0x4c] sm:$0xf]
    %v362 = vld [vmem:[%s2 + $0x50] sm:$0xf]
    %v363 = vld [vmem:[%s2 + $0x54] sm:$0xf]
    %v364 = vld [vmem:[%s2 + $0x58] sm:$0xf]
    %v365 = vld [vmem:[%s2 + $0x5c] sm:$0xf]
    %v366 = vld [vmem:[%s2 + $0x60] sm:$0xf]
    %v367 = vld [vmem:[%s2 + $0x64] sm:$0xf]
    %v368 = vld [vmem:[%s2 + $0x68] sm:$0xf]
    %v369 = vld [vmem:[%s2 + $0x6c] sm:$0xf]
    %v370 = vld [vmem:[%s2 + $0x70] sm:$0xf]
    %v371 = vld [vmem:[%s2 + $0x74] sm:$0xf]
    %v372 = vld [vmem:[%s2 + $0x78] sm:$0xf]
    %v373 = vld [vmem:[%s2 + $0x7c] sm:$0xf]
    %v374 = vld [vmem:[%s6] sm:$0xf]
    %v375 = vld [vmem:[%s6 + $0x4] sm:$0xf]
    %v376 = vld [vmem:[%s7] sm:$0x1]
    %v378 = vperm.slane %v376, 0
    %v412 = vunpack.c.l.b16 %v342
    %v413 = vunpack.c.l.b16 %v343
    %v414 = vunpack.c.l.b16 %v344
    %v415 = vunpack.c.l.b16 %v345
    %v416 = vunpack.c.l.b16 %v346
    %v417 = vunpack.c.l.b16 %v347
    %v418 = vunpack.c.l.b16 %v348
    %v419 = vunpack.c.l.b16 %v349
    %v420 = vunpack.c.l.b16 %v350
    %v421 = vunpack.c.l.b16 %v351
    %v422 = vunpack.c.l.b16 %v352
    %v423 = vunpack.c.l.b16 %v353
    %v424 = vunpack.c.l.b16 %v354
    %v425 = vunpack.c.l.b16 %v355
    %v426 = vunpack.c.l.b16 %v356
    %v427 = vunpack.c.l.b16 %v357
    %v428 = vunpack.c.l.b16 %v358
    %v429 = vunpack.c.l.b16 %v359
    %v430 = vunpack.c.l.b16 %v360
    %v431 = vunpack.c.l.b16 %v361
    %v432 = vunpack.c.l.b16 %v362
    %v433 = vunpack.c.l.b16 %v363
    %v434 = vunpack.c.l.b16 %v364
    %v435 = vunpack.c.l.b16 %v365
    %v436 = vunpack.c.l.b16 %v366
    %v437 = vunpack.c.l.b16 %v367
    %v438 = vunpack.c.l.b16 %v368
    %v439 = vunpack.c.l.b16 %v369
    %v440 = vunpack.c.l.b16 %v370
    %v441 = vunpack.c.l.b16 %v371
    %v442 = vunpack.c.l.b16 %v372
    %v443 = vunpack.c.l.b16 %v373
    %v444 = vpack.c.b16 %v413, %v412
    %v445 = vpack.c.b16 %v415, %v414
    %v446 = vpack.c.b16 %v417, %v416
    %v447 = vpack.c.b16 %v419, %v418
    %v448 = vpack.c.b16 %v421, %v420
    %v449 = vpack.c.b16 %v423, %v422
    %v450 = vpack.c.b16 %v425, %v424
    %v451 = vpack.c.b16 %v427, %v426
    %v452 = vpack.c.b16 %v429, %v428
    %v453 = vpack.c.b16 %v431, %v430
    %v454 = vpack.c.b16 %v433, %v432
    %v455 = vpack.c.b16 %v435, %v434
    %v456 = vpack.c.b16 %v437, %v436
    %v457 = vpack.c.b16 %v439, %v438
    %v458 = vpack.c.b16 %v441, %v440
    %v459 = vpack.c.b16 %v443, %v442
    %v462 = vunpack.c.l.b16 %v374
    %v463 = vunpack.c.l.b16 %v375
    %v464 = vpack.c.b16 %v463, %v462
    %vm466 = vcmask 130048
    %v468 = vsel %vm466, %v444, 0
    %v471 = vsel %vm466, %v445, 0
    %v474 = vsel %vm466, %v446, 0
    %v477 = vsel %vm466, %v447, 0
    %v480 = vsel %vm466, %v448, 0
    %v483 = vsel %vm466, %v449, 0
    %v486 = vsel %vm466, %v450, 0
    %v489 = vsel %vm466, %v451, 0
    %v492 = vsel %vm466, %v452, 0
    %v495 = vsel %vm466, %v453, 0
    %v498 = vsel %vm466, %v454, 0
    %v501 = vsel %vm466, %v455, 0
    %v504 = vsel %vm466, %v456, 0
    %v507 = vsel %vm466, %v457, 0
    %v510 = vsel %vm466, %v458, 0
    %v513 = vsel %vm466, %v459, 0
    %515 = vmatpush.bf16.msra.mxu0 0
    %516 = vmatpush.bf16.msra.mxu0 0
    %517 = vmatpush.bf16.msra.mxu0 0
    %518 = vmatpush.bf16.msra.mxu0 0
    %519 = vmatpush.bf16.msra.mxu0 0
    %520 = vmatpush.bf16.msra.mxu0 0
    %521 = vmatpush.bf16.msra.mxu0 0
    %522 = vmatpush.bf16.msra.mxu0 %v464
    %523 = vmatmul.bf16.gmra.mxu0 %v468
    %v524 = vpop.f32.mrf.mxu0
    %v525 = vadd.f32 %v378, %v524
    %v526 = vpop.f32.mrf.mxu0
    %v527 = vadd.f32 %v378, %v526
    %528 = vmatmul.bf16.gmra.mxu0 %v471
    %v529 = vpop.f32.mrf.mxu0
    %v530 = vadd.f32 %v378, %v529
    %v531 = vpop.f32.mrf.mxu0
    %v532 = vadd.f32 %v378, %v531
    %533 = vmatmul.bf16.gmra.mxu0 %v474
    %v534 = vpop.f32.mrf.mxu0
    %v535 = vadd.f32 %v378, %v534
    %v536 = vpop.f32.mrf.mxu0
    %v537 = vadd.f32 %v378, %v536
    %538 = vmatmul.bf16.gmra.mxu0 %v477
    %v539 = vpop.f32.mrf.mxu0
    %v540 = vadd.f32 %v378, %v539
    %v541 = vpop.f32.mrf.mxu0
    %v542 = vadd.f32 %v378, %v541
    %543 = vmatmul.bf16.gmra.mxu0 %v480
    %v544 = vpop.f32.mrf.mxu0
    %v545 = vadd.f32 %v378, %v544
    %v546 = vpop.f32.mrf.mxu0
    %v547 = vadd.f32 %v378, %v546
    %548 = vmatmul.bf16.gmra.mxu0 %v483
    %v549 = vpop.f32.mrf.mxu0
    %v550 = vadd.f32 %v378, %v549
    %v551 = vpop.f32.mrf.mxu0
    %v552 = vadd.f32 %v378, %v551
    %553 = vmatmul.bf16.gmra.mxu0 %v486
    %v554 = vpop.f32.mrf.mxu0
    %v555 = vadd.f32 %v378, %v554
    %v556 = vpop.f32.mrf.mxu0
    %v557 = vadd.f32 %v378, %v556
    %558 = vmatmul.bf16.gmra.mxu0 %v489
    %v559 = vpop.f32.mrf.mxu0
    %v560 = vadd.f32 %v378, %v559
    %v561 = vpop.f32.mrf.mxu0
    %v562 = vadd.f32 %v378, %v561
    %563 = vmatmul.bf16.gmra.mxu0 %v492
    %v564 = vpop.f32.mrf.mxu0
    %v565 = vadd.f32 %v378, %v564
    %v566 = vpop.f32.mrf.mxu0
    %v567 = vadd.f32 %v378, %v566
    %568 = vmatmul.bf16.gmra.mxu0 %v495
    %v569 = vpop.f32.mrf.mxu0
    %v570 = vadd.f32 %v378, %v569
    %v571 = vpop.f32.mrf.mxu0
    %v572 = vadd.f32 %v378, %v571
    %573 = vmatmul.bf16.gmra.mxu0 %v498
    %v574 = vpop.f32.mrf.mxu0
    %v575 = vadd.f32 %v378, %v574
    %v576 = vpop.f32.mrf.mxu0
    %v577 = vadd.f32 %v378, %v576
    %578 = vmatmul.bf16.gmra.mxu0 %v501
    %v579 = vpop.f32.mrf.mxu0
    %v580 = vadd.f32 %v378, %v579
    %v581 = vpop.f32.mrf.mxu0
    %v582 = vadd.f32 %v378, %v581
    %583 = vmatmul.bf16.gmra.mxu0 %v504
    %v584 = vpop.f32.mrf.mxu0
    %v585 = vadd.f32 %v378, %v584
    %v586 = vpop.f32.mrf.mxu0
    %v587 = vadd.f32 %v378, %v586
    %588 = vmatmul.bf16.gmra.mxu0 %v507
    %v589 = vpop.f32.mrf.mxu0
    %v590 = vadd.f32 %v378, %v589
    %v591 = vpop.f32.mrf.mxu0
    %v592 = vadd.f32 %v378, %v591
    %593 = vmatmul.bf16.gmra.mxu0 %v510
    %v594 = vpop.f32.mrf.mxu0
    %v595 = vadd.f32 %v378, %v594
    %v596 = vpop.f32.mrf.mxu0
    %v597 = vadd.f32 %v378, %v596
    %598 = vmatmul.bf16.gmra.mxu0 %v513
    %v599 = vpop.f32.mrf.mxu0
    %v600 = vadd.f32 %v378, %v599
    %v601 = vpop.f32.mrf.mxu0
    %v602 = vadd.f32 %v378, %v601
    %603 = vdwg.mxu0
    %v604 = vmax.f32 %v525, 0.0
    %v605 = vmax.f32 %v527, 0.0
    %v606 = vmax.f32 %v530, 0.0
    %v607 = vmax.f32 %v532, 0.0
    %v608 = vmax.f32 %v535, 0.0
    %v609 = vmax.f32 %v537, 0.0
    %v610 = vmax.f32 %v540, 0.0
    %v611 = vmax.f32 %v542, 0.0
    %v612 = vmax.f32 %v545, 0.0
    %v613 = vmax.f32 %v547, 0.0
    %v614 = vmax.f32 %v550, 0.0
    %v615 = vmax.f32 %v552, 0.0
    %v616 = vmax.f32 %v555, 0.0
    %v617 = vmax.f32 %v557, 0.0
    %v618 = vmax.f32 %v560, 0.0
    %v619 = vmax.f32 %v562, 0.0
    %v620 = vmax.f32 %v565, 0.0
    %v621 = vmax.f32 %v567, 0.0
    %v622 = vmax.f32 %v570, 0.0
    %v623 = vmax.f32 %v572, 0.0
    %v624 = vmax.f32 %v575, 0.0
    %v625 = vmax.f32 %v577, 0.0
    %v626 = vmax.f32 %v580, 0.0
    %v627 = vmax.f32 %v582, 0.0
    %v628 = vmax.f32 %v585, 0.0
    %v629 = vmax.f32 %v587, 0.0
    %v630 = vmax.f32 %v590, 0.0
    %v631 = vmax.f32 %v592, 0.0
    %v632 = vmax.f32 %v595, 0.0
    %v633 = vmax.f32 %v597, 0.0
    %v634 = vmax.f32 %v600, 0.0
    %v635 = vmax.f32 %v602, 0.0
    %vm636 = vcmp.ne.f32.partialorder %v525, %v525
    %vm637 = vcmp.ne.f32.partialorder %v527, %v527
    %vm638 = vcmp.ne.f32.partialorder %v530, %v530
    %vm639 = vcmp.ne.f32.partialorder %v532, %v532
    %vm640 = vcmp.ne.f32.partialorder %v535, %v535
    %vm641 = vcmp.ne.f32.partialorder %v537, %v537
    %vm642 = vcmp.ne.f32.partialorder %v540, %v540
    %vm643 = vcmp.ne.f32.partialorder %v542, %v542
    %vm644 = vcmp.ne.f32.partialorder %v545, %v545
    %vm645 = vcmp.ne.f32.partialorder %v547, %v547
    %vm646 = vcmp.ne.f32.partialorder %v550, %v550
    %vm647 = vcmp.ne.f32.partialorder %v552, %v552
    %vm648 = vcmp.ne.f32.partialorder %v555, %v555
    %vm649 = vcmp.ne.f32.partialorder %v557, %v557
    %vm650 = vcmp.ne.f32.partialorder %v560, %v560
    %vm651 = vcmp.ne.f32.partialorder %v562, %v562
    %vm652 = vcmp.ne.f32.partialorder %v565, %v565
    %vm653 = vcmp.ne.f32.partialorder %v567, %v567
    %vm654 = vcmp.ne.f32.partialorder %v570, %v570
    %vm655 = vcmp.ne.f32.partialorder %v572, %v572
    %vm656 = vcmp.ne.f32.partialorder %v575, %v575
    %vm657 = vcmp.ne.f32.partialorder %v577, %v577
    %vm658 = vcmp.ne.f32.partialorder %v580, %v580
    %vm659 = vcmp.ne.f32.partialorder %v582, %v582
    %vm660 = vcmp.ne.f32.partialorder %v585, %v585
    %vm661 = vcmp.ne.f32.partialorder %v587, %v587
    %vm662 = vcmp.ne.f32.partialorder %v590, %v590
    %vm663 = vcmp.ne.f32.partialorder %v592, %v592
    %vm664 = vcmp.ne.f32.partialorder %v595, %v595
    %vm665 = vcmp.ne.f32.partialorder %v597, %v597
    %vm666 = vcmp.ne.f32.partialorder %v600, %v600
    %vm667 = vcmp.ne.f32.partialorder %v602, %v602
    %v668 = vadd.f32 %v525, 0.0
    %v669 = vadd.f32 %v527, 0.0
    %v670 = vadd.f32 %v530, 0.0
    %v671 = vadd.f32 %v532, 0.0
    %v672 = vadd.f32 %v535, 0.0
    %v673 = vadd.f32 %v537, 0.0
    %v674 = vadd.f32 %v540, 0.0
    %v675 = vadd.f32 %v542, 0.0
    %v676 = vadd.f32 %v545, 0.0
    %v677 = vadd.f32 %v547, 0.0
    %v678 = vadd.f32 %v550, 0.0
    %v679 = vadd.f32 %v552, 0.0
    %v680 = vadd.f32 %v555, 0.0
    %v681 = vadd.f32 %v557, 0.0
    %v682 = vadd.f32 %v560, 0.0
    %v683 = vadd.f32 %v562, 0.0
    %v684 = vadd.f32 %v565, 0.0
    %v685 = vadd.f32 %v567, 0.0
    %v686 = vadd.f32 %v570, 0.0
    %v687 = vadd.f32 %v572, 0.0
    %v688 = vadd.f32 %v575, 0.0
    %v689 = vadd.f32 %v577, 0.0
    %v690 = vadd.f32 %v580, 0.0
    %v691 = vadd.f32 %v582, 0.0
    %v692 = vadd.f32 %v585, 0.0
    %v693 = vadd.f32 %v587, 0.0
    %v694 = vadd.f32 %v590, 0.0
    %v695 = vadd.f32 %v592, 0.0
    %v696 = vadd.f32 %v595, 0.0
    %v697 = vadd.f32 %v597, 0.0
    %v698 = vadd.f32 %v600, 0.0
    %v699 = vadd.f32 %v602, 0.0
    %v700 = vand.u32 2147483647, %v525
    %v701 = vand.u32 2147483647, %v527
    %v702 = vand.u32 2147483647, %v530
    %v703 = vand.u32 2147483647, %v532
    %v704 = vand.u32 2147483647, %v535
    %v705 = vand.u32 2147483647, %v537
    %v706 = vand.u32 2147483647, %v540
    %v707 = vand.u32 2147483647, %v542
    %v708 = vand.u32 2147483647, %v545
    %v709 = vand.u32 2147483647, %v547
    %v710 = vand.u32 2147483647, %v550
    %v711 = vand.u32 2147483647, %v552
    %v712 = vand.u32 2147483647, %v555
    %v713 = vand.u32 2147483647, %v557
    %v714 = vand.u32 2147483647, %v560
    %v715 = vand.u32 2147483647, %v562
    %v716 = vand.u32 2147483647, %v565
    %v717 = vand.u32 2147483647, %v567
    %v718 = vand.u32 2147483647, %v570
    %v719 = vand.u32 2147483647, %v572
    %v720 = vand.u32 2147483647, %v575
    %v721 = vand.u32 2147483647, %v577
    %v722 = vand.u32 2147483647, %v580
    %v723 = vand.u32 2147483647, %v582
    %v724 = vand.u32 2147483647, %v585
    %v725 = vand.u32 2147483647, %v587
    %v726 = vand.u32 2147483647, %v590
    %v727 = vand.u32 2147483647, %v592
    %v728 = vand.u32 2147483647, %v595
    %v729 = vand.u32 2147483647, %v597
    %v730 = vand.u32 2147483647, %v600
    %v731 = vand.u32 2147483647, %v602
    %v732 = vsub.f32 0.0, %v700
    %v733 = vsub.f32 0.0, %v701
    %v734 = vsub.f32 0.0, %v702
    %v735 = vsub.f32 0.0, %v703
    %v736 = vsub.f32 0.0, %v704
    %v737 = vsub.f32 0.0, %v705
    %v738 = vsub.f32 0.0, %v706
    %v739 = vsub.f32 0.0, %v707
    %v740 = vsub.f32 0.0, %v708
    %v741 = vsub.f32 0.0, %v709
    %v742 = vsub.f32 0.0, %v710
    %v743 = vsub.f32 0.0, %v711
    %v744 = vsub.f32 0.0, %v712
    %v745 = vsub.f32 0.0, %v713
    %v746 = vsub.f32 0.0, %v714
    %v747 = vsub.f32 0.0, %v715
    %v748 = vsub.f32 0.0, %v716
    %v749 = vsub.f32 0.0, %v717
    %v750 = vsub.f32 0.0, %v718
    %v751 = vsub.f32 0.0, %v719
    %v752 = vsub.f32 0.0, %v720
    %v753 = vsub.f32 0.0, %v721
    %v754 = vsub.f32 0.0, %v722
    %v755 = vsub.f32 0.0, %v723
    %v756 = vsub.f32 0.0, %v724
    %v757 = vsub.f32 0.0, %v725
    %v758 = vsub.f32 0.0, %v726
    %v759 = vsub.f32 0.0, %v727
    %v760 = vsub.f32 0.0, %v728
    %v761 = vsub.f32 0.0, %v729
    %v762 = vsub.f32 0.0, %v730
    %v763 = vsub.f32 0.0, %v731
    %v764 = vmul.f32 %v732, 1.442695
    %v765 = vpow.pop %v764
    %v766 = vmul.f32 %v733, 1.442695
    %v767 = vpow.pop %v766
    %v768 = vmul.f32 %v734, 1.442695
    %v769 = vpow.pop %v768
    %v770 = vmul.f32 %v735, 1.442695
    %v771 = vpow.pop %v770
    %v772 = vmul.f32 %v736, 1.442695
    %v773 = vpow.pop %v772
    %v774 = vmul.f32 %v737, 1.442695
    %v775 = vpow.pop %v774
    %v776 = vmul.f32 %v738, 1.442695
    %v777 = vpow.pop %v776
    %v778 = vmul.f32 %v739, 1.442695
    %v779 = vpow.pop %v778
    %v780 = vmul.f32 %v740, 1.442695
    %v781 = vpow.pop %v780
    %v782 = vmul.f32 %v741, 1.442695
    %v783 = vpow.pop %v782
    %v784 = vmul.f32 %v742, 1.442695
    %v785 = vpow.pop %v784
    %v786 = vmul.f32 %v743, 1.442695
    %v787 = vpow.pop %v786
    %v788 = vmul.f32 %v744, 1.442695
    %v789 = vpow.pop %v788
    %v790 = vmul.f32 %v745, 1.442695
    %v791 = vpow.pop %v790
    %v792 = vmul.f32 %v746, 1.442695
    %v793 = vpow.pop %v792
    %v794 = vmul.f32 %v747, 1.442695
    %v795 = vpow.pop %v794
    %v796 = vmul.f32 %v748, 1.442695
    %v797 = vpow.pop %v796
    %v798 = vmul.f32 %v749, 1.442695
    %v799 = vpow.pop %v798
    %v800 = vmul.f32 %v750, 1.442695
    %v801 = vpow.pop %v800
    %v802 = vmul.f32 %v751, 1.442695
    %v803 = vpow.pop %v802
    %v804 = vmul.f32 %v752, 1.442695
    %v805 = vpow.pop %v804
    %v806 = vmul.f32 %v753, 1.442695
    %v807 = vpow.pop %v806
    %v808 = vmul.f32 %v754, 1.442695
    %v809 = vpow.pop %v808
    %v810 = vmul.f32 %v755, 1.442695
    %v811 = vpow.pop %v810
    %v812 = vmul.f32 %v756, 1.442695
    %v813 = vpow.pop %v812
    %v814 = vmul.f32 %v757, 1.442695
    %v815 = vpow.pop %v814
    %v816 = vmul.f32 %v758, 1.442695
    %v817 = vpow.pop %v816
    %v818 = vmul.f32 %v759, 1.442695
    %v819 = vpow.pop %v818
    %v820 = vmul.f32 %v760, 1.442695
    %v821 = vpow.pop %v820
    %v822 = vmul.f32 %v761, 1.442695
    %v823 = vpow.pop %v822
    %v824 = vmul.f32 %v762, 1.442695
    %v825 = vpow.pop %v824
    %v826 = vmul.f32 %v763, 1.442695
    %v827 = vpow.pop %v826
    %v828 = vadd.f32 %v765, 1.0
    %v829 = vlog2.pop %v828
    %v830 = vmul.f32 %v829, 0.6931472
    %v831 = vmul.f32 -0.5, %v765
    %v832 = vadd.f32 %v831, 1.0
    %v833 = vmul.f32 %v832, %v765
    %v834 = vand.u32 2147483647, %v765
    %vm835 = vcmp.lt.f32.partialorder %v834, 0.0004427343
    %v836 = vsel %vm835, %v833, %v830
    %v837 = vadd.f32 %v767, 1.0
    %v838 = vlog2.pop %v837
    %v839 = vmul.f32 %v838, 0.6931472
    %v840 = vmul.f32 -0.5, %v767
    %v841 = vadd.f32 %v840, 1.0
    %v842 = vmul.f32 %v841, %v767
    %v843 = vand.u32 2147483647, %v767
    %vm844 = vcmp.lt.f32.partialorder %v843, 0.0004427343
    %v845 = vsel %vm844, %v842, %v839
    %v846 = vadd.f32 %v769, 1.0
    %v847 = vlog2.pop %v846
    %v848 = vmul.f32 %v847, 0.6931472
    %v849 = vmul.f32 -0.5, %v769
    %v850 = vadd.f32 %v849, 1.0
    %v851 = vmul.f32 %v850, %v769
    %v852 = vand.u32 2147483647, %v769
    %vm853 = vcmp.lt.f32.partialorder %v852, 0.0004427343
    %v854 = vsel %vm853, %v851, %v848
    %v855 = vadd.f32 %v771, 1.0
    %v856 = vlog2.pop %v855
    %v857 = vmul.f32 %v856, 0.6931472
    %v858 = vmul.f32 -0.5, %v771
    %v859 = vadd.f32 %v858, 1.0
    %v860 = vmul.f32 %v859, %v771
    %v861 = vand.u32 2147483647, %v771
    %vm862 = vcmp.lt.f32.partialorder %v861, 0.0004427343
    %v863 = vsel %vm862, %v860, %v857
    %v864 = vadd.f32 %v773, 1.0
    %v865 = vlog2.pop %v864
    %v866 = vmul.f32 %v865, 0.6931472
    %v867 = vmul.f32 -0.5, %v773
    %v868 = vadd.f32 %v867, 1.0
    %v869 = vmul.f32 %v868, %v773
    %v870 = vand.u32 2147483647, %v773
    %vm871 = vcmp.lt.f32.partialorder %v870, 0.0004427343
    %v872 = vsel %vm871, %v869, %v866
    %v873 = vadd.f32 %v775, 1.0
    %v874 = vlog2.pop %v873
    %v875 = vmul.f32 %v874, 0.6931472
    %v876 = vmul.f32 -0.5, %v775
    %v877 = vadd.f32 %v876, 1.0
    %v878 = vmul.f32 %v877, %v775
    %v879 = vand.u32 2147483647, %v775
    %vm880 = vcmp.lt.f32.partialorder %v879, 0.0004427343
    %v881 = vsel %vm880, %v878, %v875
    %v882 = vadd.f32 %v777, 1.0
    %v883 = vlog2.pop %v882
    %v884 = vmul.f32 %v883, 0.6931472
    %v885 = vmul.f32 -0.5, %v777
    %v886 = vadd.f32 %v885, 1.0
    %v887 = vmul.f32 %v886, %v777
    %v888 = vand.u32 2147483647, %v777
    %vm889 = vcmp.lt.f32.partialorder %v888, 0.0004427343
    %v890 = vsel %vm889, %v887, %v884
    %v891 = vadd.f32 %v779, 1.0
    %v892 = vlog2.pop %v891
    %v893 = vmul.f32 %v892, 0.6931472
    %v894 = vmul.f32 -0.5, %v779
    %v895 = vadd.f32 %v894, 1.0
    %v896 = vmul.f32 %v895, %v779
    %v897 = vand.u32 2147483647, %v779
    %vm898 = vcmp.lt.f32.partialorder %v897, 0.0004427343
    %v899 = vsel %vm898, %v896, %v893
    %v900 = vadd.f32 %v781, 1.0
    %v901 = vlog2.pop %v900
    %v902 = vmul.f32 %v901, 0.6931472
    %v903 = vmul.f32 -0.5, %v781
    %v904 = vadd.f32 %v903, 1.0
    %v905 = vmul.f32 %v904, %v781
    %v906 = vand.u32 2147483647, %v781
    %vm907 = vcmp.lt.f32.partialorder %v906, 0.0004427343
    %v908 = vsel %vm907, %v905, %v902
    %v909 = vadd.f32 %v783, 1.0
    %v910 = vlog2.pop %v909
    %v911 = vmul.f32 %v910, 0.6931472
    %v912 = vmul.f32 -0.5, %v783
    %v913 = vadd.f32 %v912, 1.0
    %v914 = vmul.f32 %v913, %v783
    %v915 = vand.u32 2147483647, %v783
    %vm916 = vcmp.lt.f32.partialorder %v915, 0.0004427343
    %v917 = vsel %vm916, %v914, %v911
    %v918 = vadd.f32 %v785, 1.0
    %v919 = vlog2.pop %v918
    %v920 = vmul.f32 %v919, 0.6931472
    %v921 = vmul.f32 -0.5, %v785
    %v922 = vadd.f32 %v921, 1.0
    %v923 = vmul.f32 %v922, %v785
    %v924 = vand.u32 2147483647, %v785
    %vm925 = vcmp.lt.f32.partialorder %v924, 0.0004427343
    %v926 = vsel %vm925, %v923, %v920
    %v927 = vadd.f32 %v787, 1.0
    %v928 = vlog2.pop %v927
    %v929 = vmul.f32 %v928, 0.6931472
    %v930 = vmul.f32 -0.5, %v787
    %v931 = vadd.f32 %v930, 1.0
    %v932 = vmul.f32 %v931, %v787
    %v933 = vand.u32 2147483647, %v787
    %vm934 = vcmp.lt.f32.partialorder %v933, 0.0004427343
    %v935 = vsel %vm934, %v932, %v929
    %v936 = vadd.f32 %v789, 1.0
    %v937 = vlog2.pop %v936
    %v938 = vmul.f32 %v937, 0.6931472
    %v939 = vmul.f32 -0.5, %v789
    %v940 = vadd.f32 %v939, 1.0
    %v941 = vmul.f32 %v940, %v789
    %v942 = vand.u32 2147483647, %v789
    %vm943 = vcmp.lt.f32.partialorder %v942, 0.0004427343
    %v944 = vsel %vm943, %v941, %v938
    %v945 = vadd.f32 %v791, 1.0
    %v946 = vlog2.pop %v945
    %v947 = vmul.f32 %v946, 0.6931472
    %v948 = vmul.f32 -0.5, %v791
    %v949 = vadd.f32 %v948, 1.0
    %v950 = vmul.f32 %v949, %v791
    %v951 = vand.u32 2147483647, %v791
    %vm952 = vcmp.lt.f32.partialorder %v951, 0.0004427343
    %v953 = vsel %vm952, %v950, %v947
    %v954 = vadd.f32 %v793, 1.0
    %v955 = vlog2.pop %v954
    %v956 = vmul.f32 %v955, 0.6931472
    %v957 = vmul.f32 -0.5, %v793
    %v958 = vadd.f32 %v957, 1.0
    %v959 = vmul.f32 %v958, %v793
    %v960 = vand.u32 2147483647, %v793
    %vm961 = vcmp.lt.f32.partialorder %v960, 0.0004427343
    %v962 = vsel %vm961, %v959, %v956
    %v963 = vadd.f32 %v795, 1.0
    %v964 = vlog2.pop %v963
    %v965 = vmul.f32 %v964, 0.6931472
    %v966 = vmul.f32 -0.5, %v795
    %v967 = vadd.f32 %v966, 1.0
    %v968 = vmul.f32 %v967, %v795
    %v969 = vand.u32 2147483647, %v795
    %vm970 = vcmp.lt.f32.partialorder %v969, 0.0004427343
    %v971 = vsel %vm970, %v968, %v965
    %v972 = vadd.f32 %v797, 1.0
    %v973 = vlog2.pop %v972
    %v974 = vmul.f32 %v973, 0.6931472
    %v975 = vmul.f32 -0.5, %v797
    %v976 = vadd.f32 %v975, 1.0
    %v977 = vmul.f32 %v976, %v797
    %v978 = vand.u32 2147483647, %v797
    %vm979 = vcmp.lt.f32.partialorder %v978, 0.0004427343
    %v980 = vsel %vm979, %v977, %v974
    %v981 = vadd.f32 %v799, 1.0
    %v982 = vlog2.pop %v981
    %v983 = vmul.f32 %v982, 0.6931472
    %v984 = vmul.f32 -0.5, %v799
    %v985 = vadd.f32 %v984, 1.0
    %v986 = vmul.f32 %v985, %v799
    %v987 = vand.u32 2147483647, %v799
    %vm988 = vcmp.lt.f32.partialorder %v987, 0.0004427343
    %v989 = vsel %vm988, %v986, %v983
    %v990 = vadd.f32 %v801, 1.0
    %v991 = vlog2.pop %v990
    %v992 = vmul.f32 %v991, 0.6931472
    %v993 = vmul.f32 -0.5, %v801
    %v994 = vadd.f32 %v993, 1.0
    %v995 = vmul.f32 %v994, %v801
    %v996 = vand.u32 2147483647, %v801
    %vm997 = vcmp.lt.f32.partialorder %v996, 0.0004427343
    %v998 = vsel %vm997, %v995, %v992
    %v999 = vadd.f32 %v803, 1.0
    %v1000 = vlog2.pop %v999
    %v1001 = vmul.f32 %v1000, 0.6931472
    %v1002 = vmul.f32 -0.5, %v803
    %v1003 = vadd.f32 %v1002, 1.0
    %v1004 = vmul.f32 %v1003, %v803
    %v1005 = vand.u32 2147483647, %v803
    %vm1006 = vcmp.lt.f32.partialorder %v1005, 0.0004427343
    %v1007 = vsel %vm1006, %v1004, %v1001
    %v1008 = vadd.f32 %v805, 1.0
    %v1009 = vlog2.pop %v1008
    %v1010 = vmul.f32 %v1009, 0.6931472
    %v1011 = vmul.f32 -0.5, %v805
    %v1012 = vadd.f32 %v1011, 1.0
    %v1013 = vmul.f32 %v1012, %v805
    %v1014 = vand.u32 2147483647, %v805
    %vm1015 = vcmp.lt.f32.partialorder %v1014, 0.0004427343
    %v1016 = vsel %vm1015, %v1013, %v1010
    %v1017 = vadd.f32 %v807, 1.0
    %v1018 = vlog2.pop %v1017
    %v1019 = vmul.f32 %v1018, 0.6931472
    %v1020 = vmul.f32 -0.5, %v807
    %v1021 = vadd.f32 %v1020, 1.0
    %v1022 = vmul.f32 %v1021, %v807
    %v1023 = vand.u32 2147483647, %v807
    %vm1024 = vcmp.lt.f32.partialorder %v1023, 0.0004427343
    %v1025 = vsel %vm1024, %v1022, %v1019
    %v1026 = vadd.f32 %v809, 1.0
    %v1027 = vlog2.pop %v1026
    %v1028 = vmul.f32 %v1027, 0.6931472
    %v1029 = vmul.f32 -0.5, %v809
    %v1030 = vadd.f32 %v1029, 1.0
    %v1031 = vmul.f32 %v1030, %v809
    %v1032 = vand.u32 2147483647, %v809
    %vm1033 = vcmp.lt.f32.partialorder %v1032, 0.0004427343
    %v1034 = vsel %vm1033, %v1031, %v1028
    %v1035 = vadd.f32 %v811, 1.0
    %v1036 = vlog2.pop %v1035
    %v1037 = vmul.f32 %v1036, 0.6931472
    %v1038 = vmul.f32 -0.5, %v811
    %v1039 = vadd.f32 %v1038, 1.0
    %v1040 = vmul.f32 %v1039, %v811
    %v1041 = vand.u32 2147483647, %v811
    %vm1042 = vcmp.lt.f32.partialorder %v1041, 0.0004427343
    %v1043 = vsel %vm1042, %v1040, %v1037
    %v1044 = vadd.f32 %v813, 1.0
    %v1045 = vlog2.pop %v1044
    %v1046 = vmul.f32 %v1045, 0.6931472
    %v1047 = vmul.f32 -0.5, %v813
    %v1048 = vadd.f32 %v1047, 1.0
    %v1049 = vmul.f32 %v1048, %v813
    %v1050 = vand.u32 2147483647, %v813
    %vm1051 = vcmp.lt.f32.partialorder %v1050, 0.0004427343
    %v1052 = vsel %vm1051, %v1049, %v1046
    %v1053 = vadd.f32 %v815, 1.0
    %v1054 = vlog2.pop %v1053
    %v1055 = vmul.f32 %v1054, 0.6931472
    %v1056 = vmul.f32 -0.5, %v815
    %v1057 = vadd.f32 %v1056, 1.0
    %v1058 = vmul.f32 %v1057, %v815
    %v1059 = vand.u32 2147483647, %v815
    %vm1060 = vcmp.lt.f32.partialorder %v1059, 0.0004427343
    %v1061 = vsel %vm1060, %v1058, %v1055
    %v1062 = vadd.f32 %v817, 1.0
    %v1063 = vlog2.pop %v1062
    %v1064 = vmul.f32 %v1063, 0.6931472
    %v1065 = vmul.f32 -0.5, %v817
    %v1066 = vadd.f32 %v1065, 1.0
    %v1067 = vmul.f32 %v1066, %v817
    %v1068 = vand.u32 2147483647, %v817
    %vm1069 = vcmp.lt.f32.partialorder %v1068, 0.0004427343
    %v1070 = vsel %vm1069, %v1067, %v1064
    %v1071 = vadd.f32 %v819, 1.0
    %v1072 = vlog2.pop %v1071
    %v1073 = vmul.f32 %v1072, 0.6931472
    %v1074 = vmul.f32 -0.5, %v819
    %v1075 = vadd.f32 %v1074, 1.0
    %v1076 = vmul.f32 %v1075, %v819
    %v1077 = vand.u32 2147483647, %v819
    %vm1078 = vcmp.lt.f32.partialorder %v1077, 0.0004427343
    %v1079 = vsel %vm1078, %v1076, %v1073
    %v1080 = vadd.f32 %v821, 1.0
    %v1081 = vlog2.pop %v1080
    %v1082 = vmul.f32 %v1081, 0.6931472
    %v1083 = vmul.f32 -0.5, %v821
    %v1084 = vadd.f32 %v1083, 1.0
    %v1085 = vmul.f32 %v1084, %v821
    %v1086 = vand.u32 2147483647, %v821
    %vm1087 = vcmp.lt.f32.partialorder %v1086, 0.0004427343
    %v1088 = vsel %vm1087, %v1085, %v1082
    %v1089 = vadd.f32 %v823, 1.0
    %v1090 = vlog2.pop %v1089
    %v1091 = vmul.f32 %v1090, 0.6931472
    %v1092 = vmul.f32 -0.5, %v823
    %v1093 = vadd.f32 %v1092, 1.0
    %v1094 = vmul.f32 %v1093, %v823
    %v1095 = vand.u32 2147483647, %v823
    %vm1096 = vcmp.lt.f32.partialorder %v1095, 0.0004427343
    %v1097 = vsel %vm1096, %v1094, %v1091
    %v1098 = vadd.f32 %v825, 1.0
    %v1099 = vlog2.pop %v1098
    %v1100 = vmul.f32 %v1099, 0.6931472
    %v1101 = vmul.f32 -0.5, %v825
    %v1102 = vadd.f32 %v1101, 1.0
    %v1103 = vmul.f32 %v1102, %v825
    %v1104 = vand.u32 2147483647, %v825
    %vm1105 = vcmp.lt.f32.partialorder %v1104, 0.0004427343
    %v1106 = vsel %vm1105, %v1103, %v1100
    %v1107 = vadd.f32 %v827, 1.0
    %v1108 = vlog2.pop %v1107
    %v1109 = vmul.f32 %v1108, 0.6931472
    %v1110 = vmul.f32 -0.5, %v827
    %v1111 = vadd.f32 %v1110, 1.0
    %v1112 = vmul.f32 %v1111, %v827
    %v1113 = vand.u32 2147483647, %v827
    %vm1114 = vcmp.lt.f32.partialorder %v1113, 0.0004427343
    %v1115 = vsel %vm1114, %v1112, %v1109
    %v1116 = vadd.f32 %v604, %v836
    %v1117 = vadd.f32 %v605, %v845
    %v1118 = vadd.f32 %v606, %v854
    %v1119 = vadd.f32 %v607, %v863
    %v1120 = vadd.f32 %v608, %v872
    %v1121 = vadd.f32 %v609, %v881
    %v1122 = vadd.f32 %v610, %v890
    %v1123 = vadd.f32 %v611, %v899
    %v1124 = vadd.f32 %v612, %v908
    %v1125 = vadd.f32 %v613, %v917
    %v1126 = vadd.f32 %v614, %v926
    %v1127 = vadd.f32 %v615, %v935
    %v1128 = vadd.f32 %v616, %v944
    %v1129 = vadd.f32 %v617, %v953
    %v1130 = vadd.f32 %v618, %v962
    %v1131 = vadd.f32 %v619, %v971
    %v1132 = vadd.f32 %v620, %v980
    %v1133 = vadd.f32 %v621, %v989
    %v1134 = vadd.f32 %v622, %v998
    %v1135 = vadd.f32 %v623, %v1007
    %v1136 = vadd.f32 %v624, %v1016
    %v1137 = vadd.f32 %v625, %v1025
    %v1138 = vadd.f32 %v626, %v1034
    %v1139 = vadd.f32 %v627, %v1043
    %v1140 = vadd.f32 %v628, %v1052
    %v1141 = vadd.f32 %v629, %v1061
    %v1142 = vadd.f32 %v630, %v1070
    %v1143 = vadd.f32 %v631, %v1079
    %v1144 = vadd.f32 %v632, %v1088
    %v1145 = vadd.f32 %v633, %v1097
    %v1146 = vadd.f32 %v634, %v1106
    %v1147 = vadd.f32 %v635, %v1115
    %v1148 = vsel %vm636, %v668, %v1116
    %v1149 = vsel %vm637, %v669, %v1117
    %v1150 = vsel %vm638, %v670, %v1118
    %v1151 = vsel %vm639, %v671, %v1119
    %v1152 = vsel %vm640, %v672, %v1120
    %v1153 = vsel %vm641, %v673, %v1121
    %v1154 = vsel %vm642, %v674, %v1122
    %v1155 = vsel %vm643, %v675, %v1123
    %v1156 = vsel %vm644, %v676, %v1124
    %v1157 = vsel %vm645, %v677, %v1125
    %v1158 = vsel %vm646, %v678, %v1126
    %v1159 = vsel %vm647, %v679, %v1127
    %v1160 = vsel %vm648, %v680, %v1128
    %v1161 = vsel %vm649, %v681, %v1129
    %v1162 = vsel %vm650, %v682, %v1130
    %v1163 = vsel %vm651, %v683, %v1131
    %v1164 = vsel %vm652, %v684, %v1132
    %v1165 = vsel %vm653, %v685, %v1133
    %v1166 = vsel %vm654, %v686, %v1134
    %v1167 = vsel %vm655, %v687, %v1135
    %v1168 = vsel %vm656, %v688, %v1136
    %v1169 = vsel %vm657, %v689, %v1137
    %v1170 = vsel %vm658, %v690, %v1138
    %v1171 = vsel %vm659, %v691, %v1139
    %v1172 = vsel %vm660, %v692, %v1140
    %v1173 = vsel %vm661, %v693, %v1141
    %v1174 = vsel %vm662, %v694, %v1142
    %v1175 = vsel %vm663, %v695, %v1143
    %v1176 = vsel %vm664, %v696, %v1144
    %v1177 = vsel %vm665, %v697, %v1145
    %v1178 = vsel %vm666, %v698, %v1146
    %v1179 = vsel %vm667, %v699, %v1147
    %v1180 = vsub.f32 %v1148, 0.6931472
    %v1181 = vsub.f32 %v1149, 0.6931472
    %v1182 = vsub.f32 %v1150, 0.6931472
    %v1183 = vsub.f32 %v1151, 0.6931472
    %v1184 = vsub.f32 %v1152, 0.6931472
    %v1185 = vsub.f32 %v1153, 0.6931472
    %v1186 = vsub.f32 %v1154, 0.6931472
    %v1187 = vsub.f32 %v1155, 0.6931472
    %v1188 = vsub.f32 %v1156, 0.6931472
    %v1189 = vsub.f32 %v1157, 0.6931472
    %v1190 = vsub.f32 %v1158, 0.6931472
    %v1191 = vsub.f32 %v1159, 0.6931472
    %v1192 = vsub.f32 %v1160, 0.6931472
    %v1193 = vsub.f32 %v1161, 0.6931472
    %v1194 = vsub.f32 %v1162, 0.6931472
    %v1195 = vsub.f32 %v1163, 0.6931472
    %v1196 = vsub.f32 %v1164, 0.6931472
    %v1197 = vsub.f32 %v1165, 0.6931472
    %v1198 = vsub.f32 %v1166, 0.6931472
    %v1199 = vsub.f32 %v1167, 0.6931472
    %v1200 = vsub.f32 %v1168, 0.6931472
    %v1201 = vsub.f32 %v1169, 0.6931472
    %v1202 = vsub.f32 %v1170, 0.6931472
    %v1203 = vsub.f32 %v1171, 0.6931472
    %v1204 = vsub.f32 %v1172, 0.6931472
    %v1205 = vsub.f32 %v1173, 0.6931472
    %v1206 = vsub.f32 %v1174, 0.6931472
    %v1207 = vsub.f32 %v1175, 0.6931472
    %v1208 = vsub.f32 %v1176, 0.6931472
    %v1209 = vsub.f32 %v1177, 0.6931472
    %v1210 = vsub.f32 %v1178, 0.6931472
    %v1211 = vsub.f32 %v1179, 0.6931472
    %v1212 = vpack.c.bf16 %v1181, %v1180
    %v1213 = vpack.c.bf16 %v1183, %v1182
    %v1214 = vpack.c.bf16 %v1185, %v1184
    %v1215 = vpack.c.bf16 %v1187, %v1186
    %v1216 = vpack.c.bf16 %v1189, %v1188
    %v1217 = vpack.c.bf16 %v1191, %v1190
    %v1218 = vpack.c.bf16 %v1193, %v1192
    %v1219 = vpack.c.bf16 %v1195, %v1194
    %v1220 = vpack.c.bf16 %v1197, %v1196
    %v1221 = vpack.c.bf16 %v1199, %v1198
    %v1222 = vpack.c.bf16 %v1201, %v1200
    %v1223 = vpack.c.bf16 %v1203, %v1202
    %v1224 = vpack.c.bf16 %v1205, %v1204
    %v1225 = vpack.c.bf16 %v1207, %v1206
    %v1226 = vpack.c.bf16 %v1209, %v1208
    %v1227 = vpack.c.bf16 %v1211, %v1210
    %v1228 = vld [vmem:[%s8] sm:$0xf]
    %v1229 = vld [vmem:[%s8 + $0x4] sm:$0xf]
    %v1230 = vld [vmem:[%s8 + $0x8] sm:$0xf]
    %v1231 = vld [vmem:[%s8 + $0xc] sm:$0xf]
    %v1232 = vld [vmem:[%s8 + $0x10] sm:$0xf]
    %v1233 = vld [vmem:[%s8 + $0x14] sm:$0xf]
    %v1234 = vld [vmem:[%s8 + $0x18] sm:$0xf]
    %v1235 = vld [vmem:[%s8 + $0x1c] sm:$0xf]
    %v1236 = vld [vmem:[%s8 + $0x20] sm:$0xf]
    %v1237 = vld [vmem:[%s8 + $0x24] sm:$0xf]
    %v1238 = vld [vmem:[%s8 + $0x28] sm:$0xf]
    %v1239 = vld [vmem:[%s8 + $0x2c] sm:$0xf]
    %v1240 = vld [vmem:[%s8 + $0x30] sm:$0xf]
    %v1241 = vld [vmem:[%s8 + $0x34] sm:$0xf]
    %v1242 = vld [vmem:[%s8 + $0x38] sm:$0xf]
    %v1243 = vld [vmem:[%s8 + $0x3c] sm:$0xf]
    %v1244 = vld [vmem:[%s9] sm:$0x1]
    %v1246 = vperm.slane %v1244, 0
    %v1264 = vunpack.c.l.b16 %v1228
    %v1265 = vunpack.c.l.b16 %v1229
    %v1266 = vunpack.c.l.b16 %v1230
    %v1267 = vunpack.c.l.b16 %v1231
    %v1268 = vunpack.c.l.b16 %v1232
    %v1269 = vunpack.c.l.b16 %v1233
    %v1270 = vunpack.c.l.b16 %v1234
    %v1271 = vunpack.c.l.b16 %v1235
    %v1272 = vunpack.c.l.b16 %v1236
    %v1273 = vunpack.c.l.b16 %v1237
    %v1274 = vunpack.c.l.b16 %v1238
    %v1275 = vunpack.c.l.b16 %v1239
    %v1276 = vunpack.c.l.b16 %v1240
    %v1277 = vunpack.c.l.b16 %v1241
    %v1278 = vunpack.c.l.b16 %v1242
    %v1279 = vunpack.c.l.b16 %v1243
    %v1280 = vpack.c.b16 %v1265, %v1264
    %v1281 = vpack.c.b16 %v1267, %v1266
    %v1282 = vpack.c.b16 %v1269, %v1268
    %v1283 = vpack.c.b16 %v1271, %v1270
    %v1284 = vpack.c.b16 %v1273, %v1272
    %v1285 = vpack.c.b16 %v1275, %v1274
    %v1286 = vpack.c.b16 %v1277, %v1276
    %v1287 = vpack.c.b16 %v1279, %v1278
    %1296 = vmatpush.bf16.msra.mxu0 %v1287
    %1297 = vmatpush.bf16.msra.mxu0 %v1286
    %1298 = vmatpush.bf16.msra.mxu0 %v1285
    %1299 = vmatpush.bf16.msra.mxu0 %v1284
    %1300 = vmatpush.bf16.msra.mxu0 %v1283
    %1301 = vmatpush.bf16.msra.mxu0 %v1282
    %1302 = vmatpush.bf16.msra.mxu0 %v1281
    %1303 = vmatpush.bf16.msra.mxu0 %v1280
    %1304 = vmatmul.bf16.gmra.mxu0 %v1212
    %v1305 = vpop.f32.mrf.mxu0
    %v1306 = vadd.f32 %v1246, %v1305
    %v1307 = vpop.f32.mrf.mxu0
    %v1308 = vadd.f32 %v1246, %v1307
    %1309 = vmatmul.bf16.gmra.mxu0 %v1213
    %v1310 = vpop.f32.mrf.mxu0
    %v1311 = vadd.f32 %v1246, %v1310
    %v1312 = vpop.f32.mrf.mxu0
    %v1313 = vadd.f32 %v1246, %v1312
    %1314 = vmatmul.bf16.gmra.mxu0 %v1214
    %v1315 = vpop.f32.mrf.mxu0
    %v1316 = vadd.f32 %v1246, %v1315
    %v1317 = vpop.f32.mrf.mxu0
    %v1318 = vadd.f32 %v1246, %v1317
    %1319 = vmatmul.bf16.gmra.mxu0 %v1215
    %v1320 = vpop.f32.mrf.mxu0
    %v1321 = vadd.f32 %v1246, %v1320
    %v1322 = vpop.f32.mrf.mxu0
    %v1323 = vadd.f32 %v1246, %v1322
    %1324 = vmatmul.bf16.gmra.mxu0 %v1216
    %v1325 = vpop.f32.mrf.mxu0
    %v1326 = vadd.f32 %v1246, %v1325
    %v1327 = vpop.f32.mrf.mxu0
    %v1328 = vadd.f32 %v1246, %v1327
    %1329 = vmatmul.bf16.gmra.mxu0 %v1217
    %v1330 = vpop.f32.mrf.mxu0
    %v1331 = vadd.f32 %v1246, %v1330
    %v1332 = vpop.f32.mrf.mxu0
    %v1333 = vadd.f32 %v1246, %v1332
    %1334 = vmatmul.bf16.gmra.mxu0 %v1218
    %v1335 = vpop.f32.mrf.mxu0
    %v1336 = vadd.f32 %v1246, %v1335
    %v1337 = vpop.f32.mrf.mxu0
    %v1338 = vadd.f32 %v1246, %v1337
    %1339 = vmatmul.bf16.gmra.mxu0 %v1219
    %v1340 = vpop.f32.mrf.mxu0
    %v1341 = vadd.f32 %v1246, %v1340
    %v1342 = vpop.f32.mrf.mxu0
    %v1343 = vadd.f32 %v1246, %v1342
    %1344 = vmatmul.bf16.gmra.mxu0 %v1220
    %v1345 = vpop.f32.mrf.mxu0
    %v1346 = vadd.f32 %v1246, %v1345
    %v1347 = vpop.f32.mrf.mxu0
    %v1348 = vadd.f32 %v1246, %v1347
    %1349 = vmatmul.bf16.gmra.mxu0 %v1221
    %v1350 = vpop.f32.mrf.mxu0
    %v1351 = vadd.f32 %v1246, %v1350
    %v1352 = vpop.f32.mrf.mxu0
    %v1353 = vadd.f32 %v1246, %v1352
    %1354 = vmatmul.bf16.gmra.mxu0 %v1222
    %v1355 = vpop.f32.mrf.mxu0
    %v1356 = vadd.f32 %v1246, %v1355
    %v1357 = vpop.f32.mrf.mxu0
    %v1358 = vadd.f32 %v1246, %v1357
    %1359 = vmatmul.bf16.gmra.mxu0 %v1223
    %v1360 = vpop.f32.mrf.mxu0
    %v1361 = vadd.f32 %v1246, %v1360
    %v1362 = vpop.f32.mrf.mxu0
    %v1363 = vadd.f32 %v1246, %v1362
    %1364 = vmatmul.bf16.gmra.mxu0 %v1224
    %v1365 = vpop.f32.mrf.mxu0
    %v1366 = vadd.f32 %v1246, %v1365
    %v1367 = vpop.f32.mrf.mxu0
    %v1368 = vadd.f32 %v1246, %v1367
    %1369 = vmatmul.bf16.gmra.mxu0 %v1225
    %v1370 = vpop.f32.mrf.mxu0
    %v1371 = vadd.f32 %v1246, %v1370
    %v1372 = vpop.f32.mrf.mxu0
    %v1373 = vadd.f32 %v1246, %v1372
    %1374 = vmatmul.bf16.gmra.mxu0 %v1226
    %v1375 = vpop.f32.mrf.mxu0
    %v1376 = vadd.f32 %v1246, %v1375
    %v1377 = vpop.f32.mrf.mxu0
    %v1378 = vadd.f32 %v1246, %v1377
    %1379 = vmatmul.bf16.gmra.mxu0 %v1227
    %v1380 = vpop.f32.mrf.mxu0
    %v1381 = vadd.f32 %v1246, %v1380
    %v1382 = vpop.f32.mrf.mxu0
    %v1383 = vadd.f32 %v1246, %v1382
    %1384 = vdwg.mxu0
    %v1385 = vld [vmem:[%s3] sm:$0xff]
    %v1386 = vld [vmem:[%s3 + $0x8] sm:$0xff]
    %v1387 = vld [vmem:[%s3 + $0x10] sm:$0xff]
    %v1388 = vld [vmem:[%s3 + $0x18] sm:$0xff]
    %v1389 = vld [vmem:[%s3 + $0x20] sm:$0xff]
    %v1390 = vld [vmem:[%s3 + $0x28] sm:$0xff]
    %v1391 = vld [vmem:[%s3 + $0x30] sm:$0xff]
    %v1392 = vld [vmem:[%s3 + $0x38] sm:$0xff]
    %v1393 = vld [vmem:[%s3 + $0x40] sm:$0xff]
    %v1394 = vld [vmem:[%s3 + $0x48] sm:$0xff]
    %v1395 = vld [vmem:[%s3 + $0x50] sm:$0xff]
    %v1396 = vld [vmem:[%s3 + $0x58] sm:$0xff]
    %v1397 = vld [vmem:[%s3 + $0x60] sm:$0xff]
    %v1398 = vld [vmem:[%s3 + $0x68] sm:$0xff]
    %v1399 = vld [vmem:[%s3 + $0x70] sm:$0xff]
    %v1400 = vld [vmem:[%s3 + $0x78] sm:$0xff]
    %v1401 = vld [vmem:[%s3 + $0x80] sm:$0xff]
    %v1402 = vld [vmem:[%s3 + $0x88] sm:$0xff]
    %v1403 = vld [vmem:[%s3 + $0x90] sm:$0xff]
    %v1404 = vld [vmem:[%s3 + $0x98] sm:$0xff]
    %v1405 = vld [vmem:[%s3 + $0xa0] sm:$0xff]
    %v1406 = vld [vmem:[%s3 + $0xa8] sm:$0xff]
    %v1407 = vld [vmem:[%s3 + $0xb0] sm:$0xff]
    %v1408 = vld [vmem:[%s3 + $0xb8] sm:$0xff]
    %v1409 = vld [vmem:[%s3 + $0xc0] sm:$0xff]
    %v1410 = vld [vmem:[%s3 + $0xc8] sm:$0xff]
    %v1411 = vld [vmem:[%s3 + $0xd0] sm:$0xff]
    %v1412 = vld [vmem:[%s3 + $0xd8] sm:$0xff]
    %v1413 = vld [vmem:[%s3 + $0xe0] sm:$0xff]
    %v1414 = vld [vmem:[%s3 + $0xe8] sm:$0xff]
    %v1415 = vld [vmem:[%s3 + $0xf0] sm:$0xff]
    %v1416 = vld [vmem:[%s3 + $0xf8] sm:$0xff]
    %1418 = vset.pattern.permute.xlu0 0
    %1419 = vperm.xlu0 %1418, %v1385
    %v1420 = vpop.permute.xlu0 %1419
    %1423 = vset.pattern.permute.xlu0 0
    %1424 = vperm.xlu0 %1423, %v1386
    %v1425 = vpop.permute.xlu0 %1424
    %1428 = vset.pattern.permute.xlu0 0
    %1429 = vperm.xlu0 %1428, %v1387
    %v1430 = vpop.permute.xlu0 %1429
    %1433 = vset.pattern.permute.xlu0 0
    %1434 = vperm.xlu0 %1433, %v1388
    %v1435 = vpop.permute.xlu0 %1434
    %1438 = vset.pattern.permute.xlu0 0
    %1439 = vperm.xlu0 %1438, %v1389
    %v1440 = vpop.permute.xlu0 %1439
    %1443 = vset.pattern.permute.xlu0 0
    %1444 = vperm.xlu0 %1443, %v1390
    %v1445 = vpop.permute.xlu0 %1444
    %1448 = vset.pattern.permute.xlu0 0
    %1449 = vperm.xlu0 %1448, %v1391
    %v1450 = vpop.permute.xlu0 %1449
    %1453 = vset.pattern.permute.xlu0 0
    %1454 = vperm.xlu0 %1453, %v1392
    %v1455 = vpop.permute.xlu0 %1454
    %1458 = vset.pattern.permute.xlu0 0
    %1459 = vperm.xlu0 %1458, %v1393
    %v1460 = vpop.permute.xlu0 %1459
    %1463 = vset.pattern.permute.xlu0 0
    %1464 = vperm.xlu0 %1463, %v1394
    %v1465 = vpop.permute.xlu0 %1464
    %1468 = vset.pattern.permute.xlu0 0
    %1469 = vperm.xlu0 %1468, %v1395
    %v1470 = vpop.permute.xlu0 %1469
    %1473 = vset.pattern.permute.xlu0 0
    %1474 = vperm.xlu0 %1473, %v1396
    %v1475 = vpop.permute.xlu0 %1474
    %1478 = vset.pattern.permute.xlu0 0
    %1479 = vperm.xlu0 %1478, %v1397
    %v1480 = vpop.permute.xlu0 %1479
    %1483 = vset.pattern.permute.xlu0 0
    %1484 = vperm.xlu0 %1483, %v1398
    %v1485 = vpop.permute.xlu0 %1484
    %1488 = vset.pattern.permute.xlu0 0
    %1489 = vperm.xlu0 %1488, %v1399
    %v1490 = vpop.permute.xlu0 %1489
    %1493 = vset.pattern.permute.xlu0 0
    %1494 = vperm.xlu0 %1493, %v1400
    %v1495 = vpop.permute.xlu0 %1494
    %1498 = vset.pattern.permute.xlu0 0
    %1499 = vperm.xlu0 %1498, %v1401
    %v1500 = vpop.permute.xlu0 %1499
    %1503 = vset.pattern.permute.xlu0 0
    %1504 = vperm.xlu0 %1503, %v1402
    %v1505 = vpop.permute.xlu0 %1504
    %1508 = vset.pattern.permute.xlu0 0
    %1509 = vperm.xlu0 %1508, %v1403
    %v1510 = vpop.permute.xlu0 %1509
    %1513 = vset.pattern.permute.xlu0 0
    %1514 = vperm.xlu0 %1513, %v1404
    %v1515 = vpop.permute.xlu0 %1514
    %1518 = vset.pattern.permute.xlu0 0
    %1519 = vperm.xlu0 %1518, %v1405
    %v1520 = vpop.permute.xlu0 %1519
    %1523 = vset.pattern.permute.xlu0 0
    %1524 = vperm.xlu0 %1523, %v1406
    %v1525 = vpop.permute.xlu0 %1524
    %1528 = vset.pattern.permute.xlu0 0
    %1529 = vperm.xlu0 %1528, %v1407
    %v1530 = vpop.permute.xlu0 %1529
    %1533 = vset.pattern.permute.xlu0 0
    %1534 = vperm.xlu0 %1533, %v1408
    %v1535 = vpop.permute.xlu0 %1534
    %1538 = vset.pattern.permute.xlu0 0
    %1539 = vperm.xlu0 %1538, %v1409
    %v1540 = vpop.permute.xlu0 %1539
    %1543 = vset.pattern.permute.xlu0 0
    %1544 = vperm.xlu0 %1543, %v1410
    %v1545 = vpop.permute.xlu0 %1544
    %1548 = vset.pattern.permute.xlu0 0
    %1549 = vperm.xlu0 %1548, %v1411
    %v1550 = vpop.permute.xlu0 %1549
    %1553 = vset.pattern.permute.xlu0 0
    %1554 = vperm.xlu0 %1553, %v1412
    %v1555 = vpop.permute.xlu0 %1554
    %1558 = vset.pattern.permute.xlu0 0
    %1559 = vperm.xlu0 %1558, %v1413
    %v1560 = vpop.permute.xlu0 %1559
    %1563 = vset.pattern.permute.xlu0 0
    %1564 = vperm.xlu0 %1563, %v1414
    %v1565 = vpop.permute.xlu0 %1564
    %1568 = vset.pattern.permute.xlu0 0
    %1569 = vperm.xlu0 %1568, %v1415
    %v1570 = vpop.permute.xlu0 %1569
    %1573 = vset.pattern.permute.xlu0 0
    %1574 = vperm.xlu0 %1573, %v1416
    %v1575 = vpop.permute.xlu0 %1574
    %v1577 = vmul.f32 %v1306, %v1420
    %v1578 = vmul.f32 %v1308, %v1425
    %v1579 = vmul.f32 %v1311, %v1430
    %v1580 = vmul.f32 %v1313, %v1435
    %v1581 = vmul.f32 %v1316, %v1440
    %v1582 = vmul.f32 %v1318, %v1445
    %v1583 = vmul.f32 %v1321, %v1450
    %v1584 = vmul.f32 %v1323, %v1455
    %v1585 = vmul.f32 %v1326, %v1460
    %v1586 = vmul.f32 %v1328, %v1465
    %v1587 = vmul.f32 %v1331, %v1470
    %v1588 = vmul.f32 %v1333, %v1475
    %v1589 = vmul.f32 %v1336, %v1480
    %v1590 = vmul.f32 %v1338, %v1485
    %v1591 = vmul.f32 %v1341, %v1490
    %v1592 = vmul.f32 %v1343, %v1495
    %v1593 = vmul.f32 %v1346, %v1500
    %v1594 = vmul.f32 %v1348, %v1505
    %v1595 = vmul.f32 %v1351, %v1510
    %v1596 = vmul.f32 %v1353, %v1515
    %v1597 = vmul.f32 %v1356, %v1520
    %v1598 = vmul.f32 %v1358, %v1525
    %v1599 = vmul.f32 %v1361, %v1530
    %v1600 = vmul.f32 %v1363, %v1535
    %v1601 = vmul.f32 %v1366, %v1540
    %v1602 = vmul.f32 %v1368, %v1545
    %v1603 = vmul.f32 %v1371, %v1550
    %v1604 = vmul.f32 %v1373, %v1555
    %v1605 = vmul.f32 %v1376, %v1560
    %v1606 = vmul.f32 %v1378, %v1565
    %v1607 = vmul.f32 %v1381, %v1570
    %v1608 = vmul.f32 %v1383, %v1575
    %v1609 = vlaneseq
    %v1610 = vand.u32 %v1609, 127
    %v1611 = vld [vmem:[%s0] sm:$0xff]
    %v1612 = vld [vmem:[%s0 + $0x8] sm:$0xff]
    %v1613 = vld [vmem:[%s0 + $0x10] sm:$0xff]
    %v1614 = vld [vmem:[%s0 + $0x18] sm:$0xff]
    %v1615 = vld [vmem:[%s0 + $0x20] sm:$0xff]
    %v1616 = vld [vmem:[%s0 + $0x28] sm:$0xff]
    %v1617 = vld [vmem:[%s0 + $0x30] sm:$0xff]
    %v1618 = vld [vmem:[%s0 + $0x38] sm:$0xff]
    %v1619 = vld [vmem:[%s0 + $0x40] sm:$0xff]
    %v1620 = vld [vmem:[%s0 + $0x48] sm:$0xff]
    %v1621 = vld [vmem:[%s0 + $0x50] sm:$0xff]
    %v1622 = vld [vmem:[%s0 + $0x58] sm:$0xff]
    %v1623 = vld [vmem:[%s0 + $0x60] sm:$0xff]
    %v1624 = vld [vmem:[%s0 + $0x68] sm:$0xff]
    %v1625 = vld [vmem:[%s0 + $0x70] sm:$0xff]
    %v1626 = vld [vmem:[%s0 + $0x78] sm:$0xff]
    %v1627 = vld [vmem:[%s0 + $0x80] sm:$0xff]
    %v1628 = vld [vmem:[%s0 + $0x88] sm:$0xff]
    %v1629 = vld [vmem:[%s0 + $0x90] sm:$0xff]
    %v1630 = vld [vmem:[%s0 + $0x98] sm:$0xff]
    %v1631 = vld [vmem:[%s0 + $0xa0] sm:$0xff]
    %v1632 = vld [vmem:[%s0 + $0xa8] sm:$0xff]
    %v1633 = vld [vmem:[%s0 + $0xb0] sm:$0xff]
    %v1634 = vld [vmem:[%s0 + $0xb8] sm:$0xff]
    %v1635 = vld [vmem:[%s0 + $0xc0] sm:$0xff]
    %v1636 = vld [vmem:[%s0 + $0xc8] sm:$0xff]
    %v1637 = vld [vmem:[%s0 + $0xd0] sm:$0xff]
    %v1638 = vld [vmem:[%s0 + $0xd8] sm:$0xff]
    %v1639 = vld [vmem:[%s0 + $0xe0] sm:$0xff]
    %v1640 = vld [vmem:[%s0 + $0xe8] sm:$0xff]
    %v1641 = vld [vmem:[%s0 + $0xf0] sm:$0xff]
    %v1642 = vld [vmem:[%s0 + $0xf8] sm:$0xff]
    %1643 = vset.pattern.permute.xlu0 0
    %1644 = vperm.xlu0 %1643, %v1611
    %v1645 = vpop.permute.xlu0 %1644
    %1646 = vset.pattern.permute.xlu0 0
    %1647 = vperm.xlu0 %1646, %v1612
    %v1648 = vpop.permute.xlu0 %1647
    %1649 = vset.pattern.permute.xlu0 0
    %1650 = vperm.xlu0 %1649, %v1613
    %v1651 = vpop.permute.xlu0 %1650
    %1652 = vset.pattern.permute.xlu0 0
    %1653 = vperm.xlu0 %1652, %v1614
    %v1654 = vpop.permute.xlu0 %1653
    %1655 = vset.pattern.permute.xlu0 0
    %1656 = vperm.xlu0 %1655, %v1615
    %v1657 = vpop.permute.xlu0 %1656
    %1658 = vset.pattern.permute.xlu0 0
    %1659 = vperm.xlu0 %1658, %v1616
    %v1660 = vpop.permute.xlu0 %1659
    %1661 = vset.pattern.permute.xlu0 0
    %1662 = vperm.xlu0 %1661, %v1617
    %v1663 = vpop.permute.xlu0 %1662
    %1664 = vset.pattern.permute.xlu0 0
    %1665 = vperm.xlu0 %1664, %v1618
    %v1666 = vpop.permute.xlu0 %1665
    %1667 = vset.pattern.permute.xlu0 0
    %1668 = vperm.xlu0 %1667, %v1619
    %v1669 = vpop.permute.xlu0 %1668
    %1670 = vset.pattern.permute.xlu0 0
    %1671 = vperm.xlu0 %1670, %v1620
    %v1672 = vpop.permute.xlu0 %1671
    %1673 = vset.pattern.permute.xlu0 0
    %1674 = vperm.xlu0 %1673, %v1621
    %v1675 = vpop.permute.xlu0 %1674
    %1676 = vset.pattern.permute.xlu0 0
    %1677 = vperm.xlu0 %1676, %v1622
    %v1678 = vpop.permute.xlu0 %1677
    %1679 = vset.pattern.permute.xlu0 0
    %1680 = vperm.xlu0 %1679, %v1623
    %v1681 = vpop.permute.xlu0 %1680
    %1682 = vset.pattern.permute.xlu0 0
    %1683 = vperm.xlu0 %1682, %v1624
    %v1684 = vpop.permute.xlu0 %1683
    %1685 = vset.pattern.permute.xlu0 0
    %1686 = vperm.xlu0 %1685, %v1625
    %v1687 = vpop.permute.xlu0 %1686
    %1688 = vset.pattern.permute.xlu0 0
    %1689 = vperm.xlu0 %1688, %v1626
    %v1690 = vpop.permute.xlu0 %1689
    %1691 = vset.pattern.permute.xlu0 0
    %1692 = vperm.xlu0 %1691, %v1627
    %v1693 = vpop.permute.xlu0 %1692
    %1694 = vset.pattern.permute.xlu0 0
    %1695 = vperm.xlu0 %1694, %v1628
    %v1696 = vpop.permute.xlu0 %1695
    %1697 = vset.pattern.permute.xlu0 0
    %1698 = vperm.xlu0 %1697, %v1629
    %v1699 = vpop.permute.xlu0 %1698
    %1700 = vset.pattern.permute.xlu0 0
    %1701 = vperm.xlu0 %1700, %v1630
    %v1702 = vpop.permute.xlu0 %1701
    %1703 = vset.pattern.permute.xlu0 0
    %1704 = vperm.xlu0 %1703, %v1631
    %v1705 = vpop.permute.xlu0 %1704
    %1706 = vset.pattern.permute.xlu0 0
    %1707 = vperm.xlu0 %1706, %v1632
    %v1708 = vpop.permute.xlu0 %1707
    %1709 = vset.pattern.permute.xlu0 0
    %1710 = vperm.xlu0 %1709, %v1633
    %v1711 = vpop.permute.xlu0 %1710
    %1712 = vset.pattern.permute.xlu0 0
    %1713 = vperm.xlu0 %1712, %v1634
    %v1714 = vpop.permute.xlu0 %1713
    %1715 = vset.pattern.permute.xlu0 0
    %1716 = vperm.xlu0 %1715, %v1635
    %v1717 = vpop.permute.xlu0 %1716
    %1718 = vset.pattern.permute.xlu0 0
    %1719 = vperm.xlu0 %1718, %v1636
    %v1720 = vpop.permute.xlu0 %1719
    %1721 = vset.pattern.permute.xlu0 0
    %1722 = vperm.xlu0 %1721, %v1637
    %v1723 = vpop.permute.xlu0 %1722
    %1724 = vset.pattern.permute.xlu0 0
    %1725 = vperm.xlu0 %1724, %v1638
    %v1726 = vpop.permute.xlu0 %1725
    %1727 = vset.pattern.permute.xlu0 0
    %1728 = vperm.xlu0 %1727, %v1639
    %v1729 = vpop.permute.xlu0 %1728
    %1730 = vset.pattern.permute.xlu0 0
    %1731 = vperm.xlu0 %1730, %v1640
    %v1732 = vpop.permute.xlu0 %1731
    %1733 = vset.pattern.permute.xlu0 0
    %1734 = vperm.xlu0 %1733, %v1641
    %v1735 = vpop.permute.xlu0 %1734
    %1736 = vset.pattern.permute.xlu0 0
    %1737 = vperm.xlu0 %1736, %v1642
    %v1738 = vpop.permute.xlu0 %1737
    %vm1739 = vcmp.eq.s32.totalorder %v1610, %v1645
    %vm1740 = vcmp.eq.s32.totalorder %v1610, %v1648
    %vm1741 = vcmp.eq.s32.totalorder %v1610, %v1651
    %vm1742 = vcmp.eq.s32.totalorder %v1610, %v1654
    %vm1743 = vcmp.eq.s32.totalorder %v1610, %v1657
    %vm1744 = vcmp.eq.s32.totalorder %v1610, %v1660
    %vm1745 = vcmp.eq.s32.totalorder %v1610, %v1663
    %vm1746 = vcmp.eq.s32.totalorder %v1610, %v1666
    %vm1747 = vcmp.eq.s32.totalorder %v1610, %v1669
    %vm1748 = vcmp.eq.s32.totalorder %v1610, %v1672
    %vm1749 = vcmp.eq.s32.totalorder %v1610, %v1675
    %vm1750 = vcmp.eq.s32.totalorder %v1610, %v1678
    %vm1751 = vcmp.eq.s32.totalorder %v1610, %v1681
    %vm1752 = vcmp.eq.s32.totalorder %v1610, %v1684
    %vm1753 = vcmp.eq.s32.totalorder %v1610, %v1687
    %vm1754 = vcmp.eq.s32.totalorder %v1610, %v1690
    %vm1755 = vcmp.eq.s32.totalorder %v1610, %v1693
    %vm1756 = vcmp.eq.s32.totalorder %v1610, %v1696
    %vm1757 = vcmp.eq.s32.totalorder %v1610, %v1699
    %vm1758 = vcmp.eq.s32.totalorder %v1610, %v1702
    %vm1759 = vcmp.eq.s32.totalorder %v1610, %v1705
    %vm1760 = vcmp.eq.s32.totalorder %v1610, %v1708
    %vm1761 = vcmp.eq.s32.totalorder %v1610, %v1711
    %vm1762 = vcmp.eq.s32.totalorder %v1610, %v1714
    %vm1763 = vcmp.eq.s32.totalorder %v1610, %v1717
    %vm1764 = vcmp.eq.s32.totalorder %v1610, %v1720
    %vm1765 = vcmp.eq.s32.totalorder %v1610, %v1723
    %vm1766 = vcmp.eq.s32.totalorder %v1610, %v1726
    %vm1767 = vcmp.eq.s32.totalorder %v1610, %v1729
    %vm1768 = vcmp.eq.s32.totalorder %v1610, %v1732
    %vm1769 = vcmp.eq.s32.totalorder %v1610, %v1735
    %vm1770 = vcmp.eq.s32.totalorder %v1610, %v1738
    %v1771 = vsel %vm1739, 1.0, 0.0
    %v1772 = vsel %vm1740, 1.0, 0.0
    %v1773 = vsel %vm1741, 1.0, 0.0
    %v1774 = vsel %vm1742, 1.0, 0.0
    %v1775 = vsel %vm1743, 1.0, 0.0
    %v1776 = vsel %vm1744, 1.0, 0.0
    %v1777 = vsel %vm1745, 1.0, 0.0
    %v1778 = vsel %vm1746, 1.0, 0.0
    %v1779 = vsel %vm1747, 1.0, 0.0
    %v1780 = vsel %vm1748, 1.0, 0.0
    %v1781 = vsel %vm1749, 1.0, 0.0
    %v1782 = vsel %vm1750, 1.0, 0.0
    %v1783 = vsel %vm1751, 1.0, 0.0
    %v1784 = vsel %vm1752, 1.0, 0.0
    %v1785 = vsel %vm1753, 1.0, 0.0
    %v1786 = vsel %vm1754, 1.0, 0.0
    %v1787 = vsel %vm1755, 1.0, 0.0
    %v1788 = vsel %vm1756, 1.0, 0.0
    %v1789 = vsel %vm1757, 1.0, 0.0
    %v1790 = vsel %vm1758, 1.0, 0.0
    %v1791 = vsel %vm1759, 1.0, 0.0
    %v1792 = vsel %vm1760, 1.0, 0.0
    %v1793 = vsel %vm1761, 1.0, 0.0
    %v1794 = vsel %vm1762, 1.0, 0.0
    %v1795 = vsel %vm1763, 1.0, 0.0
    %v1796 = vsel %vm1764, 1.0, 0.0
    %v1797 = vsel %vm1765, 1.0, 0.0
    %v1798 = vsel %vm1766, 1.0, 0.0
    %v1799 = vsel %vm1767, 1.0, 0.0
    %v1800 = vsel %vm1768, 1.0, 0.0
    %v1801 = vsel %vm1769, 1.0, 0.0
    %v1802 = vsel %vm1770, 1.0, 0.0
    %v1803 = vpack.c.bf16 %v1772, %v1771
    %v1804 = vpack.c.bf16 %v1774, %v1773
    %v1805 = vpack.c.bf16 %v1776, %v1775
    %v1806 = vpack.c.bf16 %v1778, %v1777
    %v1807 = vpack.c.bf16 %v1780, %v1779
    %v1808 = vpack.c.bf16 %v1782, %v1781
    %v1809 = vpack.c.bf16 %v1784, %v1783
    %v1810 = vpack.c.bf16 %v1786, %v1785
    %v1811 = vpack.c.bf16 %v1788, %v1787
    %v1812 = vpack.c.bf16 %v1790, %v1789
    %v1813 = vpack.c.bf16 %v1792, %v1791
    %v1814 = vpack.c.bf16 %v1794, %v1793
    %v1815 = vpack.c.bf16 %v1796, %v1795
    %v1816 = vpack.c.bf16 %v1798, %v1797
    %v1817 = vpack.c.bf16 %v1800, %v1799
    %v1818 = vpack.c.bf16 %v1802, %v1801
    %v1819 = vld [vmem:[#allocation2] sm:$0xf]
    %v1820 = vld [vmem:[#allocation2 + $0x4] sm:$0xf]
    %v1821 = vld [vmem:[#allocation2 + $0x8] sm:$0xf]
    %v1822 = vld [vmem:[#allocation2 + $0xc] sm:$0xf]
    %v1823 = vld [vmem:[#allocation2 + $0x10] sm:$0xf]
    %v1824 = vld [vmem:[#allocation2 + $0x14] sm:$0xf]
    %v1825 = vld [vmem:[#allocation2 + $0x18] sm:$0xf]
    %v1826 = vld [vmem:[#allocation2 + $0x1c] sm:$0xf]
    %v1827 = vld [vmem:[#allocation2 + $0x20] sm:$0xf]
    %v1828 = vld [vmem:[#allocation2 + $0x24] sm:$0xf]
    %v1829 = vld [vmem:[#allocation2 + $0x28] sm:$0xf]
    %v1830 = vld [vmem:[#allocation2 + $0x2c] sm:$0xf]
    %v1831 = vld [vmem:[#allocation2 + $0x30] sm:$0xf]
    %v1832 = vld [vmem:[#allocation2 + $0x34] sm:$0xf]
    %v1833 = vld [vmem:[#allocation2 + $0x38] sm:$0xf]
    %v1834 = vld [vmem:[#allocation2 + $0x3c] sm:$0xf]
    %v1835 = vld [vmem:[#allocation3] sm:$0xf]
    %v1836 = vld [vmem:[#allocation3 + $0x4] sm:$0xf]
    %v1837 = vld [vmem:[#allocation3 + $0x8] sm:$0xf]
    %v1838 = vld [vmem:[#allocation3 + $0xc] sm:$0xf]
    %v1839 = vld [vmem:[#allocation3 + $0x10] sm:$0xf]
    %v1840 = vld [vmem:[#allocation3 + $0x14] sm:$0xf]
    %v1841 = vld [vmem:[#allocation3 + $0x18] sm:$0xf]
    %v1842 = vld [vmem:[#allocation3 + $0x1c] sm:$0xf]
    %v1843 = vld [vmem:[#allocation3 + $0x20] sm:$0xf]
    %v1844 = vld [vmem:[#allocation3 + $0x24] sm:$0xf]
    %v1845 = vld [vmem:[#allocation3 + $0x28] sm:$0xf]
    %v1846 = vld [vmem:[#allocation3 + $0x2c] sm:$0xf]
    %v1847 = vld [vmem:[#allocation3 + $0x30] sm:$0xf]
    %v1848 = vld [vmem:[#allocation3 + $0x34] sm:$0xf]
    %v1849 = vld [vmem:[#allocation3 + $0x38] sm:$0xf]
    %v1850 = vld [vmem:[#allocation3 + $0x3c] sm:$0xf]
    %v1867 = vunpack.c.l.b16 %v1835
    %v1868 = vunpack.c.l.b16 %v1836
    %v1869 = vunpack.c.l.b16 %v1837
    %v1870 = vunpack.c.l.b16 %v1838
    %v1871 = vunpack.c.l.b16 %v1839
    %v1872 = vunpack.c.l.b16 %v1840
    %v1873 = vunpack.c.l.b16 %v1841
    %v1874 = vunpack.c.l.b16 %v1842
    %v1875 = vunpack.c.l.b16 %v1843
    %v1876 = vunpack.c.l.b16 %v1844
    %v1877 = vunpack.c.l.b16 %v1845
    %v1878 = vunpack.c.l.b16 %v1846
    %v1879 = vunpack.c.l.b16 %v1847
    %v1880 = vunpack.c.l.b16 %v1848
    %v1881 = vunpack.c.l.b16 %v1849
    %v1882 = vunpack.c.l.b16 %v1850
    %v1883 = vpack.c.b16 %v1868, %v1867
    %v1884 = vpack.c.b16 %v1870, %v1869
    %v1885 = vpack.c.b16 %v1872, %v1871
    %v1886 = vpack.c.b16 %v1874, %v1873
    %v1887 = vpack.c.b16 %v1876, %v1875
    %v1888 = vpack.c.b16 %v1878, %v1877
    %v1889 = vpack.c.b16 %v1880, %v1879
    %v1890 = vpack.c.b16 %v1882, %v1881
    %1899 = vmatpush.bf16.msra.mxu0 %v1890
    %1900 = vmatpush.bf16.msra.mxu0 %v1889
    %1901 = vmatpush.bf16.msra.mxu0 %v1888
    %1902 = vmatpush.bf16.msra.mxu0 %v1887
    %1903 = vmatpush.bf16.msra.mxu0 %v1886
    %1904 = vmatpush.bf16.msra.mxu0 %v1885
    %1905 = vmatpush.bf16.msra.mxu0 %v1884
    %1906 = vmatpush.bf16.msra.mxu0 %v1883
    %1907 = vmatmul.bf16.gmra.mxu0 %v1803
    %v1908 = vpop.f32.mrf.mxu0
    %v1909 = vadd.f32 0.0, %v1908
    %v1910 = vpop.f32.mrf.mxu0
    %v1911 = vadd.f32 0.0, %v1910
    %1912 = vmatmul.bf16.gmra.mxu0 %v1804
    %v1913 = vpop.f32.mrf.mxu0
    %v1914 = vadd.f32 0.0, %v1913
    %v1915 = vpop.f32.mrf.mxu0
    %v1916 = vadd.f32 0.0, %v1915
    %1917 = vmatmul.bf16.gmra.mxu0 %v1805
    %v1918 = vpop.f32.mrf.mxu0
    %v1919 = vadd.f32 0.0, %v1918
    %v1920 = vpop.f32.mrf.mxu0
    %v1921 = vadd.f32 0.0, %v1920
    %1922 = vmatmul.bf16.gmra.mxu0 %v1806
    %v1923 = vpop.f32.mrf.mxu0
    %v1924 = vadd.f32 0.0, %v1923
    %v1925 = vpop.f32.mrf.mxu0
    %v1926 = vadd.f32 0.0, %v1925
    %1927 = vmatmul.bf16.gmra.mxu0 %v1807
    %v1928 = vpop.f32.mrf.mxu0
    %v1929 = vadd.f32 0.0, %v1928
    %v1930 = vpop.f32.mrf.mxu0
    %v1931 = vadd.f32 0.0, %v1930
    %1932 = vmatmul.bf16.gmra.mxu0 %v1808
    %v1933 = vpop.f32.mrf.mxu0
    %v1934 = vadd.f32 0.0, %v1933
    %v1935 = vpop.f32.mrf.mxu0
    %v1936 = vadd.f32 0.0, %v1935
    %1937 = vmatmul.bf16.gmra.mxu0 %v1809
    %v1938 = vpop.f32.mrf.mxu0
    %v1939 = vadd.f32 0.0, %v1938
    %v1940 = vpop.f32.mrf.mxu0
    %v1941 = vadd.f32 0.0, %v1940
    %1942 = vmatmul.bf16.gmra.mxu0 %v1810
    %v1943 = vpop.f32.mrf.mxu0
    %v1944 = vadd.f32 0.0, %v1943
    %v1945 = vpop.f32.mrf.mxu0
    %v1946 = vadd.f32 0.0, %v1945
    %1947 = vmatmul.bf16.gmra.mxu0 %v1811
    %v1948 = vpop.f32.mrf.mxu0
    %v1949 = vadd.f32 0.0, %v1948
    %v1950 = vpop.f32.mrf.mxu0
    %v1951 = vadd.f32 0.0, %v1950
    %1952 = vmatmul.bf16.gmra.mxu0 %v1812
    %v1953 = vpop.f32.mrf.mxu0
    %v1954 = vadd.f32 0.0, %v1953
    %v1955 = vpop.f32.mrf.mxu0
    %v1956 = vadd.f32 0.0, %v1955
    %1957 = vmatmul.bf16.gmra.mxu0 %v1813
    %v1958 = vpop.f32.mrf.mxu0
    %v1959 = vadd.f32 0.0, %v1958
    %v1960 = vpop.f32.mrf.mxu0
    %v1961 = vadd.f32 0.0, %v1960
    %1962 = vmatmul.bf16.gmra.mxu0 %v1814
    %v1963 = vpop.f32.mrf.mxu0
    %v1964 = vadd.f32 0.0, %v1963
    %v1965 = vpop.f32.mrf.mxu0
    %v1966 = vadd.f32 0.0, %v1965
    %1967 = vmatmul.bf16.gmra.mxu0 %v1815
    %v1968 = vpop.f32.mrf.mxu0
    %v1969 = vadd.f32 0.0, %v1968
    %v1970 = vpop.f32.mrf.mxu0
    %v1971 = vadd.f32 0.0, %v1970
    %1972 = vmatmul.bf16.gmra.mxu0 %v1816
    %v1973 = vpop.f32.mrf.mxu0
    %v1974 = vadd.f32 0.0, %v1973
    %v1975 = vpop.f32.mrf.mxu0
    %v1976 = vadd.f32 0.0, %v1975
    %1977 = vmatmul.bf16.gmra.mxu0 %v1817
    %v1978 = vpop.f32.mrf.mxu0
    %v1979 = vadd.f32 0.0, %v1978
    %v1980 = vpop.f32.mrf.mxu0
    %v1981 = vadd.f32 0.0, %v1980
    %1982 = vmatmul.bf16.gmra.mxu0 %v1818
    %v1983 = vpop.f32.mrf.mxu0
    %v1984 = vadd.f32 0.0, %v1983
    %v1985 = vpop.f32.mrf.mxu0
    %v1986 = vadd.f32 0.0, %v1985
    %1987 = vdwg.mxu0
    %v2004 = vunpack.c.l.b16 %v1819
    %v2005 = vunpack.c.l.b16 %v1820
    %v2006 = vunpack.c.l.b16 %v1821
    %v2007 = vunpack.c.l.b16 %v1822
    %v2008 = vunpack.c.l.b16 %v1823
    %v2009 = vunpack.c.l.b16 %v1824
    %v2010 = vunpack.c.l.b16 %v1825
    %v2011 = vunpack.c.l.b16 %v1826
    %v2012 = vunpack.c.l.b16 %v1827
    %v2013 = vunpack.c.l.b16 %v1828
    %v2014 = vunpack.c.l.b16 %v1829
    %v2015 = vunpack.c.l.b16 %v1830
    %v2016 = vunpack.c.l.b16 %v1831
    %v2017 = vunpack.c.l.b16 %v1832
    %v2018 = vunpack.c.l.b16 %v1833
    %v2019 = vunpack.c.l.b16 %v1834
    %v2020 = vpack.c.b16 %v2005, %v2004
    %v2021 = vpack.c.b16 %v2007, %v2006
    %v2022 = vpack.c.b16 %v2009, %v2008
    %v2023 = vpack.c.b16 %v2011, %v2010
    %v2024 = vpack.c.b16 %v2013, %v2012
    %v2025 = vpack.c.b16 %v2015, %v2014
    %v2026 = vpack.c.b16 %v2017, %v2016
    %v2027 = vpack.c.b16 %v2019, %v2018
    %2036 = vmatpush.bf16.msra.mxu0 %v2027
    %2037 = vmatpush.bf16.msra.mxu0 %v2026
    %2038 = vmatpush.bf16.msra.mxu0 %v2025
    %2039 = vmatpush.bf16.msra.mxu0 %v2024
    %2040 = vmatpush.bf16.msra.mxu0 %v2023
    %2041 = vmatpush.bf16.msra.mxu0 %v2022
    %2042 = vmatpush.bf16.msra.mxu0 %v2021
    %2043 = vmatpush.bf16.msra.mxu0 %v2020
    %2044 = vmatmul.bf16.gmra.mxu0 %v1803
    %v2045 = vpop.f32.mrf.mxu0
    %v2046 = vadd.f32 %v1909, %v2045
    %v2047 = vpop.f32.mrf.mxu0
    %v2048 = vadd.f32 %v1911, %v2047
    %2049 = vmatmul.bf16.gmra.mxu0 %v1804
    %v2050 = vpop.f32.mrf.mxu0
    %v2051 = vadd.f32 %v1914, %v2050
    %v2052 = vpop.f32.mrf.mxu0
    %v2053 = vadd.f32 %v1916, %v2052
    %2054 = vmatmul.bf16.gmra.mxu0 %v1805
    %v2055 = vpop.f32.mrf.mxu0
    %v2056 = vadd.f32 %v1919, %v2055
    %v2057 = vpop.f32.mrf.mxu0
    %v2058 = vadd.f32 %v1921, %v2057
    %2059 = vmatmul.bf16.gmra.mxu0 %v1806
    %v2060 = vpop.f32.mrf.mxu0
    %v2061 = vadd.f32 %v1924, %v2060
    %v2062 = vpop.f32.mrf.mxu0
    %v2063 = vadd.f32 %v1926, %v2062
    %2064 = vmatmul.bf16.gmra.mxu0 %v1807
    %v2065 = vpop.f32.mrf.mxu0
    %v2066 = vadd.f32 %v1929, %v2065
    %v2067 = vpop.f32.mrf.mxu0
    %v2068 = vadd.f32 %v1931, %v2067
    %2069 = vmatmul.bf16.gmra.mxu0 %v1808
    %v2070 = vpop.f32.mrf.mxu0
    %v2071 = vadd.f32 %v1934, %v2070
    %v2072 = vpop.f32.mrf.mxu0
    %v2073 = vadd.f32 %v1936, %v2072
    %2074 = vmatmul.bf16.gmra.mxu0 %v1809
    %v2075 = vpop.f32.mrf.mxu0
    %v2076 = vadd.f32 %v1939, %v2075
    %v2077 = vpop.f32.mrf.mxu0
    %v2078 = vadd.f32 %v1941, %v2077
    %2079 = vmatmul.bf16.gmra.mxu0 %v1810
    %v2080 = vpop.f32.mrf.mxu0
    %v2081 = vadd.f32 %v1944, %v2080
    %v2082 = vpop.f32.mrf.mxu0
    %v2083 = vadd.f32 %v1946, %v2082
    %2084 = vmatmul.bf16.gmra.mxu0 %v1811
    %v2085 = vpop.f32.mrf.mxu0
    %v2086 = vadd.f32 %v1949, %v2085
    %v2087 = vpop.f32.mrf.mxu0
    %v2088 = vadd.f32 %v1951, %v2087
    %2089 = vmatmul.bf16.gmra.mxu0 %v1812
    %v2090 = vpop.f32.mrf.mxu0
    %v2091 = vadd.f32 %v1954, %v2090
    %v2092 = vpop.f32.mrf.mxu0
    %v2093 = vadd.f32 %v1956, %v2092
    %2094 = vmatmul.bf16.gmra.mxu0 %v1813
    %v2095 = vpop.f32.mrf.mxu0
    %v2096 = vadd.f32 %v1959, %v2095
    %v2097 = vpop.f32.mrf.mxu0
    %v2098 = vadd.f32 %v1961, %v2097
    %2099 = vmatmul.bf16.gmra.mxu0 %v1814
    %v2100 = vpop.f32.mrf.mxu0
    %v2101 = vadd.f32 %v1964, %v2100
    %v2102 = vpop.f32.mrf.mxu0
    %v2103 = vadd.f32 %v1966, %v2102
    %2104 = vmatmul.bf16.gmra.mxu0 %v1815
    %v2105 = vpop.f32.mrf.mxu0
    %v2106 = vadd.f32 %v1969, %v2105
    %v2107 = vpop.f32.mrf.mxu0
    %v2108 = vadd.f32 %v1971, %v2107
    %2109 = vmatmul.bf16.gmra.mxu0 %v1816
    %v2110 = vpop.f32.mrf.mxu0
    %v2111 = vadd.f32 %v1974, %v2110
    %v2112 = vpop.f32.mrf.mxu0
    %v2113 = vadd.f32 %v1976, %v2112
    %2114 = vmatmul.bf16.gmra.mxu0 %v1817
    %v2115 = vpop.f32.mrf.mxu0
    %v2116 = vadd.f32 %v1979, %v2115
    %v2117 = vpop.f32.mrf.mxu0
    %v2118 = vadd.f32 %v1981, %v2117
    %2119 = vmatmul.bf16.gmra.mxu0 %v1818
    %v2120 = vpop.f32.mrf.mxu0
    %v2121 = vadd.f32 %v1984, %v2120
    %v2122 = vpop.f32.mrf.mxu0
    %v2123 = vadd.f32 %v1986, %v2122
    %2124 = vdwg.mxu0
    %v2125 = vmul.f32 %v2046, %v1577
    %v2126 = vmul.f32 %v2048, %v1578
    %v2127 = vmul.f32 %v2051, %v1579
    %v2128 = vmul.f32 %v2053, %v1580
    %v2129 = vmul.f32 %v2056, %v1581
    %v2130 = vmul.f32 %v2058, %v1582
    %v2131 = vmul.f32 %v2061, %v1583
    %v2132 = vmul.f32 %v2063, %v1584
    %v2133 = vmul.f32 %v2066, %v1585
    %v2134 = vmul.f32 %v2068, %v1586
    %v2135 = vmul.f32 %v2071, %v1587
    %v2136 = vmul.f32 %v2073, %v1588
    %v2137 = vmul.f32 %v2076, %v1589
    %v2138 = vmul.f32 %v2078, %v1590
    %v2139 = vmul.f32 %v2081, %v1591
    %v2140 = vmul.f32 %v2083, %v1592
    %v2141 = vmul.f32 %v2086, %v1593
    %v2142 = vmul.f32 %v2088, %v1594
    %v2143 = vmul.f32 %v2091, %v1595
    %v2144 = vmul.f32 %v2093, %v1596
    %v2145 = vmul.f32 %v2096, %v1597
    %v2146 = vmul.f32 %v2098, %v1598
    %v2147 = vmul.f32 %v2101, %v1599
    %v2148 = vmul.f32 %v2103, %v1600
    %v2149 = vmul.f32 %v2106, %v1601
    %v2150 = vmul.f32 %v2108, %v1602
    %v2151 = vmul.f32 %v2111, %v1603
    %v2152 = vmul.f32 %v2113, %v1604
    %v2153 = vmul.f32 %v2116, %v1605
    %v2154 = vmul.f32 %v2118, %v1606
    %v2155 = vmul.f32 %v2121, %v1607
    %v2156 = vmul.f32 %v2123, %v1608
    %v2157 = vlaneseq
    %v2158 = vshrl.u32 %v2157, 7
    %v2159 = vadd.s32 %v2158, 8
    %v2160 = vadd.s32 %v2158, 16
    %v2161 = vadd.s32 %v2158, 24
    %v2162 = vadd.s32 %v2158, 32
    %v2163 = vadd.s32 %v2158, 40
    %v2164 = vadd.s32 %v2158, 48
    %v2165 = vadd.s32 %v2158, 56
    %v2166 = vadd.s32 %v2158, 64
    %v2167 = vadd.s32 %v2158, 72
    %v2168 = vadd.s32 %v2158, 80
    %v2169 = vadd.s32 %v2158, 88
    %v2170 = vadd.s32 %v2158, 96
    %v2171 = vadd.s32 %v2158, 104
    %v2172 = vadd.s32 %v2158, 112
    %v2173 = vadd.s32 %v2158, 120
    %v2174 = vld [vmem:[%s1] sm:$0x3]
    %v2175 = vperm.slane %v2174, 0
    %v2176 = vperm.slane %v2174, 1
    %vm2177 = vcmp.eq.s32.totalorder %v2158, %v2175
    %vm2178 = vcmp.eq.s32.totalorder %v2158, %v2176
    %vm2179 = vcmp.eq.s32.totalorder %v2159, %v2175
    %vm2180 = vcmp.eq.s32.totalorder %v2159, %v2176
    %vm2181 = vcmp.eq.s32.totalorder %v2160, %v2175
    %vm2182 = vcmp.eq.s32.totalorder %v2160, %v2176
    %vm2183 = vcmp.eq.s32.totalorder %v2161, %v2175
    %vm2184 = vcmp.eq.s32.totalorder %v2161, %v2176
    %vm2185 = vcmp.eq.s32.totalorder %v2162, %v2175
    %vm2186 = vcmp.eq.s32.totalorder %v2162, %v2176
    %vm2187 = vcmp.eq.s32.totalorder %v2163, %v2175
    %vm2188 = vcmp.eq.s32.totalorder %v2163, %v2176
    %vm2189 = vcmp.eq.s32.totalorder %v2164, %v2175
    %vm2190 = vcmp.eq.s32.totalorder %v2164, %v2176
    %vm2191 = vcmp.eq.s32.totalorder %v2165, %v2175
    %vm2192 = vcmp.eq.s32.totalorder %v2165, %v2176
    %vm2193 = vcmp.eq.s32.totalorder %v2166, %v2175
    %vm2194 = vcmp.eq.s32.totalorder %v2166, %v2176
    %vm2195 = vcmp.eq.s32.totalorder %v2167, %v2175
    %vm2196 = vcmp.eq.s32.totalorder %v2167, %v2176
    %vm2197 = vcmp.eq.s32.totalorder %v2168, %v2175
    %vm2198 = vcmp.eq.s32.totalorder %v2168, %v2176
    %vm2199 = vcmp.eq.s32.totalorder %v2169, %v2175
    %vm2200 = vcmp.eq.s32.totalorder %v2169, %v2176
    %vm2201 = vcmp.eq.s32.totalorder %v2170, %v2175
    %vm2202 = vcmp.eq.s32.totalorder %v2170, %v2176
    %vm2203 = vcmp.eq.s32.totalorder %v2171, %v2175
    %vm2204 = vcmp.eq.s32.totalorder %v2171, %v2176
    %vm2205 = vcmp.eq.s32.totalorder %v2172, %v2175
    %vm2206 = vcmp.eq.s32.totalorder %v2172, %v2176
    %vm2207 = vcmp.eq.s32.totalorder %v2173, %v2175
    %vm2208 = vcmp.eq.s32.totalorder %v2173, %v2176
    %v2209 = vsel %vm2177, 1.0, 0.0
    %v2210 = vsel %vm2178, 1.0, 0.0
    %v2211 = vsel %vm2179, 1.0, 0.0
    %v2212 = vsel %vm2180, 1.0, 0.0
    %v2213 = vsel %vm2181, 1.0, 0.0
    %v2214 = vsel %vm2182, 1.0, 0.0
    %v2215 = vsel %vm2183, 1.0, 0.0
    %v2216 = vsel %vm2184, 1.0, 0.0
    %v2217 = vsel %vm2185, 1.0, 0.0
    %v2218 = vsel %vm2186, 1.0, 0.0
    %v2219 = vsel %vm2187, 1.0, 0.0
    %v2220 = vsel %vm2188, 1.0, 0.0
    %v2221 = vsel %vm2189, 1.0, 0.0
    %v2222 = vsel %vm2190, 1.0, 0.0
    %v2223 = vsel %vm2191, 1.0, 0.0
    %v2224 = vsel %vm2192, 1.0, 0.0
    %v2225 = vsel %vm2193, 1.0, 0.0
    %v2226 = vsel %vm2194, 1.0, 0.0
    %v2227 = vsel %vm2195, 1.0, 0.0
    %v2228 = vsel %vm2196, 1.0, 0.0
    %v2229 = vsel %vm2197, 1.0, 0.0
    %v2230 = vsel %vm2198, 1.0, 0.0
    %v2231 = vsel %vm2199, 1.0, 0.0
    %v2232 = vsel %vm2200, 1.0, 0.0
    %v2233 = vsel %vm2201, 1.0, 0.0
    %v2234 = vsel %vm2202, 1.0, 0.0
    %v2235 = vsel %vm2203, 1.0, 0.0
    %v2236 = vsel %vm2204, 1.0, 0.0
    %v2237 = vsel %vm2205, 1.0, 0.0
    %v2238 = vsel %vm2206, 1.0, 0.0
    %v2239 = vsel %vm2207, 1.0, 0.0
    %v2240 = vsel %vm2208, 1.0, 0.0
    %v2241 = vpack.c.bf16 %v2211, %v2209
    %v2242 = vpack.c.bf16 %v2212, %v2210
    %v2243 = vpack.c.bf16 %v2215, %v2213
    %v2244 = vpack.c.bf16 %v2216, %v2214
    %v2245 = vpack.c.bf16 %v2219, %v2217
    %v2246 = vpack.c.bf16 %v2220, %v2218
    %v2247 = vpack.c.bf16 %v2223, %v2221
    %v2248 = vpack.c.bf16 %v2224, %v2222
    %v2249 = vpack.c.bf16 %v2227, %v2225
    %v2250 = vpack.c.bf16 %v2228, %v2226
    %v2251 = vpack.c.bf16 %v2231, %v2229
    %v2252 = vpack.c.bf16 %v2232, %v2230
    %v2253 = vpack.c.bf16 %v2235, %v2233
    %v2254 = vpack.c.bf16 %v2236, %v2234
    %v2255 = vpack.c.bf16 %v2239, %v2237
    %v2256 = vpack.c.bf16 %v2240, %v2238
    %v2257 = vpack.c.bf16 %v2125, %v2125
    %v2258 = vpack.c.bf16 %v2126, %v2126
    %v2259 = vpack.c.bf16 %v2127, %v2127
    %v2260 = vpack.c.bf16 %v2128, %v2128
    %v2261 = vpack.c.bf16 %v2129, %v2129
    %v2262 = vpack.c.bf16 %v2130, %v2130
    %v2263 = vpack.c.bf16 %v2131, %v2131
    %v2264 = vpack.c.bf16 %v2132, %v2132
    %v2265 = vpack.c.bf16 %v2133, %v2133
    %v2266 = vpack.c.bf16 %v2134, %v2134
    %v2267 = vpack.c.bf16 %v2135, %v2135
    %v2268 = vpack.c.bf16 %v2136, %v2136
    %v2269 = vpack.c.bf16 %v2137, %v2137
    %v2270 = vpack.c.bf16 %v2138, %v2138
    %v2271 = vpack.c.bf16 %v2139, %v2139
    %v2272 = vpack.c.bf16 %v2140, %v2140
    %v2273 = vpack.c.bf16 %v2141, %v2141
    %v2274 = vpack.c.bf16 %v2142, %v2142
    %v2275 = vpack.c.bf16 %v2143, %v2143
    %v2276 = vpack.c.bf16 %v2144, %v2144
    %v2277 = vpack.c.bf16 %v2145, %v2145
    %v2278 = vpack.c.bf16 %v2146, %v2146
    %v2279 = vpack.c.bf16 %v2147, %v2147
    %v2280 = vpack.c.bf16 %v2148, %v2148
    %v2281 = vpack.c.bf16 %v2149, %v2149
    %v2282 = vpack.c.bf16 %v2150, %v2150
    %v2283 = vpack.c.bf16 %v2151, %v2151
    %v2284 = vpack.c.bf16 %v2152, %v2152
    %v2285 = vpack.c.bf16 %v2153, %v2153
    %v2286 = vpack.c.bf16 %v2154, %v2154
    %v2287 = vpack.c.bf16 %v2155, %v2155
    %v2288 = vpack.c.bf16 %v2156, %v2156
    %v2289 = vunpack.c.l.bf16 %v2257
    %v2290 = vunpack.c.l.bf16 %v2258
    %v2291 = vunpack.c.l.bf16 %v2259
    %v2292 = vunpack.c.l.bf16 %v2260
    %v2293 = vunpack.c.l.bf16 %v2261
    %v2294 = vunpack.c.l.bf16 %v2262
    %v2295 = vunpack.c.l.bf16 %v2263
    %v2296 = vunpack.c.l.bf16 %v2264
    %v2297 = vunpack.c.l.bf16 %v2265
    %v2298 = vunpack.c.l.bf16 %v2266
    %v2299 = vunpack.c.l.bf16 %v2267
    %v2300 = vunpack.c.l.bf16 %v2268
    %v2301 = vunpack.c.l.bf16 %v2269
    %v2302 = vunpack.c.l.bf16 %v2270
    %v2303 = vunpack.c.l.bf16 %v2271
    %v2304 = vunpack.c.l.bf16 %v2272
    %v2305 = vunpack.c.l.bf16 %v2273
    %v2306 = vunpack.c.l.bf16 %v2274
    %v2307 = vunpack.c.l.bf16 %v2275
    %v2308 = vunpack.c.l.bf16 %v2276
    %v2309 = vunpack.c.l.bf16 %v2277
    %v2310 = vunpack.c.l.bf16 %v2278
    %v2311 = vunpack.c.l.bf16 %v2279
    %v2312 = vunpack.c.l.bf16 %v2280
    %v2313 = vunpack.c.l.bf16 %v2281
    %v2314 = vunpack.c.l.bf16 %v2282
    %v2315 = vunpack.c.l.bf16 %v2283
    %v2316 = vunpack.c.l.bf16 %v2284
    %v2317 = vunpack.c.l.bf16 %v2285
    %v2318 = vunpack.c.l.bf16 %v2286
    %v2319 = vunpack.c.l.bf16 %v2287
    %v2320 = vunpack.c.l.bf16 %v2288
    %v2321 = vsub.f32 %v2125, %v2289
    %v2322 = vsub.f32 %v2126, %v2290
    %v2323 = vsub.f32 %v2127, %v2291
    %v2324 = vsub.f32 %v2128, %v2292
    %v2325 = vsub.f32 %v2129, %v2293
    %v2326 = vsub.f32 %v2130, %v2294
    %v2327 = vsub.f32 %v2131, %v2295
    %v2328 = vsub.f32 %v2132, %v2296
    %v2329 = vsub.f32 %v2133, %v2297
    %v2330 = vsub.f32 %v2134, %v2298
    %v2331 = vsub.f32 %v2135, %v2299
    %v2332 = vsub.f32 %v2136, %v2300
    %v2333 = vsub.f32 %v2137, %v2301
    %v2334 = vsub.f32 %v2138, %v2302
    %v2335 = vsub.f32 %v2139, %v2303
    %v2336 = vsub.f32 %v2140, %v2304
    %v2337 = vsub.f32 %v2141, %v2305
    %v2338 = vsub.f32 %v2142, %v2306
    %v2339 = vsub.f32 %v2143, %v2307
    %v2340 = vsub.f32 %v2144, %v2308
    %v2341 = vsub.f32 %v2145, %v2309
    %v2342 = vsub.f32 %v2146, %v2310
    %v2343 = vsub.f32 %v2147, %v2311
    %v2344 = vsub.f32 %v2148, %v2312
    %v2345 = vsub.f32 %v2149, %v2313
    %v2346 = vsub.f32 %v2150, %v2314
    %v2347 = vsub.f32 %v2151, %v2315
    %v2348 = vsub.f32 %v2152, %v2316
    %v2349 = vsub.f32 %v2153, %v2317
    %v2350 = vsub.f32 %v2154, %v2318
    %v2351 = vsub.f32 %v2155, %v2319
    %v2352 = vsub.f32 %v2156, %v2320
    %v2353 = vpack.c.bf16 %v2322, %v2321
    %v2354 = vpack.c.bf16 %v2324, %v2323
    %v2355 = vpack.c.bf16 %v2326, %v2325
    %v2356 = vpack.c.bf16 %v2328, %v2327
    %v2357 = vpack.c.bf16 %v2330, %v2329
    %v2358 = vpack.c.bf16 %v2332, %v2331
    %v2359 = vpack.c.bf16 %v2334, %v2333
    %v2360 = vpack.c.bf16 %v2336, %v2335
    %v2361 = vpack.c.bf16 %v2338, %v2337
    %v2362 = vpack.c.bf16 %v2340, %v2339
    %v2363 = vpack.c.bf16 %v2342, %v2341
    %v2364 = vpack.c.bf16 %v2344, %v2343
    %v2365 = vpack.c.bf16 %v2346, %v2345
    %v2366 = vpack.c.bf16 %v2348, %v2347
    %v2367 = vpack.c.bf16 %v2350, %v2349
    %v2368 = vpack.c.bf16 %v2352, %v2351
    %v2369 = vld [vmem:[#allocation4] sm:$0xff]
    %v2370 = vld [vmem:[#allocation4 + $0x8] sm:$0xff]
    %v2371 = vld [vmem:[#allocation4 + $0x10] sm:$0xff]
    %v2372 = vld [vmem:[#allocation4 + $0x18] sm:$0xff]
    %v2373 = vld [vmem:[#allocation4 + $0x20] sm:$0xff]
    %v2374 = vld [vmem:[#allocation4 + $0x28] sm:$0xff]
    %v2375 = vld [vmem:[#allocation4 + $0x30] sm:$0xff]
    %v2376 = vld [vmem:[#allocation4 + $0x38] sm:$0xff]
    %v2377 = vld [vmem:[#allocation4 + $0x40] sm:$0xff]
    %v2378 = vld [vmem:[#allocation4 + $0x48] sm:$0xff]
    %v2379 = vld [vmem:[#allocation4 + $0x50] sm:$0xff]
    %v2380 = vld [vmem:[#allocation4 + $0x58] sm:$0xff]
    %v2381 = vld [vmem:[#allocation4 + $0x60] sm:$0xff]
    %v2382 = vld [vmem:[#allocation4 + $0x68] sm:$0xff]
    %v2383 = vld [vmem:[#allocation4 + $0x70] sm:$0xff]
    %v2384 = vld [vmem:[#allocation4 + $0x78] sm:$0xff]
    %2385 = vmatpush.bf16.msra.mxu0 %v2360
    %2386 = vmatpush.bf16.msra.mxu0 %v2359
    %2387 = vmatpush.bf16.msra.mxu0 %v2358
    %2388 = vmatpush.bf16.msra.mxu0 %v2357
    %2389 = vmatpush.bf16.msra.mxu0 %v2356
    %2390 = vmatpush.bf16.msra.mxu0 %v2355
    %2391 = vmatpush.bf16.msra.mxu0 %v2354
    %2392 = vmatpush.bf16.msra.mxu0 %v2353
    %2393 = vmatmul.bf16.gmra.mxu0 %v2241
    %v2394 = vpop.f32.mrf.mxu0
    %v2395 = vadd.f32 0.0, %v2394
    %v2396 = vpop.f32.mrf.mxu0
    %v2397 = vadd.f32 0.0, %v2396
    %2398 = vmatmul.bf16.gmra.mxu0 %v2243
    %v2399 = vpop.f32.mrf.mxu0
    %v2400 = vadd.f32 0.0, %v2399
    %v2401 = vpop.f32.mrf.mxu0
    %v2402 = vadd.f32 0.0, %v2401
    %2403 = vmatmul.bf16.gmra.mxu0 %v2245
    %v2404 = vpop.f32.mrf.mxu0
    %v2405 = vadd.f32 0.0, %v2404
    %v2406 = vpop.f32.mrf.mxu0
    %v2407 = vadd.f32 0.0, %v2406
    %2408 = vmatmul.bf16.gmra.mxu0 %v2247
    %v2409 = vpop.f32.mrf.mxu0
    %v2410 = vadd.f32 0.0, %v2409
    %v2411 = vpop.f32.mrf.mxu0
    %v2412 = vadd.f32 0.0, %v2411
    %2413 = vmatmul.bf16.gmra.mxu0 %v2249
    %v2414 = vpop.f32.mrf.mxu0
    %v2415 = vadd.f32 0.0, %v2414
    %v2416 = vpop.f32.mrf.mxu0
    %v2417 = vadd.f32 0.0, %v2416
    %2418 = vmatmul.bf16.gmra.mxu0 %v2251
    %v2419 = vpop.f32.mrf.mxu0
    %v2420 = vadd.f32 0.0, %v2419
    %v2421 = vpop.f32.mrf.mxu0
    %v2422 = vadd.f32 0.0, %v2421
    %2423 = vmatmul.bf16.gmra.mxu0 %v2253
    %v2424 = vpop.f32.mrf.mxu0
    %v2425 = vadd.f32 0.0, %v2424
    %v2426 = vpop.f32.mrf.mxu0
    %v2427 = vadd.f32 0.0, %v2426
    %2428 = vmatmul.bf16.gmra.mxu0 %v2255
    %v2429 = vpop.f32.mrf.mxu0
    %v2430 = vadd.f32 0.0, %v2429
    %v2431 = vpop.f32.mrf.mxu0
    %v2432 = vadd.f32 0.0, %v2431
    %2433 = vdwg.mxu0
    %2434 = vmatpush.bf16.msra.mxu0 %v2368
    %2435 = vmatpush.bf16.msra.mxu0 %v2367
    %2436 = vmatpush.bf16.msra.mxu0 %v2366
    %2437 = vmatpush.bf16.msra.mxu0 %v2365
    %2438 = vmatpush.bf16.msra.mxu0 %v2364
    %2439 = vmatpush.bf16.msra.mxu0 %v2363
    %2440 = vmatpush.bf16.msra.mxu0 %v2362
    %2441 = vmatpush.bf16.msra.mxu0 %v2361
    %2442 = vmatmul.bf16.gmra.mxu0 %v2242
    %v2443 = vpop.f32.mrf.mxu0
    %v2444 = vadd.f32 %v2395, %v2443
    %v2445 = vpop.f32.mrf.mxu0
    %v2446 = vadd.f32 %v2397, %v2445
    %2447 = vmatmul.bf16.gmra.mxu0 %v2244
    %v2448 = vpop.f32.mrf.mxu0
    %v2449 = vadd.f32 %v2400, %v2448
    %v2450 = vpop.f32.mrf.mxu0
    %v2451 = vadd.f32 %v2402, %v2450
    %2452 = vmatmul.bf16.gmra.mxu0 %v2246
    %v2453 = vpop.f32.mrf.mxu0
    %v2454 = vadd.f32 %v2405, %v2453
    %v2455 = vpop.f32.mrf.mxu0
    %v2456 = vadd.f32 %v2407, %v2455
    %2457 = vmatmul.bf16.gmra.mxu0 %v2248
    %v2458 = vpop.f32.mrf.mxu0
    %v2459 = vadd.f32 %v2410, %v2458
    %v2460 = vpop.f32.mrf.mxu0
    %v2461 = vadd.f32 %v2412, %v2460
    %2462 = vmatmul.bf16.gmra.mxu0 %v2250
    %v2463 = vpop.f32.mrf.mxu0
    %v2464 = vadd.f32 %v2415, %v2463
    %v2465 = vpop.f32.mrf.mxu0
    %v2466 = vadd.f32 %v2417, %v2465
    %2467 = vmatmul.bf16.gmra.mxu0 %v2252
    %v2468 = vpop.f32.mrf.mxu0
    %v2469 = vadd.f32 %v2420, %v2468
    %v2470 = vpop.f32.mrf.mxu0
    %v2471 = vadd.f32 %v2422, %v2470
    %2472 = vmatmul.bf16.gmra.mxu0 %v2254
    %v2473 = vpop.f32.mrf.mxu0
    %v2474 = vadd.f32 %v2425, %v2473
    %v2475 = vpop.f32.mrf.mxu0
    %v2476 = vadd.f32 %v2427, %v2475
    %2477 = vmatmul.bf16.gmra.mxu0 %v2256
    %v2478 = vpop.f32.mrf.mxu0
    %v2479 = vadd.f32 %v2430, %v2478
    %v2480 = vpop.f32.mrf.mxu0
    %v2481 = vadd.f32 %v2432, %v2480
    %2482 = vdwg.mxu0
    %v2515 = vunpack.c.l.b16 %v2257
    %v2516 = vunpack.c.l.b16 %v2258
    %v2517 = vunpack.c.l.b16 %v2259
    %v2518 = vunpack.c.l.b16 %v2260
    %v2519 = vunpack.c.l.b16 %v2261
    %v2520 = vunpack.c.l.b16 %v2262
    %v2521 = vunpack.c.l.b16 %v2263
    %v2522 = vunpack.c.l.b16 %v2264
    %v2523 = vunpack.c.l.b16 %v2265
    %v2524 = vunpack.c.l.b16 %v2266
    %v2525 = vunpack.c.l.b16 %v2267
    %v2526 = vunpack.c.l.b16 %v2268
    %v2527 = vunpack.c.l.b16 %v2269
    %v2528 = vunpack.c.l.b16 %v2270
    %v2529 = vunpack.c.l.b16 %v2271
    %v2530 = vunpack.c.l.b16 %v2272
    %v2531 = vunpack.c.l.b16 %v2273
    %v2532 = vunpack.c.l.b16 %v2274
    %v2533 = vunpack.c.l.b16 %v2275
    %v2534 = vunpack.c.l.b16 %v2276
    %v2535 = vunpack.c.l.b16 %v2277
    %v2536 = vunpack.c.l.b16 %v2278
    %v2537 = vunpack.c.l.b16 %v2279
    %v2538 = vunpack.c.l.b16 %v2280
    %v2539 = vunpack.c.l.b16 %v2281
    %v2540 = vunpack.c.l.b16 %v2282
    %v2541 = vunpack.c.l.b16 %v2283
    %v2542 = vunpack.c.l.b16 %v2284
    %v2543 = vunpack.c.l.b16 %v2285
    %v2544 = vunpack.c.l.b16 %v2286
    %v2545 = vunpack.c.l.b16 %v2287
    %v2546 = vunpack.c.l.b16 %v2288
    %v2547 = vpack.c.b16 %v2516, %v2515
    %v2548 = vpack.c.b16 %v2518, %v2517
    %v2549 = vpack.c.b16 %v2520, %v2519
    %v2550 = vpack.c.b16 %v2522, %v2521
    %v2551 = vpack.c.b16 %v2524, %v2523
    %v2552 = vpack.c.b16 %v2526, %v2525
    %v2553 = vpack.c.b16 %v2528, %v2527
    %v2554 = vpack.c.b16 %v2530, %v2529
    %v2555 = vpack.c.b16 %v2532, %v2531
    %v2556 = vpack.c.b16 %v2534, %v2533
    %v2557 = vpack.c.b16 %v2536, %v2535
    %v2558 = vpack.c.b16 %v2538, %v2537
    %v2559 = vpack.c.b16 %v2540, %v2539
    %v2560 = vpack.c.b16 %v2542, %v2541
    %v2561 = vpack.c.b16 %v2544, %v2543
    %v2562 = vpack.c.b16 %v2546, %v2545
    %2579 = vmatpush.bf16.msra.mxu0 %v2554
    %2580 = vmatpush.bf16.msra.mxu0 %v2553
    %2581 = vmatpush.bf16.msra.mxu0 %v2552
    %2582 = vmatpush.bf16.msra.mxu0 %v2551
    %2583 = vmatpush.bf16.msra.mxu0 %v2550
    %2584 = vmatpush.bf16.msra.mxu0 %v2549
    %2585 = vmatpush.bf16.msra.mxu0 %v2548
    %2586 = vmatpush.bf16.msra.mxu0 %v2547
    %2587 = vmatmul.bf16.gmra.mxu0 %v2241
    %v2588 = vpop.f32.mrf.mxu0
    %v2589 = vadd.f32 %v2444, %v2588
    %v2590 = vpop.f32.mrf.mxu0
    %v2591 = vadd.f32 %v2446, %v2590
    %2592 = vmatmul.bf16.gmra.mxu0 %v2243
    %v2593 = vpop.f32.mrf.mxu0
    %v2594 = vadd.f32 %v2449, %v2593
    %v2595 = vpop.f32.mrf.mxu0
    %v2596 = vadd.f32 %v2451, %v2595
    %2597 = vmatmul.bf16.gmra.mxu0 %v2245
    %v2598 = vpop.f32.mrf.mxu0
    %v2599 = vadd.f32 %v2454, %v2598
    %v2600 = vpop.f32.mrf.mxu0
    %v2601 = vadd.f32 %v2456, %v2600
    %2602 = vmatmul.bf16.gmra.mxu0 %v2247
    %v2603 = vpop.f32.mrf.mxu0
    %v2604 = vadd.f32 %v2459, %v2603
    %v2605 = vpop.f32.mrf.mxu0
    %v2606 = vadd.f32 %v2461, %v2605
    %2607 = vmatmul.bf16.gmra.mxu0 %v2249
    %v2608 = vpop.f32.mrf.mxu0
    %v2609 = vadd.f32 %v2464, %v2608
    %v2610 = vpop.f32.mrf.mxu0
    %v2611 = vadd.f32 %v2466, %v2610
    %2612 = vmatmul.bf16.gmra.mxu0 %v2251
    %v2613 = vpop.f32.mrf.mxu0
    %v2614 = vadd.f32 %v2469, %v2613
    %v2615 = vpop.f32.mrf.mxu0
    %v2616 = vadd.f32 %v2471, %v2615
    %2617 = vmatmul.bf16.gmra.mxu0 %v2253
    %v2618 = vpop.f32.mrf.mxu0
    %v2619 = vadd.f32 %v2474, %v2618
    %v2620 = vpop.f32.mrf.mxu0
    %v2621 = vadd.f32 %v2476, %v2620
    %2622 = vmatmul.bf16.gmra.mxu0 %v2255
    %v2623 = vpop.f32.mrf.mxu0
    %v2624 = vadd.f32 %v2479, %v2623
    %v2625 = vpop.f32.mrf.mxu0
    %v2626 = vadd.f32 %v2481, %v2625
    %2627 = vdwg.mxu0
    %2628 = vmatpush.bf16.msra.mxu0 %v2562
    %2629 = vmatpush.bf16.msra.mxu0 %v2561
    %2630 = vmatpush.bf16.msra.mxu0 %v2560
    %2631 = vmatpush.bf16.msra.mxu0 %v2559
    %2632 = vmatpush.bf16.msra.mxu0 %v2558
    %2633 = vmatpush.bf16.msra.mxu0 %v2557
    %2634 = vmatpush.bf16.msra.mxu0 %v2556
    %2635 = vmatpush.bf16.msra.mxu0 %v2555
    %2636 = vmatmul.bf16.gmra.mxu0 %v2242
    %v2637 = vpop.f32.mrf.mxu0
    %v2638 = vadd.f32 %v2589, %v2637
    %v2639 = vpop.f32.mrf.mxu0
    %v2640 = vadd.f32 %v2591, %v2639
    %2641 = vmatmul.bf16.gmra.mxu0 %v2244
    %v2642 = vpop.f32.mrf.mxu0
    %v2643 = vadd.f32 %v2594, %v2642
    %v2644 = vpop.f32.mrf.mxu0
    %v2645 = vadd.f32 %v2596, %v2644
    %2646 = vmatmul.bf16.gmra.mxu0 %v2246
    %v2647 = vpop.f32.mrf.mxu0
    %v2648 = vadd.f32 %v2599, %v2647
    %v2649 = vpop.f32.mrf.mxu0
    %v2650 = vadd.f32 %v2601, %v2649
    %2651 = vmatmul.bf16.gmra.mxu0 %v2248
    %v2652 = vpop.f32.mrf.mxu0
    %v2653 = vadd.f32 %v2604, %v2652
    %v2654 = vpop.f32.mrf.mxu0
    %v2655 = vadd.f32 %v2606, %v2654
    %2656 = vmatmul.bf16.gmra.mxu0 %v2250
    %v2657 = vpop.f32.mrf.mxu0
    %v2658 = vadd.f32 %v2609, %v2657
    %v2659 = vpop.f32.mrf.mxu0
    %v2660 = vadd.f32 %v2611, %v2659
    %2661 = vmatmul.bf16.gmra.mxu0 %v2252
    %v2662 = vpop.f32.mrf.mxu0
    %v2663 = vadd.f32 %v2614, %v2662
    %v2664 = vpop.f32.mrf.mxu0
    %v2665 = vadd.f32 %v2616, %v2664
    %2666 = vmatmul.bf16.gmra.mxu0 %v2254
    %v2667 = vpop.f32.mrf.mxu0
    %v2668 = vadd.f32 %v2619, %v2667
    %v2669 = vpop.f32.mrf.mxu0
    %v2670 = vadd.f32 %v2621, %v2669
    %2671 = vmatmul.bf16.gmra.mxu0 %v2256
    %v2672 = vpop.f32.mrf.mxu0
    %v2673 = vadd.f32 %v2624, %v2672
    %v2674 = vpop.f32.mrf.mxu0
    %v2675 = vadd.f32 %v2626, %v2674
    %2676 = vdwg.mxu0
    %v2677 = vadd.f32 %v2369, %v2638
    %v2678 = vadd.f32 %v2370, %v2640
    %v2679 = vadd.f32 %v2371, %v2643
    %v2680 = vadd.f32 %v2372, %v2645
    %v2681 = vadd.f32 %v2373, %v2648
    %v2682 = vadd.f32 %v2374, %v2650
    %v2683 = vadd.f32 %v2375, %v2653
    %v2684 = vadd.f32 %v2376, %v2655
    %v2685 = vadd.f32 %v2377, %v2658
    %v2686 = vadd.f32 %v2378, %v2660
    %v2687 = vadd.f32 %v2379, %v2663
    %v2688 = vadd.f32 %v2380, %v2665
    %v2689 = vadd.f32 %v2381, %v2668
    %v2690 = vadd.f32 %v2382, %v2670
    %v2691 = vadd.f32 %v2383, %v2673
    %v2692 = vadd.f32 %v2384, %v2675
    %2693 = vst [vmem:[#allocation4] sm:$0xff] %v2677
    %2694 = vst [vmem:[#allocation4 + $0x8] sm:$0xff] %v2678
    %2695 = vst [vmem:[#allocation4 + $0x10] sm:$0xff] %v2679
    %2696 = vst [vmem:[#allocation4 + $0x18] sm:$0xff] %v2680
    %2697 = vst [vmem:[#allocation4 + $0x20] sm:$0xff] %v2681
    %2698 = vst [vmem:[#allocation4 + $0x28] sm:$0xff] %v2682
    %2699 = vst [vmem:[#allocation4 + $0x30] sm:$0xff] %v2683
    %2700 = vst [vmem:[#allocation4 + $0x38] sm:$0xff] %v2684
    %2701 = vst [vmem:[#allocation4 + $0x40] sm:$0xff] %v2685
    %2702 = vst [vmem:[#allocation4 + $0x48] sm:$0xff] %v2686
    %2703 = vst [vmem:[#allocation4 + $0x50] sm:$0xff] %v2687
    %2704 = vst [vmem:[#allocation4 + $0x58] sm:$0xff] %v2688
    %2705 = vst [vmem:[#allocation4 + $0x60] sm:$0xff] %v2689
    %2706 = vst [vmem:[#allocation4 + $0x68] sm:$0xff] %v2690
    %2707 = vst [vmem:[#allocation4 + $0x70] sm:$0xff] %v2691
    %2708 = vst [vmem:[#allocation4 + $0x78] sm:$0xff] %v2692
    // Predicated region
    $region62: #{tpu_custom_call.1} parent=1 // pred_check
      %p2709 = pneg %p49
    $region63: #{tpu_custom_call.1} parent=1 // pred_check_branch
      %2711 = sbr.rel (%p2709) target = $region65
    $region64: #{tpu_custom_call.1} parent=1 // pred_region
      %v2712 = vld [vmem:[#allocation4] sm:$0xff]
      %v2713 = vld [vmem:[#allocation4 + $0x8] sm:$0xff]
      %v2714 = vld [vmem:[#allocation4 + $0x10] sm:$0xff]
      %v2715 = vld [vmem:[#allocation4 + $0x18] sm:$0xff]
      %v2716 = vld [vmem:[#allocation4 + $0x20] sm:$0xff]
      %v2717 = vld [vmem:[#allocation4 + $0x28] sm:$0xff]
      %v2718 = vld [vmem:[#allocation4 + $0x30] sm:$0xff]
      %v2719 = vld [vmem:[#allocation4 + $0x38] sm:$0xff]
      %v2720 = vld [vmem:[#allocation4 + $0x40] sm:$0xff]
      %v2721 = vld [vmem:[#allocation4 + $0x48] sm:$0xff]
      %v2722 = vld [vmem:[#allocation4 + $0x50] sm:$0xff]
      %v2723 = vld [vmem:[#allocation4 + $0x58] sm:$0xff]
      %v2724 = vld [vmem:[#allocation4 + $0x60] sm:$0xff]
      %v2725 = vld [vmem:[#allocation4 + $0x68] sm:$0xff]
      %v2726 = vld [vmem:[#allocation4 + $0x70] sm:$0xff]
      %v2727 = vld [vmem:[#allocation4 + $0x78] sm:$0xff]
      %v2728 = vpack.c.bf16 %v2713, %v2712
      %v2729 = vpack.c.bf16 %v2715, %v2714
      %v2730 = vpack.c.bf16 %v2717, %v2716
      %v2731 = vpack.c.bf16 %v2719, %v2718
      %v2732 = vpack.c.bf16 %v2721, %v2720
      %v2733 = vpack.c.bf16 %v2723, %v2722
      %v2734 = vpack.c.bf16 %v2725, %v2724
      %v2735 = vpack.c.bf16 %v2727, %v2726
      %v2736 = vld [vmem:[%s10] sm:$0xf]
      %v2737 = vld [vmem:[%s10 + $0x4] sm:$0xf]
      %v2738 = vld [vmem:[%s10 + $0x8] sm:$0xf]
      %v2739 = vld [vmem:[%s10 + $0xc] sm:$0xf]
      %v2740 = vld [vmem:[%s10 + $0x10] sm:$0xf]
      %v2741 = vld [vmem:[%s10 + $0x14] sm:$0xf]
      %v2742 = vld [vmem:[%s10 + $0x18] sm:$0xf]
      %v2743 = vld [vmem:[%s10 + $0x1c] sm:$0xf]
      %v2744 = vld [vmem:[%s10 + $0x20] sm:$0xf]
      %v2745 = vld [vmem:[%s10 + $0x24] sm:$0xf]
      %v2746 = vld [vmem:[%s10 + $0x28] sm:$0xf]
      %v2747 = vld [vmem:[%s10 + $0x2c] sm:$0xf]
      %v2748 = vld [vmem:[%s10 + $0x30] sm:$0xf]
      %v2749 = vld [vmem:[%s10 + $0x34] sm:$0xf]
      %v2750 = vld [vmem:[%s10 + $0x38] sm:$0xf]
      %v2751 = vld [vmem:[%s10 + $0x3c] sm:$0xf]
      %v2752 = vld [vmem:[%s11] sm:$0x1]
      %v2754 = vperm.slane %v2752, 0
      %v2772 = vunpack.c.l.b16 %v2736
      %v2773 = vunpack.c.l.b16 %v2737
      %v2774 = vunpack.c.l.b16 %v2738
      %v2775 = vunpack.c.l.b16 %v2739
      %v2776 = vunpack.c.l.b16 %v2740
      %v2777 = vunpack.c.l.b16 %v2741
      %v2778 = vunpack.c.l.b16 %v2742
      %v2779 = vunpack.c.l.b16 %v2743
      %v2780 = vunpack.c.l.b16 %v2744
      %v2781 = vunpack.c.l.b16 %v2745
      %v2782 = vunpack.c.l.b16 %v2746
      %v2783 = vunpack.c.l.b16 %v2747
      %v2784 = vunpack.c.l.b16 %v2748
      %v2785 = vunpack.c.l.b16 %v2749
      %v2786 = vunpack.c.l.b16 %v2750
      %v2787 = vunpack.c.l.b16 %v2751
      %v2788 = vpack.c.b16 %v2773, %v2772
      %v2789 = vpack.c.b16 %v2775, %v2774
      %v2790 = vpack.c.b16 %v2777, %v2776
      %v2791 = vpack.c.b16 %v2779, %v2778
      %v2792 = vpack.c.b16 %v2781, %v2780
      %v2793 = vpack.c.b16 %v2783, %v2782
      %v2794 = vpack.c.b16 %v2785, %v2784
      %v2795 = vpack.c.b16 %v2787, %v2786
      %2804 = vmatpush.bf16.msra.mxu0 %v2795
      %2805 = vmatpush.bf16.msra.mxu0 %v2794
      %2806 = vmatpush.bf16.msra.mxu0 %v2793
      %2807 = vmatpush.bf16.msra.mxu0 %v2792
      %2808 = vmatpush.bf16.msra.mxu0 %v2791
      %2809 = vmatpush.bf16.msra.mxu0 %v2790
      %2810 = vmatpush.bf16.msra.mxu0 %v2789
      %2811 = vmatpush.bf16.msra.mxu0 %v2788
      %2812 = vmatmul.bf16.gmra.mxu0 %v2728
      %v2813 = vpop.f32.mrf.mxu0
      %v2814 = vadd.f32 %v2754, %v2813
      %v2815 = vpop.f32.mrf.mxu0
      %v2816 = vadd.f32 %v2754, %v2815
      %2817 = vmatmul.bf16.gmra.mxu0 %v2729
      %v2818 = vpop.f32.mrf.mxu0
      %v2819 = vadd.f32 %v2754, %v2818
      %v2820 = vpop.f32.mrf.mxu0
      %v2821 = vadd.f32 %v2754, %v2820
      %2822 = vmatmul.bf16.gmra.mxu0 %v2730
      %v2823 = vpop.f32.mrf.mxu0
      %v2824 = vadd.f32 %v2754, %v2823
      %v2825 = vpop.f32.mrf.mxu0
      %v2826 = vadd.f32 %v2754, %v2825
      %2827 = vmatmul.bf16.gmra.mxu0 %v2731
      %v2828 = vpop.f32.mrf.mxu0
      %v2829 = vadd.f32 %v2754, %v2828
      %v2830 = vpop.f32.mrf.mxu0
      %v2831 = vadd.f32 %v2754, %v2830
      %2832 = vmatmul.bf16.gmra.mxu0 %v2732
      %v2833 = vpop.f32.mrf.mxu0
      %v2834 = vadd.f32 %v2754, %v2833
      %v2835 = vpop.f32.mrf.mxu0
      %v2836 = vadd.f32 %v2754, %v2835
      %2837 = vmatmul.bf16.gmra.mxu0 %v2733
      %v2838 = vpop.f32.mrf.mxu0
      %v2839 = vadd.f32 %v2754, %v2838
      %v2840 = vpop.f32.mrf.mxu0
      %v2841 = vadd.f32 %v2754, %v2840
      %2842 = vmatmul.bf16.gmra.mxu0 %v2734
      %v2843 = vpop.f32.mrf.mxu0
      %v2844 = vadd.f32 %v2754, %v2843
      %v2845 = vpop.f32.mrf.mxu0
      %v2846 = vadd.f32 %v2754, %v2845
      %2847 = vmatmul.bf16.gmra.mxu0 %v2735
      %v2848 = vpop.f32.mrf.mxu0
      %v2849 = vadd.f32 %v2754, %v2848
      %v2850 = vpop.f32.mrf.mxu0
      %v2851 = vadd.f32 %v2754, %v2850
      %2852 = vdwg.mxu0
      %v2853 = vmax.f32 %v2814, 0.0
      %v2854 = vmax.f32 %v2816, 0.0
      %v2855 = vmax.f32 %v2819, 0.0
      %v2856 = vmax.f32 %v2821, 0.0
      %v2857 = vmax.f32 %v2824, 0.0
      %v2858 = vmax.f32 %v2826, 0.0
      %v2859 = vmax.f32 %v2829, 0.0
      %v2860 = vmax.f32 %v2831, 0.0
      %v2861 = vmax.f32 %v2834, 0.0
      %v2862 = vmax.f32 %v2836, 0.0
      %v2863 = vmax.f32 %v2839, 0.0
      %v2864 = vmax.f32 %v2841, 0.0
      %v2865 = vmax.f32 %v2844, 0.0
      %v2866 = vmax.f32 %v2846, 0.0
      %v2867 = vmax.f32 %v2849, 0.0
      %v2868 = vmax.f32 %v2851, 0.0
      %vm2869 = vcmp.ne.f32.partialorder %v2814, %v2814
      %vm2870 = vcmp.ne.f32.partialorder %v2816, %v2816
      %vm2871 = vcmp.ne.f32.partialorder %v2819, %v2819
      %vm2872 = vcmp.ne.f32.partialorder %v2821, %v2821
      %vm2873 = vcmp.ne.f32.partialorder %v2824, %v2824
      %vm2874 = vcmp.ne.f32.partialorder %v2826, %v2826
      %vm2875 = vcmp.ne.f32.partialorder %v2829, %v2829
      %vm2876 = vcmp.ne.f32.partialorder %v2831, %v2831
      %vm2877 = vcmp.ne.f32.partialorder %v2834, %v2834
      %vm2878 = vcmp.ne.f32.partialorder %v2836, %v2836
      %vm2879 = vcmp.ne.f32.partialorder %v2839, %v2839
      %vm2880 = vcmp.ne.f32.partialorder %v2841, %v2841
      %vm2881 = vcmp.ne.f32.partialorder %v2844, %v2844
      %vm2882 = vcmp.ne.f32.partialorder %v2846, %v2846
      %vm2883 = vcmp.ne.f32.partialorder %v2849, %v2849
      %vm2884 = vcmp.ne.f32.partialorder %v2851, %v2851
      %v2885 = vadd.f32 %v2814, 0.0
      %v2886 = vadd.f32 %v2816, 0.0
      %v2887 = vadd.f32 %v2819, 0.0
      %v2888 = vadd.f32 %v2821, 0.0
      %v2889 = vadd.f32 %v2824, 0.0
      %v2890 = vadd.f32 %v2826, 0.0
      %v2891 = vadd.f32 %v2829, 0.0
      %v2892 = vadd.f32 %v2831, 0.0
      %v2893 = vadd.f32 %v2834, 0.0
      %v2894 = vadd.f32 %v2836, 0.0
      %v2895 = vadd.f32 %v2839, 0.0
      %v2896 = vadd.f32 %v2841, 0.0
      %v2897 = vadd.f32 %v2844, 0.0
      %v2898 = vadd.f32 %v2846, 0.0
      %v2899 = vadd.f32 %v2849, 0.0
      %v2900 = vadd.f32 %v2851, 0.0
      %v2901 = vand.u32 2147483647, %v2814
      %v2902 = vand.u32 2147483647, %v2816
      %v2903 = vand.u32 2147483647, %v2819
      %v2904 = vand.u32 2147483647, %v2821
      %v2905 = vand.u32 2147483647, %v2824
      %v2906 = vand.u32 2147483647, %v2826
      %v2907 = vand.u32 2147483647, %v2829
      %v2908 = vand.u32 2147483647, %v2831
      %v2909 = vand.u32 2147483647, %v2834
      %v2910 = vand.u32 2147483647, %v2836
      %v2911 = vand.u32 2147483647, %v2839
      %v2912 = vand.u32 2147483647, %v2841
      %v2913 = vand.u32 2147483647, %v2844
      %v2914 = vand.u32 2147483647, %v2846
      %v2915 = vand.u32 2147483647, %v2849
      %v2916 = vand.u32 2147483647, %v2851
      %v2917 = vsub.f32 0.0, %v2901
      %v2918 = vsub.f32 0.0, %v2902
      %v2919 = vsub.f32 0.0, %v2903
      %v2920 = vsub.f32 0.0, %v2904
      %v2921 = vsub.f32 0.0, %v2905
      %v2922 = vsub.f32 0.0, %v2906
      %v2923 = vsub.f32 0.0, %v2907
      %v2924 = vsub.f32 0.0, %v2908
      %v2925 = vsub.f32 0.0, %v2909
      %v2926 = vsub.f32 0.0, %v2910
      %v2927 = vsub.f32 0.0, %v2911
      %v2928 = vsub.f32 0.0, %v2912
      %v2929 = vsub.f32 0.0, %v2913
      %v2930 = vsub.f32 0.0, %v2914
      %v2931 = vsub.f32 0.0, %v2915
      %v2932 = vsub.f32 0.0, %v2916
      %v2933 = vmul.f32 %v2917, 1.442695
      %v2934 = vpow.pop %v2933
      %v2935 = vmul.f32 %v2918, 1.442695
      %v2936 = vpow.pop %v2935
      %v2937 = vmul.f32 %v2919, 1.442695
      %v2938 = vpow.pop %v2937
      %v2939 = vmul.f32 %v2920, 1.442695
      %v2940 = vpow.pop %v2939
      %v2941 = vmul.f32 %v2921, 1.442695
      %v2942 = vpow.pop %v2941
      %v2943 = vmul.f32 %v2922, 1.442695
      %v2944 = vpow.pop %v2943
      %v2945 = vmul.f32 %v2923, 1.442695
      %v2946 = vpow.pop %v2945
      %v2947 = vmul.f32 %v2924, 1.442695
      %v2948 = vpow.pop %v2947
      %v2949 = vmul.f32 %v2925, 1.442695
      %v2950 = vpow.pop %v2949
      %v2951 = vmul.f32 %v2926, 1.442695
      %v2952 = vpow.pop %v2951
      %v2953 = vmul.f32 %v2927, 1.442695
      %v2954 = vpow.pop %v2953
      %v2955 = vmul.f32 %v2928, 1.442695
      %v2956 = vpow.pop %v2955
      %v2957 = vmul.f32 %v2929, 1.442695
      %v2958 = vpow.pop %v2957
      %v2959 = vmul.f32 %v2930, 1.442695
      %v2960 = vpow.pop %v2959
      %v2961 = vmul.f32 %v2931, 1.442695
      %v2962 = vpow.pop %v2961
      %v2963 = vmul.f32 %v2932, 1.442695
      %v2964 = vpow.pop %v2963
      %v2965 = vadd.f32 %v2934, 1.0
      %v2966 = vlog2.pop %v2965
      %v2967 = vmul.f32 %v2966, 0.6931472
      %v2968 = vmul.f32 -0.5, %v2934
      %v2969 = vadd.f32 %v2968, 1.0
      %v2970 = vmul.f32 %v2969, %v2934
      %v2971 = vand.u32 2147483647, %v2934
      %vm2972 = vcmp.lt.f32.partialorder %v2971, 0.0004427343
      %v2973 = vsel %vm2972, %v2970, %v2967
      %v2974 = vadd.f32 %v2936, 1.0
      %v2975 = vlog2.pop %v2974
      %v2976 = vmul.f32 %v2975, 0.6931472
      %v2977 = vmul.f32 -0.5, %v2936
      %v2978 = vadd.f32 %v2977, 1.0
      %v2979 = vmul.f32 %v2978, %v2936
      %v2980 = vand.u32 2147483647, %v2936
      %vm2981 = vcmp.lt.f32.partialorder %v2980, 0.0004427343
      %v2982 = vsel %vm2981, %v2979, %v2976
      %v2983 = vadd.f32 %v2938, 1.0
      %v2984 = vlog2.pop %v2983
      %v2985 = vmul.f32 %v2984, 0.6931472
      %v2986 = vmul.f32 -0.5, %v2938
      %v2987 = vadd.f32 %v2986, 1.0
      %v2988 = vmul.f32 %v2987, %v2938
      %v2989 = vand.u32 2147483647, %v2938
      %vm2990 = vcmp.lt.f32.partialorder %v2989, 0.0004427343
      %v2991 = vsel %vm2990, %v2988, %v2985
      %v2992 = vadd.f32 %v2940, 1.0
      %v2993 = vlog2.pop %v2992
      %v2994 = vmul.f32 %v2993, 0.6931472
      %v2995 = vmul.f32 -0.5, %v2940
      %v2996 = vadd.f32 %v2995, 1.0
      %v2997 = vmul.f32 %v2996, %v2940
      %v2998 = vand.u32 2147483647, %v2940
      %vm2999 = vcmp.lt.f32.partialorder %v2998, 0.0004427343
      %v3000 = vsel %vm2999, %v2997, %v2994
      %v3001 = vadd.f32 %v2942, 1.0
      %v3002 = vlog2.pop %v3001
      %v3003 = vmul.f32 %v3002, 0.6931472
      %v3004 = vmul.f32 -0.5, %v2942
      %v3005 = vadd.f32 %v3004, 1.0
      %v3006 = vmul.f32 %v3005, %v2942
      %v3007 = vand.u32 2147483647, %v2942
      %vm3008 = vcmp.lt.f32.partialorder %v3007, 0.0004427343
      %v3009 = vsel %vm3008, %v3006, %v3003
      %v3010 = vadd.f32 %v2944, 1.0
      %v3011 = vlog2.pop %v3010
      %v3012 = vmul.f32 %v3011, 0.6931472
      %v3013 = vmul.f32 -0.5, %v2944
      %v3014 = vadd.f32 %v3013, 1.0
      %v3015 = vmul.f32 %v3014, %v2944
      %v3016 = vand.u32 2147483647, %v2944
      %vm3017 = vcmp.lt.f32.partialorder %v3016, 0.0004427343
      %v3018 = vsel %vm3017, %v3015, %v3012
      %v3019 = vadd.f32 %v2946, 1.0
      %v3020 = vlog2.pop %v3019
      %v3021 = vmul.f32 %v3020, 0.6931472
      %v3022 = vmul.f32 -0.5, %v2946
      %v3023 = vadd.f32 %v3022, 1.0
      %v3024 = vmul.f32 %v3023, %v2946
      %v3025 = vand.u32 2147483647, %v2946
      %vm3026 = vcmp.lt.f32.partialorder %v3025, 0.0004427343
      %v3027 = vsel %vm3026, %v3024, %v3021
      %v3028 = vadd.f32 %v2948, 1.0
      %v3029 = vlog2.pop %v3028
      %v3030 = vmul.f32 %v3029, 0.6931472
      %v3031 = vmul.f32 -0.5, %v2948
      %v3032 = vadd.f32 %v3031, 1.0
      %v3033 = vmul.f32 %v3032, %v2948
      %v3034 = vand.u32 2147483647, %v2948
      %vm3035 = vcmp.lt.f32.partialorder %v3034, 0.0004427343
      %v3036 = vsel %vm3035, %v3033, %v3030
      %v3037 = vadd.f32 %v2950, 1.0
      %v3038 = vlog2.pop %v3037
      %v3039 = vmul.f32 %v3038, 0.6931472
      %v3040 = vmul.f32 -0.5, %v2950
      %v3041 = vadd.f32 %v3040, 1.0
      %v3042 = vmul.f32 %v3041, %v2950
      %v3043 = vand.u32 2147483647, %v2950
      %vm3044 = vcmp.lt.f32.partialorder %v3043, 0.0004427343
      %v3045 = vsel %vm3044, %v3042, %v3039
      %v3046 = vadd.f32 %v2952, 1.0
      %v3047 = vlog2.pop %v3046
      %v3048 = vmul.f32 %v3047, 0.6931472
      %v3049 = vmul.f32 -0.5, %v2952
      %v3050 = vadd.f32 %v3049, 1.0
      %v3051 = vmul.f32 %v3050, %v2952
      %v3052 = vand.u32 2147483647, %v2952
      %vm3053 = vcmp.lt.f32.partialorder %v3052, 0.0004427343
      %v3054 = vsel %vm3053, %v3051, %v3048
      %v3055 = vadd.f32 %v2954, 1.0
      %v3056 = vlog2.pop %v3055
      %v3057 = vmul.f32 %v3056, 0.6931472
      %v3058 = vmul.f32 -0.5, %v2954
      %v3059 = vadd.f32 %v3058, 1.0
      %v3060 = vmul.f32 %v3059, %v2954
      %v3061 = vand.u32 2147483647, %v2954
      %vm3062 = vcmp.lt.f32.partialorder %v3061, 0.0004427343
      %v3063 = vsel %vm3062, %v3060, %v3057
      %v3064 = vadd.f32 %v2956, 1.0
      %v3065 = vlog2.pop %v3064
      %v3066 = vmul.f32 %v3065, 0.6931472
      %v3067 = vmul.f32 -0.5, %v2956
      %v3068 = vadd.f32 %v3067, 1.0
      %v3069 = vmul.f32 %v3068, %v2956
      %v3070 = vand.u32 2147483647, %v2956
      %vm3071 = vcmp.lt.f32.partialorder %v3070, 0.0004427343
      %v3072 = vsel %vm3071, %v3069, %v3066
      %v3073 = vadd.f32 %v2958, 1.0
      %v3074 = vlog2.pop %v3073
      %v3075 = vmul.f32 %v3074, 0.6931472
      %v3076 = vmul.f32 -0.5, %v2958
      %v3077 = vadd.f32 %v3076, 1.0
      %v3078 = vmul.f32 %v3077, %v2958
      %v3079 = vand.u32 2147483647, %v2958
      %vm3080 = vcmp.lt.f32.partialorder %v3079, 0.0004427343
      %v3081 = vsel %vm3080, %v3078, %v3075
      %v3082 = vadd.f32 %v2960, 1.0
      %v3083 = vlog2.pop %v3082
      %v3084 = vmul.f32 %v3083, 0.6931472
      %v3085 = vmul.f32 -0.5, %v2960
      %v3086 = vadd.f32 %v3085, 1.0
      %v3087 = vmul.f32 %v3086, %v2960
      %v3088 = vand.u32 2147483647, %v2960
      %vm3089 = vcmp.lt.f32.partialorder %v3088, 0.0004427343
      %v3090 = vsel %vm3089, %v3087, %v3084
      %v3091 = vadd.f32 %v2962, 1.0
      %v3092 = vlog2.pop %v3091
      %v3093 = vmul.f32 %v3092, 0.6931472
      %v3094 = vmul.f32 -0.5, %v2962
      %v3095 = vadd.f32 %v3094, 1.0
      %v3096 = vmul.f32 %v3095, %v2962
      %v3097 = vand.u32 2147483647, %v2962
      %vm3098 = vcmp.lt.f32.partialorder %v3097, 0.0004427343
      %v3099 = vsel %vm3098, %v3096, %v3093
      %v3100 = vadd.f32 %v2964, 1.0
      %v3101 = vlog2.pop %v3100
      %v3102 = vmul.f32 %v3101, 0.6931472
      %v3103 = vmul.f32 -0.5, %v2964
      %v3104 = vadd.f32 %v3103, 1.0
      %v3105 = vmul.f32 %v3104, %v2964
      %v3106 = vand.u32 2147483647, %v2964
      %vm3107 = vcmp.lt.f32.partialorder %v3106, 0.0004427343
      %v3108 = vsel %vm3107, %v3105, %v3102
      %v3109 = vadd.f32 %v2853, %v2973
      %v3110 = vadd.f32 %v2854, %v2982
      %v3111 = vadd.f32 %v2855, %v2991
      %v3112 = vadd.f32 %v2856, %v3000
      %v3113 = vadd.f32 %v2857, %v3009
      %v3114 = vadd.f32 %v2858, %v3018
      %v3115 = vadd.f32 %v2859, %v3027
      %v3116 = vadd.f32 %v2860, %v3036
      %v3117 = vadd.f32 %v2861, %v3045
      %v3118 = vadd.f32 %v2862, %v3054
      %v3119 = vadd.f32 %v2863, %v3063
      %v3120 = vadd.f32 %v2864, %v3072
      %v3121 = vadd.f32 %v2865, %v3081
      %v3122 = vadd.f32 %v2866, %v3090
      %v3123 = vadd.f32 %v2867, %v3099
      %v3124 = vadd.f32 %v2868, %v3108
      %v3125 = vsel %vm2869, %v2885, %v3109
      %v3126 = vsel %vm2870, %v2886, %v3110
      %v3127 = vsel %vm2871, %v2887, %v3111
      %v3128 = vsel %vm2872, %v2888, %v3112
      %v3129 = vsel %vm2873, %v2889, %v3113
      %v3130 = vsel %vm2874, %v2890, %v3114
      %v3131 = vsel %vm2875, %v2891, %v3115
      %v3132 = vsel %vm2876, %v2892, %v3116
      %v3133 = vsel %vm2877, %v2893, %v3117
      %v3134 = vsel %vm2878, %v2894, %v3118
      %v3135 = vsel %vm2879, %v2895, %v3119
      %v3136 = vsel %vm2880, %v2896, %v3120
      %v3137 = vsel %vm2881, %v2897, %v3121
      %v3138 = vsel %vm2882, %v2898, %v3122
      %v3139 = vsel %vm2883, %v2899, %v3123
      %v3140 = vsel %vm2884, %v2900, %v3124
      %v3141 = vsub.f32 %v3125, 0.6931472
      %v3142 = vsub.f32 %v3126, 0.6931472
      %v3143 = vsub.f32 %v3127, 0.6931472
      %v3144 = vsub.f32 %v3128, 0.6931472
      %v3145 = vsub.f32 %v3129, 0.6931472
      %v3146 = vsub.f32 %v3130, 0.6931472
      %v3147 = vsub.f32 %v3131, 0.6931472
      %v3148 = vsub.f32 %v3132, 0.6931472
      %v3149 = vsub.f32 %v3133, 0.6931472
      %v3150 = vsub.f32 %v3134, 0.6931472
      %v3151 = vsub.f32 %v3135, 0.6931472
      %v3152 = vsub.f32 %v3136, 0.6931472
      %v3153 = vsub.f32 %v3137, 0.6931472
      %v3154 = vsub.f32 %v3138, 0.6931472
      %v3155 = vsub.f32 %v3139, 0.6931472
      %v3156 = vsub.f32 %v3140, 0.6931472
      %v3157 = vpack.c.bf16 %v3142, %v3141
      %v3158 = vpack.c.bf16 %v3144, %v3143
      %v3159 = vpack.c.bf16 %v3146, %v3145
      %v3160 = vpack.c.bf16 %v3148, %v3147
      %v3161 = vpack.c.bf16 %v3150, %v3149
      %v3162 = vpack.c.bf16 %v3152, %v3151
      %v3163 = vpack.c.bf16 %v3154, %v3153
      %v3164 = vpack.c.bf16 %v3156, %v3155
      %v3165 = vld [vmem:[%s12] sm:$0xf]
      %v3166 = vld [vmem:[%s12 + $0x4] sm:$0xf]
      %v3167 = vld [vmem:[%s12 + $0x8] sm:$0xf]
      %v3168 = vld [vmem:[%s12 + $0xc] sm:$0xf]
      %v3169 = vld [vmem:[%s12 + $0x10] sm:$0xf]
      %v3170 = vld [vmem:[%s12 + $0x14] sm:$0xf]
      %v3171 = vld [vmem:[%s12 + $0x18] sm:$0xf]
      %v3172 = vld [vmem:[%s12 + $0x1c] sm:$0xf]
      %v3173 = vld [vmem:[%s12 + $0x20] sm:$0xf]
      %v3174 = vld [vmem:[%s12 + $0x24] sm:$0xf]
      %v3175 = vld [vmem:[%s12 + $0x28] sm:$0xf]
      %v3176 = vld [vmem:[%s12 + $0x2c] sm:$0xf]
      %v3177 = vld [vmem:[%s12 + $0x30] sm:$0xf]
      %v3178 = vld [vmem:[%s12 + $0x34] sm:$0xf]
      %v3179 = vld [vmem:[%s12 + $0x38] sm:$0xf]
      %v3180 = vld [vmem:[%s12 + $0x3c] sm:$0xf]
      %v3181 = vld [vmem:[%s13] sm:$0x1]
      %v3183 = vperm.slane %v3181, 0
      %v3201 = vunpack.c.l.b16 %v3165
      %v3202 = vunpack.c.l.b16 %v3166
      %v3203 = vunpack.c.l.b16 %v3167
      %v3204 = vunpack.c.l.b16 %v3168
      %v3205 = vunpack.c.l.b16 %v3169
      %v3206 = vunpack.c.l.b16 %v3170
      %v3207 = vunpack.c.l.b16 %v3171
      %v3208 = vunpack.c.l.b16 %v3172
      %v3209 = vunpack.c.l.b16 %v3173
      %v3210 = vunpack.c.l.b16 %v3174
      %v3211 = vunpack.c.l.b16 %v3175
      %v3212 = vunpack.c.l.b16 %v3176
      %v3213 = vunpack.c.l.b16 %v3177
      %v3214 = vunpack.c.l.b16 %v3178
      %v3215 = vunpack.c.l.b16 %v3179
      %v3216 = vunpack.c.l.b16 %v3180
      %v3217 = vpack.c.b16 %v3202, %v3201
      %v3218 = vpack.c.b16 %v3204, %v3203
      %v3219 = vpack.c.b16 %v3206, %v3205
      %v3220 = vpack.c.b16 %v3208, %v3207
      %v3221 = vpack.c.b16 %v3210, %v3209
      %v3222 = vpack.c.b16 %v3212, %v3211
      %v3223 = vpack.c.b16 %v3214, %v3213
      %v3224 = vpack.c.b16 %v3216, %v3215
      %3233 = vmatpush.bf16.msra.mxu0 %v3224
      %3234 = vmatpush.bf16.msra.mxu0 %v3223
      %3235 = vmatpush.bf16.msra.mxu0 %v3222
      %3236 = vmatpush.bf16.msra.mxu0 %v3221
      %3237 = vmatpush.bf16.msra.mxu0 %v3220
      %3238 = vmatpush.bf16.msra.mxu0 %v3219
      %3239 = vmatpush.bf16.msra.mxu0 %v3218
      %3240 = vmatpush.bf16.msra.mxu0 %v3217
      %3241 = vmatmul.bf16.gmra.mxu0 %v3157
      %v3242 = vpop.f32.mrf.mxu0
      %v3243 = vadd.f32 %v3183, %v3242
      %v3244 = vpop.f32.mrf.mxu0
      %v3245 = vadd.f32 %v3183, %v3244
      %3246 = vmatmul.bf16.gmra.mxu0 %v3158
      %v3247 = vpop.f32.mrf.mxu0
      %v3248 = vadd.f32 %v3183, %v3247
      %v3249 = vpop.f32.mrf.mxu0
      %v3250 = vadd.f32 %v3183, %v3249
      %3251 = vmatmul.bf16.gmra.mxu0 %v3159
      %v3252 = vpop.f32.mrf.mxu0
      %v3253 = vadd.f32 %v3183, %v3252
      %v3254 = vpop.f32.mrf.mxu0
      %v3255 = vadd.f32 %v3183, %v3254
      %3256 = vmatmul.bf16.gmra.mxu0 %v3160
      %v3257 = vpop.f32.mrf.mxu0
      %v3258 = vadd.f32 %v3183, %v3257
      %v3259 = vpop.f32.mrf.mxu0
      %v3260 = vadd.f32 %v3183, %v3259
      %3261 = vmatmul.bf16.gmra.mxu0 %v3161
      %v3262 = vpop.f32.mrf.mxu0
      %v3263 = vadd.f32 %v3183, %v3262
      %v3264 = vpop.f32.mrf.mxu0
      %v3265 = vadd.f32 %v3183, %v3264
      %3266 = vmatmul.bf16.gmra.mxu0 %v3162
      %v3267 = vpop.f32.mrf.mxu0
      %v3268 = vadd.f32 %v3183, %v3267
      %v3269 = vpop.f32.mrf.mxu0
      %v3270 = vadd.f32 %v3183, %v3269
      %3271 = vmatmul.bf16.gmra.mxu0 %v3163
      %v3272 = vpop.f32.mrf.mxu0
      %v3273 = vadd.f32 %v3183, %v3272
      %v3274 = vpop.f32.mrf.mxu0
      %v3275 = vadd.f32 %v3183, %v3274
      %3276 = vmatmul.bf16.gmra.mxu0 %v3164
      %v3277 = vpop.f32.mrf.mxu0
      %v3278 = vadd.f32 %v3183, %v3277
      %v3279 = vpop.f32.mrf.mxu0
      %v3280 = vadd.f32 %v3183, %v3279
      %3281 = vdwg.mxu0
      %3282 = vst [vmem:[#allocation5] sm:$0xff] %v3243
      %3283 = vst [vmem:[#allocation5 + $0x8] sm:$0xff] %v3245
      %3284 = vst [vmem:[#allocation5 + $0x10] sm:$0xff] %v3248
      %3285 = vst [vmem:[#allocation5 + $0x18] sm:$0xff] %v3250
      %3286 = vst [vmem:[#allocation5 + $0x20] sm:$0xff] %v3253
      %3287 = vst [vmem:[#allocation5 + $0x28] sm:$0xff] %v3255
      %3288 = vst [vmem:[#allocation5 + $0x30] sm:$0xff] %v3258
      %3289 = vst [vmem:[#allocation5 + $0x38] sm:$0xff] %v3260
      %3290 = vst [vmem:[#allocation5 + $0x40] sm:$0xff] %v3263
      %3291 = vst [vmem:[#allocation5 + $0x48] sm:$0xff] %v3265
      %3292 = vst [vmem:[#allocation5 + $0x50] sm:$0xff] %v3268
      %3293 = vst [vmem:[#allocation5 + $0x58] sm:$0xff] %v3270
      %3294 = vst [vmem:[#allocation5 + $0x60] sm:$0xff] %v3273
      %3295 = vst [vmem:[#allocation5 + $0x68] sm:$0xff] %v3275
      %3296 = vst [vmem:[#allocation5 + $0x70] sm:$0xff] %v3278
      %3297 = vst [vmem:[#allocation5 + $0x78] sm:$0xff] %v3280
    $region65: #{tpu_custom_call.1} parent=1 // pred_fallthru
      _
    // Predicated region
    $region66: #{tpu_custom_call.1} parent=1 // pred_check
      _
    $region67: #{tpu_custom_call.1} parent=1 // pred_check_branch
      %3299 = sbr.rel (0) target = $region69
    $region68: #{tpu_custom_call.1} parent=1 // pred_region
      %3301 = vsyncadd [#allocation6], 0
      %s3302 = sshll.u32 [#allocation5], 4
      %s3303 = int_to_ptr.vmem [resolvable:$true] %s3302
      %s3304 = sshll.u32 %s14, 4
      %s3305 = int_to_ptr.hbm [resolvable:$true] %s3304
      %3310 = dma.vmem_to_hbm [thread:$0]  %s3303, 2048, %s3305, [#allocation6], 128, 128, 8
    $region69: #{tpu_custom_call.1} parent=1 // pred_fallthru
      _
    // Predicated region
    $region70: #{tpu_custom_call.1} parent=1 // pred_check
      _
    $region71: #{tpu_custom_call.1} parent=1 // pred_check_branch
      %3312 = sbr.rel (0) target = $region73
    $region72: #{tpu_custom_call.1} parent=1 // pred_region
      %3314 = dma.done [#allocation6], 2048
    $region73: #{tpu_custom_call.1} parent=1 // pred_fallthru
      _
    %3315 = vsyncpa [#allocation6], 1

</llo_original>
